<compile_context>
chip_gen: v6e
topology: v6e:2x2x1
jax: 0.10.0
libtpu: 0.0.40
codegen_flags: <defaults>
</compile_context>

<pallas_src>
import math

import numpy as np
import jax
import jax.numpy as jnp
from jax import lax
from jax.experimental import pallas as pl
from jax.experimental.pallas import tpu as pltpu

# ----------------------- configuration (small shapes) -----------------------
INPUT_SIZE     = 16
HIDDEN_SIZE    = 32
NUM_UNITS      = 4
TOP_K          = 2
NUM_IN_HEADS   = 1
IN_KEY         = 16                  # input_key_size == input_query_size
IN_VALUE       = 32                  # input_value_size
NUM_COMM_HEADS = 2
COMM_KEY       = 16                  # comm_key_size == comm_query_size
COMM_VALUE     = HIDDEN_SIZE         # RIMCell forces comm_value_size = hidden
SEQ_LEN        = 5
BATCH          = 2
# rnn_cell = 'GRU', n_layers = 1, bidirectional = False

# Layout assumptions used by the fused kernel (selector/expander reuse).
assert NUM_IN_HEADS == 1
assert IN_KEY == COMM_KEY
assert IN_VALUE == HIDDEN_SIZE == COMM_VALUE


# ------------------------------- Pallas kernel ------------------------------
def rim_seq_kernel(x_ref, h0_ref, wkv_ref, bkv_ref, wh_ref, wgx_ref,
                   wc_ref, woc_ref, sel_ref, exp_ref, out_ref, hs_ref):
    f32 = jnp.float32
    B, UH = hs_ref.shape
    U, H, V = NUM_UNITS, HIDDEN_SIZE, IN_VALUE
    Kd = IN_KEY
    nch, cq, cv = NUM_COMM_HEADS, COMM_KEY, COMM_VALUE

    t = pl.program_id(0)

    # Hidden state lives in VMEM scratch, carried across the time grid.
    @pl.when(t == 0)
    def _init():
        hs_ref[...] = h0_ref[...].astype(f32)

    hs = hs_ref[...]                                   # (B, U*H) lane-dense
    x = x_ref[0].astype(f32)                           # (B, I)
    sel = sel_ref[...]                                 # (U*Kd, U) segment-sum selector
    expand = exp_ref[...]                              # (U, U*H) per-unit expander

    # ---------------- input attention (num_input_heads == 1) ----------------
    bkv = bkv_ref[...]                                                   # (1, Kd+V)
    kv_x = jnp.dot(x, wkv_ref[...], preferred_element_type=f32) + bkv    # (B, Kd+V)
    key_x, val_x = kv_x[:, :Kd], kv_x[:, Kd:]          # (B,Kd), (B,V)
    key_n, val_n = bkv[:, :Kd], bkv[:, Kd:]            # null input -> bias only

    # Fused hs projection: [input-attn query | GRU h2h gates (gate-major)].
    gh = jnp.dot(hs, wh_ref[...], preferred_element_type=f32)  # (B, U*Kd + 3*U*H)
    q_flat = gh[:, :U * Kd]                                    # (B, U*Kd)
    h_r = gh[:, U * Kd:U * Kd + UH]
    h_i = gh[:, U * Kd + UH:U * Kd + 2 * UH]
    h_n = gh[:, U * Kd + 2 * UH:]

    inv_sqrt_kd = 1.0 / math.sqrt(Kd)
    key_rep = jnp.concatenate([key_x] * U, axis=-1)            # (B, U*Kd)
    keyn_rep = jnp.concatenate([key_n] * U, axis=-1)           # (1, U*Kd)
    score_x = jnp.dot(q_flat * key_rep, sel,
                      preferred_element_type=f32) * inv_sqrt_kd          # (B, U)
    score_n = jnp.dot(q_flat * keyn_rep, sel,
                      preferred_element_type=f32) * inv_sqrt_kd          # (B, U)

    # Top-k active-unit mask (rank by pairwise comparison; ties -> lower index).
    si = score_x[:, :, None]
    sj = score_x[:, None, :]
    i_idx = lax.broadcasted_iota(jnp.int32, (U, U), 0)[None]
    j_idx = lax.broadcasted_iota(jnp.int32, (U, U), 1)[None]
    beats = jnp.logical_or(sj > si, jnp.logical_and(sj == si, j_idx < i_idx))
    rank = beats.astype(f32).sum(-1)                                     # (B, U)
    mask = (rank < float(TOP_K)).astype(f32)                             # (B, U)
    mask_rep = jnp.dot(mask, expand, preferred_element_type=f32)         # (B, U*H)

    # Softmax over (real, null) columns; input dropout == identity (eval).
    m_col = jnp.maximum(score_x, score_n)
    ex = jnp.exp(score_x - m_col)
    en = jnp.exp(score_n - m_col)
    inv_den = pl.reciprocal(ex + en, approx=True)
    p_x = ex * inv_den
    p_n = en * inv_den

    val_rep = jnp.concatenate([val_x] * U, axis=-1)                      # (B, U*V)
    valn_rep = jnp.concatenate([val_n] * U, axis=-1)                     # (1, U*V)
    px_rep = jnp.dot(p_x, expand, preferred_element_type=f32)            # (B, U*V)
    pn_rep = jnp.dot(p_n, expand, preferred_element_type=f32)            # (B, U*V)
    inputs = (px_rep * val_rep + pn_rep * valn_rep) * mask_rep           # (B, U*V)

    # ------------------------------ Group GRU -------------------------------
    gx = jnp.dot(inputs, wgx_ref[...], preferred_element_type=f32)       # (B, 3*U*H)
    i_r, i_i, i_n = gx[:, :UH], gx[:, UH:2 * UH], gx[:, 2 * UH:]
    resetgate = jax.nn.sigmoid(i_r + h_r)
    inputgate = jax.nn.sigmoid(i_i + h_i)
    newgate = jnp.tanh(i_n + resetgate * h_n)
    h_rnn = newgate + inputgate * (hs - newgate)                         # (B, U*H)

    # ----------------------- communication attention ------------------------
    # blocked_grad forward == identity; comm dropout == identity (eval mode).
    qkv = jnp.dot(h_rnn, wc_ref[...], preferred_element_type=f32)  # (B, nch*U*(cq+ck+cv))
    Wq = U * cq
    Wv = U * cv
    off_k = nch * Wq
    off_v = 2 * nch * Wq                     # ck == cq
    inv_sqrt_ck = 1.0 / math.sqrt(cq)

    context = h_rnn                          # residual: comm_out(ctx) + h
    for n in range(nch):                     # nch == 2, fully unrolled
        Qn = qkv[:, n * Wq:(n + 1) * Wq]                            # (B, U*cq)
        Kn = qkv[:, off_k + n * Wq:off_k + (n + 1) * Wq]            # (B, U*cq)
        Vn = qkv[:, off_v + n * Wv:off_v + (n + 1) * Wv]            # (B, U*cv)

        # Scores as U "diagonals": d[r][b,u] = <q_u, k_{(u+r)%U}> / sqrt(cq)
        d = []
        for r in range(U):
            Kr = Kn if r == 0 else jnp.roll(Kn, -r * cq, axis=-1)
            d.append(jnp.dot(Qn * Kr, sel,
                             preferred_element_type=f32) * inv_sqrt_ck)  # (B, U)
        m = d[0]
        for r in range(1, U):
            m = jnp.maximum(m, d[r])
        e = [jnp.exp(dr - m) for dr in d]
        denom = e[0]
        for r in range(1, U):
            denom = denom + e[r]
        inv = pl.reciprocal(denom, approx=True)
        # Zero the attention rows (queries) of inactive units, as in reference.
        p = [er * inv * mask for er in e]                                # U x (B, U)

        ctx = jnp.zeros((B, Wv), f32)
        for r in range(U):
            Vr = Vn if r == 0 else jnp.roll(Vn, -r * cv, axis=-1)
            ctx = ctx + jnp.dot(p[r], expand,
                                preferred_element_type=f32) * Vr         # (B, U*cv)
        context = context + jnp.dot(ctx, woc_ref[n],
                                    preferred_element_type=f32)          # (B, U*H)

    # --------------- masked blend with the pre-update hidden ----------------
    hs_new = mask_rep * context + (1.0 - mask_rep) * hs
    hs_ref[...] = hs_new
    out_ref[0] = hs_new.astype(out_ref.dtype)


# ------------------------------ Python wrapper -------------------------------
def rim_forward(x_seq, h0, fused):
    """x_seq: (seq, B, input_size); h0: (B, num_units*hidden) lane-dense.
    Returns (outputs (seq, B, U*H), final hidden (1, B, U*H))."""
    seq, B, I = x_seq.shape
    UH = NUM_UNITS * HIDDEN_SIZE
    grid_spec = pltpu.PrefetchScalarGridSpec(
        num_scalar_prefetch=0,
        grid=(seq,),
        in_specs=[
            pl.BlockSpec((1, B, I), lambda t: (t, 0, 0)),          # x_t (per step)
            pl.BlockSpec((B, UH), lambda t: (0, 0)),               # h0 (resident)
            pl.BlockSpec(fused['wkv'].shape, lambda t: (0, 0)),    # weights resident
            pl.BlockSpec(fused['bkv'].shape, lambda t: (0, 0)),
            pl.BlockSpec(fused['w_h'].shape, lambda t: (0, 0)),
            pl.BlockSpec(fused['w_gx'].shape, lambda t: (0, 0)),
            pl.BlockSpec(fused['w_c'].shape, lambda t: (0, 0)),
            pl.BlockSpec(fused['w_oc'].shape, lambda t: (0, 0, 0)),
            pl.BlockSpec(fused['sel'].shape, lambda t: (0, 0)),
            pl.BlockSpec(fused['expand'].shape, lambda t: (0, 0)),
        ],
        out_specs=pl.BlockSpec((1, B, UH), lambda t: (t, 0, 0)),
        scratch_shapes=[pltpu.VMEM((B, UH), jnp.float32)],         # carried hidden
    )
    out = pl.pallas_call(
        rim_seq_kernel,
        out_shape=jax.ShapeDtypeStruct((seq, B, UH), jnp.float32),
        grid_spec=grid_spec,
        compiler_params=pltpu.CompilerParams(
            dimension_semantics=("arbitrary",)),   # sequential carry over time
    )(x_seq, h0, fused['wkv'], fused['bkv'], fused['w_h'], fused['w_gx'],
      fused['w_c'], fused['w_oc'], fused['sel'], fused['expand'])
    return out, out[seq - 1:seq]


rim_forward_jit = jax.jit(rim_forward)


# -------------------- reference-style per-unit parameters --------------------
def make_params(key):
    ks = jax.random.split(key, 11)

    def rn(k, shape, scale):
        return (scale * jax.random.normal(k, shape)).astype(jnp.float32)

    I, H, U = INPUT_SIZE, HIDDEN_SIZE, NUM_UNITS
    return dict(
        # nn.Linear key / value (weight stored as (in, out) for x @ W + b)
        wk=rn(ks[0], (I, NUM_IN_HEADS * IN_KEY), 1.0 / math.sqrt(I)),
        bk=rn(ks[1], (1, NUM_IN_HEADS * IN_KEY), 1.0 / math.sqrt(I)),
        wv=rn(ks[2], (I, NUM_IN_HEADS * IN_VALUE), 1.0 / math.sqrt(I)),
        bv=rn(ks[3], (1, NUM_IN_HEADS * IN_VALUE), 1.0 / math.sqrt(I)),
        # GroupLinearLayers (per-unit weights, no bias): 0.01 * randn
        wq=rn(ks[4], (U, H, NUM_IN_HEADS * IN_KEY), 0.01),
        wqc=rn(ks[5], (U, H, NUM_COMM_HEADS * COMM_KEY), 0.01),
        wkc=rn(ks[6], (U, H, NUM_COMM_HEADS * COMM_KEY), 0.01),
        wvc=rn(ks[7], (U, H, NUM_COMM_HEADS * COMM_VALUE), 0.01),
        woc=rn(ks[8], (U, NUM_COMM_HEADS * COMM_VALUE, COMM_VALUE), 0.01),
        # GroupGRUCell x2h / h2h group linear weights
        wgx=rn(ks[9], (U, IN_VALUE, 3 * H), 1.0 / math.sqrt(H)),
        wgh=rn(ks[10], (U, H, 3 * H), 1.0 / math.sqrt(H)),
    )


# ---------------- pack per-unit weights into kernel-ready layout -------------
def _block_diag(w):  # (U, din, dout) -> (U*din, U*dout)
    U_, din, dout = w.shape
    out = np.zeros((U_ * din, U_ * dout), np.float32)
    wn = np.asarray(w)
    for u in range(U_):
        out[u * din:(u + 1) * din, u * dout:(u + 1) * dout] = wn[u]
    return out


def _gru_block_weight(w):  # (U, din, 3H) -> (U*din, 3*U*H), gate-major columns
    U_, din, threeH = w.shape
    H_ = threeH // 3
    out = np.zeros((U_ * din, 3 * U_ * H_), np.float32)
    wn = np.asarray(w)
    for g in range(3):
        for u in range(U_):
            out[u * din:(u + 1) * din,
                g * U_ * H_ + u * H_: g * U_ * H_ + (u + 1) * H_] = \
                wn[u, :, g * H_:(g + 1) * H_]
    return out


def _comm_qkv_weight(wq, wk, wv, nch):  # head-major [q | k | v] columns
    U_, H_, _ = wq.shape
    cq = wq.shape[2] // nch
    ck = wk.shape[2] // nch
    cv = wv.shape[2] // nch
    out = np.zeros((U_ * H_, nch * U_ * (cq + ck + cv)), np.float32)
    off_k = nch * U_ * cq
    off_v = off_k + nch * U_ * ck
    wqn, wkn, wvn = map(np.asarray, (wq, wk, wv))
    for n in range(nch):
        for u in range(U_):
            out[u * H_:(u + 1) * H_,
                n * U_ * cq + u * cq: n * U_ * cq + (u + 1) * cq] = \
                wqn[u, :, n * cq:(n + 1) * cq]
            out[u * H_:(u + 1) * H_,
                off_k + n * U_ * ck + u * ck: off_k + n * U_ * ck + (u + 1) * ck] = \
                wkn[u, :, n * ck:(n + 1) * ck]
            out[u * H_:(u + 1) * H_,
                off_v + n * U_ * cv + u * cv: off_v + n * U_ * cv + (u + 1) * cv] = \
                wvn[u, :, n * cv:(n + 1) * cv]
    return out


def _comm_out_weight(woc, nch):  # (U, nch*cv, cv) -> (nch, U*cv, U*cv)
    U_, nchcv, cv = woc.shape
    cvh = nchcv // nch
    out = np.zeros((nch, U_ * cvh, U_ * cv), np.float32)
    wn = np.asarray(woc)
    for n in range(nch):
        for u in range(U_):
            out[n, u * cvh:(u + 1) * cvh, u * cv:(u + 1) * cv] = \
                wn[u, n * cvh:(n + 1) * cvh, :]
    return out


def fuse_params(p):
    U, H, Kd = NUM_UNITS, HIDDEN_SIZE, IN_KEY
    # Constant selector (segment-sum over Kd-wide unit blocks) and expander
    # (broadcast a per-unit scalar over its H-wide block).  Reused for comm
    # attention because IN_KEY == COMM_KEY and IN_VALUE == COMM_VALUE == H.
    sel = np.zeros((U * Kd, U), np.float32)
    expand = np.zeros((U, U * H), np.float32)
    for u in range(U):
        sel[u * Kd:(u + 1) * Kd, u] = 1.0
        expand[u, u * H:(u + 1) * H] = 1.0

    fused = dict(
        wkv=np.concatenate([np.asarray(p['wk']), np.asarray(p['wv'])], axis=1),
        bkv=np.concatenate([np.asarray(p['bk']), np.asarray(p['bv'])], axis=1),
        w_h=np.concatenate([_block_diag(p['wq']), _gru_block_weight(p['wgh'])],
                           axis=1),
        w_gx=_gru_block_weight(p['wgx']),
        w_c=_comm_qkv_weight(p['wqc'], p['wkc'], p['wvc'], NUM_COMM_HEADS),
        w_oc=_comm_out_weight(p['woc'], NUM_COMM_HEADS),
        sel=sel,
        expand=expand,
    )
    return {k: jnp.asarray(v, dtype=jnp.float32) for k, v in fused.items()}


if __name__ == "__main__":
    key = jax.random.PRNGKey(0)
    k_x, k_h, k_p = jax.random.split(key, 3)

    x = jax.random.normal(k_x, (SEQ_LEN, BATCH, INPUT_SIZE), dtype=jnp.float32)
    h0 = jax.random.normal(k_h, (BATCH, NUM_UNITS * HIDDEN_SIZE),
                           dtype=jnp.float32)
    params = make_params(k_p)
    fused = fuse_params(params)

    out, h_final = rim_forward_jit(x, h0, fused)
    jax.block_until_ready(out)
    jax.block_until_ready(h_final)

    assert out.shape == (SEQ_LEN, BATCH, NUM_UNITS * HIDDEN_SIZE)
    assert h_final.shape == (1, BATCH, NUM_UNITS * HIDDEN_SIZE)
    assert bool(jnp.all(jnp.isfinite(out)))
    print("KERNEL_OK")
</pallas_src>

<mosaic_0001>
module attributes {stable_mosaic.version = 11 : i64} {
  func.func @rim_seq_kernel(%arg0: i32, %arg1: memref<1x2x16xf32, #tpu.memory_space<vmem>>, %arg2: memref<2x128xf32, #tpu.memory_space<vmem>>, %arg3: memref<16x48xf32, #tpu.memory_space<vmem>>, %arg4: memref<1x48xf32, #tpu.memory_space<vmem>>, %arg5: memref<128x448xf32, #tpu.memory_space<vmem>>, %arg6: memref<128x384xf32, #tpu.memory_space<vmem>>, %arg7: memref<128x512xf32, #tpu.memory_space<vmem>>, %arg8: memref<2x128x128xf32, #tpu.memory_space<vmem>>, %arg9: memref<64x4xf32, #tpu.memory_space<vmem>>, %arg10: memref<4x128xf32, #tpu.memory_space<vmem>>, %arg11: memref<1x2x128xf32, #tpu.memory_space<vmem>>, %arg12: memref<2x128xf32, #tpu.memory_space<vmem>>) attributes {dimension_semantics = [#tpu.dimension_semantics<arbitrary>], iteration_bounds = array<i64: 5>, scalar_prefetch = 0 : i64, scratch_operands = 1 : i64, tpu.core_type = #tpu.core_type<tc>, window_params = [{transform_indices = @transform_0, window_bounds = array<i64: 1, 2, 16>}, {pipeline_mode = #tpu.pipeline_mode<synchronous>, transform_indices = @transform_1, window_bounds = array<i64: 2, 128>}, {pipeline_mode = #tpu.pipeline_mode<synchronous>, transform_indices = @transform_2, window_bounds = array<i64: 16, 48>}, {pipeline_mode = #tpu.pipeline_mode<synchronous>, transform_indices = @transform_3, window_bounds = array<i64: 1, 48>}, {pipeline_mode = #tpu.pipeline_mode<synchronous>, transform_indices = @transform_4, window_bounds = array<i64: 128, 448>}, {pipeline_mode = #tpu.pipeline_mode<synchronous>, transform_indices = @transform_5, window_bounds = array<i64: 128, 384>}, {pipeline_mode = #tpu.pipeline_mode<synchronous>, transform_indices = @transform_6, window_bounds = array<i64: 128, 512>}, {pipeline_mode = #tpu.pipeline_mode<synchronous>, transform_indices = @transform_7, window_bounds = array<i64: 2, 128, 128>}, {pipeline_mode = #tpu.pipeline_mode<synchronous>, transform_indices = @transform_8, window_bounds = array<i64: 64, 4>}, {pipeline_mode = #tpu.pipeline_mode<synchronous>, transform_indices = @transform_9, window_bounds = array<i64: 4, 128>}, {transform_indices = @transform_10, window_bounds = array<i64: 1, 2, 128>}]} {
    %c0_i32 = arith.constant 0 : i32
    %0 = arith.cmpi eq, %arg0, %c0_i32 : i32
    %1 = arith.extui %0 : i1 to i32
    %c0_i32_0 = arith.constant 0 : i32
    %2 = arith.cmpi ne, %1, %c0_i32_0 : i32
    scf.if %2 {
      %c0_72 = arith.constant 0 : index
      %c0_73 = arith.constant 0 : index
      %264 = vector.load %arg2[%c0_72, %c0_73] : memref<2x128xf32, #tpu.memory_space<vmem>>, vector<2x128xf32>
      %c0_74 = arith.constant 0 : index
      %c0_75 = arith.constant 0 : index
      %265 = vector.load %arg12[%c0_74, %c0_75] : memref<2x128xf32, #tpu.memory_space<vmem>>, vector<2x128xf32>
      tpu.vector_store %arg12[%c0_74, %c0_75], %264 {strides = array<i32>} : memref<2x128xf32, #tpu.memory_space<vmem>>, vector<2x128xf32>,
    } else {
    }
    %c0 = arith.constant 0 : index
    %c0_1 = arith.constant 0 : index
    %3 = vector.load %arg12[%c0, %c0_1] : memref<2x128xf32, #tpu.memory_space<vmem>>, vector<2x128xf32>
    %c0_2 = arith.constant 0 : index
    %c0_3 = arith.constant 0 : index
    %c0_4 = arith.constant 0 : index
    %4 = vector.load %arg1[%c0_2, %c0_3, %c0_4] : memref<1x2x16xf32, #tpu.memory_space<vmem>>, vector<1x2x16xf32>
    %5 = vector.shape_cast %4 : vector<1x2x16xf32> to vector<2x16xf32>
    %c0_5 = arith.constant 0 : index
    %c0_6 = arith.constant 0 : index
    %6 = vector.load %arg9[%c0_5, %c0_6] : memref<64x4xf32, #tpu.memory_space<vmem>>, vector<64x4xf32>
    %c0_7 = arith.constant 0 : index
    %c0_8 = arith.constant 0 : index
    %7 = vector.load %arg10[%c0_7, %c0_8] : memref<4x128xf32, #tpu.memory_space<vmem>>, vector<4x128xf32>
    %c0_9 = arith.constant 0 : index
    %c0_10 = arith.constant 0 : index
    %8 = vector.load %arg4[%c0_9, %c0_10] : memref<1x48xf32, #tpu.memory_space<vmem>>, vector<1x48xf32>
    %c0_11 = arith.constant 0 : index
    %c0_12 = arith.constant 0 : index
    %9 = vector.load %arg3[%c0_11, %c0_12] : memref<16x48xf32, #tpu.memory_space<vmem>>, vector<16x48xf32>
    %cst = arith.constant dense<0.000000e+00> : vector<2x48xf32>
    %10 = tpu.matmul %5, %9, %cst {dimension_numbers = #tpu.dot_dimension_numbers<[1], [0], [0], [1], [0, 0, 1, 1], [], []>} : vector<2x16xf32>, vector<16x48xf32>, vector<2x48xf32> -> vector<2x48xf32>
    %11 = vector.broadcast %8 : vector<1x48xf32> to vector<2x48xf32>
    %12 = arith.addf %10, %11 : vector<2x48xf32>
    %13 = vector.extract_strided_slice %12 {offsets = [0, 0], sizes = [2, 16], strides = [1, 1]} : vector<2x48xf32> to vector<2x16xf32>
    %14 = vector.extract_strided_slice %12 {offsets = [0, 16], sizes = [2, 32], strides = [1, 1]} : vector<2x48xf32> to vector<2x32xf32>
    %15 = vector.extract_strided_slice %8 {offsets = [0, 0], sizes = [1, 16], strides = [1, 1]} : vector<1x48xf32> to vector<1x16xf32>
    %16 = vector.extract_strided_slice %8 {offsets = [0, 16], sizes = [1, 32], strides = [1, 1]} : vector<1x48xf32> to vector<1x32xf32>
    %c0_13 = arith.constant 0 : index
    %c0_14 = arith.constant 0 : index
    %17 = vector.load %arg5[%c0_13, %c0_14] : memref<128x448xf32, #tpu.memory_space<vmem>>, vector<128x448xf32>
    %cst_15 = arith.constant dense<0.000000e+00> : vector<2x448xf32>
    %18 = tpu.matmul %3, %17, %cst_15 {dimension_numbers = #tpu.dot_dimension_numbers<[1], [0], [0], [1], [0, 0, 1, 1], [], []>} : vector<2x128xf32>, vector<128x448xf32>, vector<2x448xf32> -> vector<2x448xf32>
    %19 = vector.extract_strided_slice %18 {offsets = [0, 0], sizes = [2, 64], strides = [1, 1]} : vector<2x448xf32> to vector<2x64xf32>
    %20 = vector.extract_strided_slice %18 {offsets = [0, 64], sizes = [2, 128], strides = [1, 1]} : vector<2x448xf32> to vector<2x128xf32>
    %21 = vector.extract_strided_slice %18 {offsets = [0, 192], sizes = [2, 128], strides = [1, 1]} : vector<2x448xf32> to vector<2x128xf32>
    %22 = vector.extract_strided_slice %18 {offsets = [0, 320], sizes = [2, 128], strides = [1, 1]} : vector<2x448xf32> to vector<2x128xf32>
    %23 = tpu.concatenate %13, %13, %13, %13 in 1 : vector<2x16xf32>, vector<2x16xf32>, vector<2x16xf32>, vector<2x16xf32> -> vector<2x64xf32>
    %24 = tpu.concatenate %15, %15, %15, %15 in 1 : vector<1x16xf32>, vector<1x16xf32>, vector<1x16xf32>, vector<1x16xf32> -> vector<1x64xf32>
    %25 = arith.mulf %19, %23 : vector<2x64xf32>
    %cst_16 = arith.constant dense<0.000000e+00> : vector<2x4xf32>
    %26 = tpu.matmul %25, %6, %cst_16 {dimension_numbers = #tpu.dot_dimension_numbers<[1], [0], [0], [1], [0, 0, 1, 1], [], []>} : vector<2x64xf32>, vector<64x4xf32>, vector<2x4xf32> -> vector<2x4xf32>
    %cst_17 = arith.constant 2.500000e-01 : f32
    %27 = vector.broadcast %cst_17 : f32 to vector<2x4xf32>
    %28 = arith.mulf %26, %27 : vector<2x4xf32>
    %29 = vector.broadcast %24 : vector<1x64xf32> to vector<2x64xf32>
    %30 = arith.mulf %19, %29 : vector<2x64xf32>
    %cst_18 = arith.constant dense<0.000000e+00> : vector<2x4xf32>
    %31 = tpu.matmul %30, %6, %cst_18 {dimension_numbers = #tpu.dot_dimension_numbers<[1], [0], [0], [1], [0, 0, 1, 1], [], []>} : vector<2x64xf32>, vector<64x4xf32>, vector<2x4xf32> -> vector<2x4xf32>
    %cst_19 = arith.constant 2.500000e-01 : f32
    %32 = vector.broadcast %cst_19 : f32 to vector<2x4xf32>
    %33 = arith.mulf %31, %32 : vector<2x4xf32>
    %34 = vector.shape_cast %28 : vector<2x4xf32> to vector<2x4x1xf32>
    %35 = vector.shape_cast %28 : vector<2x4xf32> to vector<2x1x4xf32>
    %36 = tpu.iota {dimensions = array<i32: 0>} : vector<4x4xi32>
    %37 = vector.shape_cast %36 : vector<4x4xi32> to vector<1x4x4xi32>
    %38 = tpu.iota {dimensions = array<i32: 1>} : vector<4x4xi32>
    %39 = vector.shape_cast %38 : vector<4x4xi32> to vector<1x4x4xi32>
    %40 = vector.broadcast %35 : vector<2x1x4xf32> to vector<2x4x4xf32>
    %41 = vector.broadcast %34 : vector<2x4x1xf32> to vector<2x4x4xf32>
    %42 = arith.cmpf ogt, %40, %41 : vector<2x4x4xf32>
    %43 = vector.broadcast %35 : vector<2x1x4xf32> to vector<2x4x4xf32>
    %44 = vector.broadcast %34 : vector<2x4x1xf32> to vector<2x4x4xf32>
    %45 = arith.cmpf oeq, %43, %44 : vector<2x4x4xf32>
    %46 = arith.cmpi slt, %39, %37 : vector<1x4x4xi32>
    %47 = vector.broadcast %46 : vector<1x4x4xi1> to vector<2x4x4xi1>
    %48 = arith.andi %45, %47 : vector<2x4x4xi1>
    %49 = arith.ori %42, %48 : vector<2x4x4xi1>
    %50 = arith.extui %49 : vector<2x4x4xi1> to vector<2x4x4xi32>
    %51 = arith.sitofp %50 : vector<2x4x4xi32> to vector<2x4x4xf32>
    %cst_20 = arith.constant dense<0.000000e+00> : vector<2x4xf32>
    %52 = vector.multi_reduction <add>, %51, %cst_20 [2] : vector<2x4x4xf32> to vector<2x4xf32>
    %cst_21 = arith.constant 2.000000e+00 : f32
    %53 = vector.broadcast %cst_21 : f32 to vector<2x4xf32>
    %54 = arith.cmpf olt, %52, %53 : vector<2x4xf32>
    %55 = arith.extui %54 : vector<2x4xi1> to vector<2x4xi32>
    %56 = arith.sitofp %55 : vector<2x4xi32> to vector<2x4xf32>
    %cst_22 = arith.constant dense<0.000000e+00> : vector<2x128xf32>
    %57 = tpu.matmul %56, %7, %cst_22 {dimension_numbers = #tpu.dot_dimension_numbers<[1], [0], [0], [1], [0, 0, 1, 1], [], []>} : vector<2x4xf32>, vector<4x128xf32>, vector<2x128xf32> -> vector<2x128xf32>
    %58 = arith.maximumf %28, %33 : vector<2x4xf32>
    %59 = arith.subf %28, %58 : vector<2x4xf32>
    %60 = math.exp %59 : vector<2x4xf32>
    %61 = arith.subf %33, %58 : vector<2x4xf32>
    %62 = math.exp %61 : vector<2x4xf32>
    %63 = arith.addf %60, %62 : vector<2x4xf32>
    %64 = tpu.reciprocal %63 {approx = true} : vector<2x4xf32> -> vector<2x4xf32>
    %65 = arith.mulf %60, %64 : vector<2x4xf32>
    %66 = arith.mulf %62, %64 : vector<2x4xf32>
    %67 = tpu.concatenate %14, %14, %14, %14 in 1 : vector<2x32xf32>, vector<2x32xf32>, vector<2x32xf32>, vector<2x32xf32> -> vector<2x128xf32>
    %68 = tpu.concatenate %16, %16, %16, %16 in 1 : vector<1x32xf32>, vector<1x32xf32>, vector<1x32xf32>, vector<1x32xf32> -> vector<1x128xf32>
    %cst_23 = arith.constant dense<0.000000e+00> : vector<2x128xf32>
    %69 = tpu.matmul %65, %7, %cst_23 {dimension_numbers = #tpu.dot_dimension_numbers<[1], [0], [0], [1], [0, 0, 1, 1], [], []>} : vector<2x4xf32>, vector<4x128xf32>, vector<2x128xf32> -> vector<2x128xf32>
    %cst_24 = arith.constant dense<0.000000e+00> : vector<2x128xf32>
    %70 = tpu.matmul %66, %7, %cst_24 {dimension_numbers = #tpu.dot_dimension_numbers<[1], [0], [0], [1], [0, 0, 1, 1], [], []>} : vector<2x4xf32>, vector<4x128xf32>, vector<2x128xf32> -> vector<2x128xf32>
    %71 = arith.mulf %69, %67 : vector<2x128xf32>
    %72 = vector.broadcast %68 : vector<1x128xf32> to vector<2x128xf32>
    %73 = arith.mulf %70, %72 : vector<2x128xf32>
    %74 = arith.addf %71, %73 : vector<2x128xf32>
    %75 = arith.mulf %74, %57 : vector<2x128xf32>
    %c0_25 = arith.constant 0 : index
    %c0_26 = arith.constant 0 : index
    %76 = vector.load %arg6[%c0_25, %c0_26] : memref<128x384xf32, #tpu.memory_space<vmem>>, vector<128x384xf32>
    %cst_27 = arith.constant dense<0.000000e+00> : vector<2x384xf32>
    %77 = tpu.matmul %75, %76, %cst_27 {dimension_numbers = #tpu.dot_dimension_numbers<[1], [0], [0], [1], [0, 0, 1, 1], [], []>} : vector<2x128xf32>, vector<128x384xf32>, vector<2x384xf32> -> vector<2x384xf32>
    %78 = vector.extract_strided_slice %77 {offsets = [0, 0], sizes = [2, 128], strides = [1, 1]} : vector<2x384xf32> to vector<2x128xf32>
    %79 = vector.extract_strided_slice %77 {offsets = [0, 128], sizes = [2, 128], strides = [1, 1]} : vector<2x384xf32> to vector<2x128xf32>
    %80 = vector.extract_strided_slice %77 {offsets = [0, 256], sizes = [2, 128], strides = [1, 1]} : vector<2x384xf32> to vector<2x128xf32>
    %81 = arith.addf %78, %20 : vector<2x128xf32>
    %82 = arith.negf %81 : vector<2x128xf32>
    %83 = math.exp %82 : vector<2x128xf32>
    %cst_28 = arith.constant 1.000000e+00 : f32
    %84 = vector.broadcast %cst_28 : f32 to vector<2x128xf32>
    %85 = arith.addf %84, %83 : vector<2x128xf32>
    %86 = arith.divf %84, %85 : vector<2x128xf32>
    %87 = arith.addf %79, %21 : vector<2x128xf32>
    %88 = arith.negf %87 : vector<2x128xf32>
    %89 = math.exp %88 : vector<2x128xf32>
    %cst_29 = arith.constant 1.000000e+00 : f32
    %90 = vector.broadcast %cst_29 : f32 to vector<2x128xf32>
    %91 = arith.addf %90, %89 : vector<2x128xf32>
    %92 = arith.divf %90, %91 : vector<2x128xf32>
    %93 = arith.mulf %86, %22 : vector<2x128xf32>
    %94 = arith.addf %80, %93 : vector<2x128xf32>
    %95 = math.tanh %94 : vector<2x128xf32>
    %96 = arith.subf %3, %95 : vector<2x128xf32>
    %97 = arith.mulf %92, %96 : vector<2x128xf32>
    %98 = arith.addf %95, %97 : vector<2x128xf32>
    %c0_30 = arith.constant 0 : index
    %c0_31 = arith.constant 0 : index
    %99 = vector.load %arg7[%c0_30, %c0_31] : memref<128x512xf32, #tpu.memory_space<vmem>>, vector<128x512xf32>
    %cst_32 = arith.constant dense<0.000000e+00> : vector<2x512xf32>
    %100 = tpu.matmul %98, %99, %cst_32 {dimension_numbers = #tpu.dot_dimension_numbers<[1], [0], [0], [1], [0, 0, 1, 1], [], []>} : vector<2x128xf32>, vector<128x512xf32>, vector<2x512xf32> -> vector<2x512xf32>
    %101 = vector.extract_strided_slice %100 {offsets = [0, 0], sizes = [2, 64], strides = [1, 1]} : vector<2x512xf32> to vector<2x64xf32>
    %102 = vector.extract_strided_slice %100 {offsets = [0, 128], sizes = [2, 64], strides = [1, 1]} : vector<2x512xf32> to vector<2x64xf32>
    %103 = vector.extract_strided_slice %100 {offsets = [0, 256], sizes = [2, 128], strides = [1, 1]} : vector<2x512xf32> to vector<2x128xf32>
    %104 = arith.mulf %101, %102 : vector<2x64xf32>
    %cst_33 = arith.constant dense<0.000000e+00> : vector<2x4xf32>
    %105 = tpu.matmul %104, %6, %cst_33 {dimension_numbers = #tpu.dot_dimension_numbers<[1], [0], [0], [1], [0, 0, 1, 1], [], []>} : vector<2x64xf32>, vector<64x4xf32>, vector<2x4xf32> -> vector<2x4xf32>
    %cst_34 = arith.constant 2.500000e-01 : f32
    %106 = vector.broadcast %cst_34 : f32 to vector<2x4xf32>
    %107 = arith.mulf %105, %106 : vector<2x4xf32>
    %108 = vector.extract_strided_slice %102 {offsets = [0, 16], sizes = [2, 48], strides = [1, 1]} : vector<2x64xf32> to vector<2x48xf32>
    %109 = vector.extract_strided_slice %102 {offsets = [0, 0], sizes = [2, 16], strides = [1, 1]} : vector<2x64xf32> to vector<2x16xf32>
    %110 = tpu.concatenate %108, %109 in 1 : vector<2x48xf32>, vector<2x16xf32> -> vector<2x64xf32>
    %111 = arith.mulf %101, %110 : vector<2x64xf32>
    %cst_35 = arith.constant dense<0.000000e+00> : vector<2x4xf32>
    %112 = tpu.matmul %111, %6, %cst_35 {dimension_numbers = #tpu.dot_dimension_numbers<[1], [0], [0], [1], [0, 0, 1, 1], [], []>} : vector<2x64xf32>, vector<64x4xf32>, vector<2x4xf32> -> vector<2x4xf32>
    %cst_36 = arith.constant 2.500000e-01 : f32
    %113 = vector.broadcast %cst_36 : f32 to vector<2x4xf32>
    %114 = arith.mulf %112, %113 : vector<2x4xf32>
    %115 = vector.extract_strided_slice %102 {offsets = [0, 32], sizes = [2, 32], strides = [1, 1]} : vector<2x64xf32> to vector<2x32xf32>
    %116 = vector.extract_strided_slice %102 {offsets = [0, 0], sizes = [2, 32], strides = [1, 1]} : vector<2x64xf32> to vector<2x32xf32>
    %117 = tpu.concatenate %115, %116 in 1 : vector<2x32xf32>, vector<2x32xf32> -> vector<2x64xf32>
    %118 = arith.mulf %101, %117 : vector<2x64xf32>
    %cst_37 = arith.constant dense<0.000000e+00> : vector<2x4xf32>
    %119 = tpu.matmul %118, %6, %cst_37 {dimension_numbers = #tpu.dot_dimension_numbers<[1], [0], [0], [1], [0, 0, 1, 1], [], []>} : vector<2x64xf32>, vector<64x4xf32>, vector<2x4xf32> -> vector<2x4xf32>
    %cst_38 = arith.constant 2.500000e-01 : f32
    %120 = vector.broadcast %cst_38 : f32 to vector<2x4xf32>
    %121 = arith.mulf %119, %120 : vector<2x4xf32>
    %122 = vector.extract_strided_slice %102 {offsets = [0, 48], sizes = [2, 16], strides = [1, 1]} : vector<2x64xf32> to vector<2x16xf32>
    %123 = vector.extract_strided_slice %102 {offsets = [0, 0], sizes = [2, 48], strides = [1, 1]} : vector<2x64xf32> to vector<2x48xf32>
    %124 = tpu.concatenate %122, %123 in 1 : vector<2x16xf32>, vector<2x48xf32> -> vector<2x64xf32>
    %125 = arith.mulf %101, %124 : vector<2x64xf32>
    %cst_39 = arith.constant dense<0.000000e+00> : vector<2x4xf32>
    %126 = tpu.matmul %125, %6, %cst_39 {dimension_numbers = #tpu.dot_dimension_numbers<[1], [0], [0], [1], [0, 0, 1, 1], [], []>} : vector<2x64xf32>, vector<64x4xf32>, vector<2x4xf32> -> vector<2x4xf32>
    %cst_40 = arith.constant 2.500000e-01 : f32
    %127 = vector.broadcast %cst_40 : f32 to vector<2x4xf32>
    %128 = arith.mulf %126, %127 : vector<2x4xf32>
    %129 = arith.maximumf %107, %114 : vector<2x4xf32>
    %130 = arith.maximumf %129, %121 : vector<2x4xf32>
    %131 = arith.maximumf %130, %128 : vector<2x4xf32>
    %132 = arith.subf %107, %131 : vector<2x4xf32>
    %133 = math.exp %132 : vector<2x4xf32>
    %134 = arith.subf %114, %131 : vector<2x4xf32>
    %135 = math.exp %134 : vector<2x4xf32>
    %136 = arith.subf %121, %131 : vector<2x4xf32>
    %137 = math.exp %136 : vector<2x4xf32>
    %138 = arith.subf %128, %131 : vector<2x4xf32>
    %139 = math.exp %138 : vector<2x4xf32>
    %140 = arith.addf %133, %135 : vector<2x4xf32>
    %141 = arith.addf %140, %137 : vector<2x4xf32>
    %142 = arith.addf %141, %139 : vector<2x4xf32>
    %143 = tpu.reciprocal %142 {approx = true} : vector<2x4xf32> -> vector<2x4xf32>
    %144 = arith.mulf %133, %143 : vector<2x4xf32>
    %145 = arith.mulf %144, %56 : vector<2x4xf32>
    %146 = arith.mulf %135, %143 : vector<2x4xf32>
    %147 = arith.mulf %146, %56 : vector<2x4xf32>
    %148 = arith.mulf %137, %143 : vector<2x4xf32>
    %149 = arith.mulf %148, %56 : vector<2x4xf32>
    %150 = arith.mulf %139, %143 : vector<2x4xf32>
    %151 = arith.mulf %150, %56 : vector<2x4xf32>
    %cst_41 = arith.constant 0.000000e+00 : f32
    %152 = vector.broadcast %cst_41 : f32 to vector<2x128xf32>
    %cst_42 = arith.constant dense<0.000000e+00> : vector<2x128xf32>
    %153 = tpu.matmul %145, %7, %cst_42 {dimension_numbers = #tpu.dot_dimension_numbers<[1], [0], [0], [1], [0, 0, 1, 1], [], []>} : vector<2x4xf32>, vector<4x128xf32>, vector<2x128xf32> -> vector<2x128xf32>
    %154 = arith.mulf %153, %103 : vector<2x128xf32>
    %155 = arith.addf %152, %154 : vector<2x128xf32>
    %156 = vector.extract_strided_slice %103 {offsets = [0, 32], sizes = [2, 96], strides = [1, 1]} : vector<2x128xf32> to vector<2x96xf32>
    %157 = vector.extract_strided_slice %103 {offsets = [0, 0], sizes = [2, 32], strides = [1, 1]} : vector<2x128xf32> to vector<2x32xf32>
    %158 = tpu.concatenate %156, %157 in 1 : vector<2x96xf32>, vector<2x32xf32> -> vector<2x128xf32>
    %cst_43 = arith.constant dense<0.000000e+00> : vector<2x128xf32>
    %159 = tpu.matmul %147, %7, %cst_43 {dimension_numbers = #tpu.dot_dimension_numbers<[1], [0], [0], [1], [0, 0, 1, 1], [], []>} : vector<2x4xf32>, vector<4x128xf32>, vector<2x128xf32> -> vector<2x128xf32>
    %160 = arith.mulf %159, %158 : vector<2x128xf32>
    %161 = arith.addf %155, %160 : vector<2x128xf32>
    %162 = vector.extract_strided_slice %103 {offsets = [0, 64], sizes = [2, 64], strides = [1, 1]} : vector<2x128xf32> to vector<2x64xf32>
    %163 = vector.extract_strided_slice %103 {offsets = [0, 0], sizes = [2, 64], strides = [1, 1]} : vector<2x128xf32> to vector<2x64xf32>
    %164 = tpu.concatenate %162, %163 in 1 : vector<2x64xf32>, vector<2x64xf32> -> vector<2x128xf32>
    %cst_44 = arith.constant dense<0.000000e+00> : vector<2x128xf32>
    %165 = tpu.matmul %149, %7, %cst_44 {dimension_numbers = #tpu.dot_dimension_numbers<[1], [0], [0], [1], [0, 0, 1, 1], [], []>} : vector<2x4xf32>, vector<4x128xf32>, vector<2x128xf32> -> vector<2x128xf32>
    %166 = arith.mulf %165, %164 : vector<2x128xf32>
    %167 = arith.addf %161, %166 : vector<2x128xf32>
    %168 = vector.extract_strided_slice %103 {offsets = [0, 96], sizes = [2, 32], strides = [1, 1]} : vector<2x128xf32> to vector<2x32xf32>
    %169 = vector.extract_strided_slice %103 {offsets = [0, 0], sizes = [2, 96], strides = [1, 1]} : vector<2x128xf32> to vector<2x96xf32>
    %170 = tpu.concatenate %168, %169 in 1 : vector<2x32xf32>, vector<2x96xf32> -> vector<2x128xf32>
    %cst_45 = arith.constant dense<0.000000e+00> : vector<2x128xf32>
    %171 = tpu.matmul %151, %7, %cst_45 {dimension_numbers = #tpu.dot_dimension_numbers<[1], [0], [0], [1], [0, 0, 1, 1], [], []>} : vector<2x4xf32>, vector<4x128xf32>, vector<2x128xf32> -> vector<2x128xf32>
    %172 = arith.mulf %171, %170 : vector<2x128xf32>
    %173 = arith.addf %167, %172 : vector<2x128xf32>
    %c0_46 = arith.constant 0 : index
    %c0_47 = arith.constant 0 : index
    %c0_48 = arith.constant 0 : index
    %174 = vector.load %arg8[%c0_46, %c0_47, %c0_48] : memref<2x128x128xf32, #tpu.memory_space<vmem>>, vector<1x128x128xf32>
    %175 = vector.shape_cast %174 : vector<1x128x128xf32> to vector<128x128xf32>
    %cst_49 = arith.constant dense<0.000000e+00> : vector<2x128xf32>
    %176 = tpu.matmul %173, %175, %cst_49 {dimension_numbers = #tpu.dot_dimension_numbers<[1], [0], [0], [1], [0, 0, 1, 1], [], []>} : vector<2x128xf32>, vector<128x128xf32>, vector<2x128xf32> -> vector<2x128xf32>
    %177 = arith.addf %98, %176 : vector<2x128xf32>
    %178 = vector.extract_strided_slice %100 {offsets = [0, 64], sizes = [2, 64], strides = [1, 1]} : vector<2x512xf32> to vector<2x64xf32>
    %179 = vector.extract_strided_slice %100 {offsets = [0, 192], sizes = [2, 64], strides = [1, 1]} : vector<2x512xf32> to vector<2x64xf32>
    %180 = vector.extract_strided_slice %100 {offsets = [0, 384], sizes = [2, 128], strides = [1, 1]} : vector<2x512xf32> to vector<2x128xf32>
    %181 = arith.mulf %178, %179 : vector<2x64xf32>
    %cst_50 = arith.constant dense<0.000000e+00> : vector<2x4xf32>
    %182 = tpu.matmul %181, %6, %cst_50 {dimension_numbers = #tpu.dot_dimension_numbers<[1], [0], [0], [1], [0, 0, 1, 1], [], []>} : vector<2x64xf32>, vector<64x4xf32>, vector<2x4xf32> -> vector<2x4xf32>
    %cst_51 = arith.constant 2.500000e-01 : f32
    %183 = vector.broadcast %cst_51 : f32 to vector<2x4xf32>
    %184 = arith.mulf %182, %183 : vector<2x4xf32>
    %185 = vector.extract_strided_slice %179 {offsets = [0, 16], sizes = [2, 48], strides = [1, 1]} : vector<2x64xf32> to vector<2x48xf32>
    %186 = vector.extract_strided_slice %179 {offsets = [0, 0], sizes = [2, 16], strides = [1, 1]} : vector<2x64xf32> to vector<2x16xf32>
    %187 = tpu.concatenate %185, %186 in 1 : vector<2x48xf32>, vector<2x16xf32> -> vector<2x64xf32>
    %188 = arith.mulf %178, %187 : vector<2x64xf32>
    %cst_52 = arith.constant dense<0.000000e+00> : vector<2x4xf32>
    %189 = tpu.matmul %188, %6, %cst_52 {dimension_numbers = #tpu.dot_dimension_numbers<[1], [0], [0], [1], [0, 0, 1, 1], [], []>} : vector<2x64xf32>, vector<64x4xf32>, vector<2x4xf32> -> vector<2x4xf32>
    %cst_53 = arith.constant 2.500000e-01 : f32
    %190 = vector.broadcast %cst_53 : f32 to vector<2x4xf32>
    %191 = arith.mulf %189, %190 : vector<2x4xf32>
    %192 = vector.extract_strided_slice %179 {offsets = [0, 32], sizes = [2, 32], strides = [1, 1]} : vector<2x64xf32> to vector<2x32xf32>
    %193 = vector.extract_strided_slice %179 {offsets = [0, 0], sizes = [2, 32], strides = [1, 1]} : vector<2x64xf32> to vector<2x32xf32>
    %194 = tpu.concatenate %192, %193 in 1 : vector<2x32xf32>, vector<2x32xf32> -> vector<2x64xf32>
    %195 = arith.mulf %178, %194 : vector<2x64xf32>
    %cst_54 = arith.constant dense<0.000000e+00> : vector<2x4xf32>
    %196 = tpu.matmul %195, %6, %cst_54 {dimension_numbers = #tpu.dot_dimension_numbers<[1], [0], [0], [1], [0, 0, 1, 1], [], []>} : vector<2x64xf32>, vector<64x4xf32>, vector<2x4xf32> -> vector<2x4xf32>
    %cst_55 = arith.constant 2.500000e-01 : f32
    %197 = vector.broadcast %cst_55 : f32 to vector<2x4xf32>
    %198 = arith.mulf %196, %197 : vector<2x4xf32>
    %199 = vector.extract_strided_slice %179 {offsets = [0, 48], sizes = [2, 16], strides = [1, 1]} : vector<2x64xf32> to vector<2x16xf32>
    %200 = vector.extract_strided_slice %179 {offsets = [0, 0], sizes = [2, 48], strides = [1, 1]} : vector<2x64xf32> to vector<2x48xf32>
    %201 = tpu.concatenate %199, %200 in 1 : vector<2x16xf32>, vector<2x48xf32> -> vector<2x64xf32>
    %202 = arith.mulf %178, %201 : vector<2x64xf32>
    %cst_56 = arith.constant dense<0.000000e+00> : vector<2x4xf32>
    %203 = tpu.matmul %202, %6, %cst_56 {dimension_numbers = #tpu.dot_dimension_numbers<[1], [0], [0], [1], [0, 0, 1, 1], [], []>} : vector<2x64xf32>, vector<64x4xf32>, vector<2x4xf32> -> vector<2x4xf32>
    %cst_57 = arith.constant 2.500000e-01 : f32
    %204 = vector.broadcast %cst_57 : f32 to vector<2x4xf32>
    %205 = arith.mulf %203, %204 : vector<2x4xf32>
    %206 = arith.maximumf %184, %191 : vector<2x4xf32>
    %207 = arith.maximumf %206, %198 : vector<2x4xf32>
    %208 = arith.maximumf %207, %205 : vector<2x4xf32>
    %209 = arith.subf %184, %208 : vector<2x4xf32>
    %210 = math.exp %209 : vector<2x4xf32>
    %211 = arith.subf %191, %208 : vector<2x4xf32>
    %212 = math.exp %211 : vector<2x4xf32>
    %213 = arith.subf %198, %208 : vector<2x4xf32>
    %214 = math.exp %213 : vector<2x4xf32>
    %215 = arith.subf %205, %208 : vector<2x4xf32>
    %216 = math.exp %215 : vector<2x4xf32>
    %217 = arith.addf %210, %212 : vector<2x4xf32>
    %218 = arith.addf %217, %214 : vector<2x4xf32>
    %219 = arith.addf %218, %216 : vector<2x4xf32>
    %220 = tpu.reciprocal %219 {approx = true} : vector<2x4xf32> -> vector<2x4xf32>
    %221 = arith.mulf %210, %220 : vector<2x4xf32>
    %222 = arith.mulf %221, %56 : vector<2x4xf32>
    %223 = arith.mulf %212, %220 : vector<2x4xf32>
    %224 = arith.mulf %223, %56 : vector<2x4xf32>
    %225 = arith.mulf %214, %220 : vector<2x4xf32>
    %226 = arith.mulf %225, %56 : vector<2x4xf32>
    %227 = arith.mulf %216, %220 : vector<2x4xf32>
    %228 = arith.mulf %227, %56 : vector<2x4xf32>
    %cst_58 = arith.constant 0.000000e+00 : f32
    %229 = vector.broadcast %cst_58 : f32 to vector<2x128xf32>
    %cst_59 = arith.constant dense<0.000000e+00> : vector<2x128xf32>
    %230 = tpu.matmul %222, %7, %cst_59 {dimension_numbers = #tpu.dot_dimension_numbers<[1], [0], [0], [1], [0, 0, 1, 1], [], []>} : vector<2x4xf32>, vector<4x128xf32>, vector<2x128xf32> -> vector<2x128xf32>
    %231 = arith.mulf %230, %180 : vector<2x128xf32>
    %232 = arith.addf %229, %231 : vector<2x128xf32>
    %233 = vector.extract_strided_slice %180 {offsets = [0, 32], sizes = [2, 96], strides = [1, 1]} : vector<2x128xf32> to vector<2x96xf32>
    %234 = vector.extract_strided_slice %180 {offsets = [0, 0], sizes = [2, 32], strides = [1, 1]} : vector<2x128xf32> to vector<2x32xf32>
    %235 = tpu.concatenate %233, %234 in 1 : vector<2x96xf32>, vector<2x32xf32> -> vector<2x128xf32>
    %cst_60 = arith.constant dense<0.000000e+00> : vector<2x128xf32>
    %236 = tpu.matmul %224, %7, %cst_60 {dimension_numbers = #tpu.dot_dimension_numbers<[1], [0], [0], [1], [0, 0, 1, 1], [], []>} : vector<2x4xf32>, vector<4x128xf32>, vector<2x128xf32> -> vector<2x128xf32>
    %237 = arith.mulf %236, %235 : vector<2x128xf32>
    %238 = arith.addf %232, %237 : vector<2x128xf32>
    %239 = vector.extract_strided_slice %180 {offsets = [0, 64], sizes = [2, 64], strides = [1, 1]} : vector<2x128xf32> to vector<2x64xf32>
    %240 = vector.extract_strided_slice %180 {offsets = [0, 0], sizes = [2, 64], strides = [1, 1]} : vector<2x128xf32> to vector<2x64xf32>
    %241 = tpu.concatenate %239, %240 in 1 : vector<2x64xf32>, vector<2x64xf32> -> vector<2x128xf32>
    %cst_61 = arith.constant dense<0.000000e+00> : vector<2x128xf32>
    %242 = tpu.matmul %226, %7, %cst_61 {dimension_numbers = #tpu.dot_dimension_numbers<[1], [0], [0], [1], [0, 0, 1, 1], [], []>} : vector<2x4xf32>, vector<4x128xf32>, vector<2x128xf32> -> vector<2x128xf32>
    %243 = arith.mulf %242, %241 : vector<2x128xf32>
    %244 = arith.addf %238, %243 : vector<2x128xf32>
    %245 = vector.extract_strided_slice %180 {offsets = [0, 96], sizes = [2, 32], strides = [1, 1]} : vector<2x128xf32> to vector<2x32xf32>
    %246 = vector.extract_strided_slice %180 {offsets = [0, 0], sizes = [2, 96], strides = [1, 1]} : vector<2x128xf32> to vector<2x96xf32>
    %247 = tpu.concatenate %245, %246 in 1 : vector<2x32xf32>, vector<2x96xf32> -> vector<2x128xf32>
    %cst_62 = arith.constant dense<0.000000e+00> : vector<2x128xf32>
    %248 = tpu.matmul %228, %7, %cst_62 {dimension_numbers = #tpu.dot_dimension_numbers<[1], [0], [0], [1], [0, 0, 1, 1], [], []>} : vector<2x4xf32>, vector<4x128xf32>, vector<2x128xf32> -> vector<2x128xf32>
    %249 = arith.mulf %248, %247 : vector<2x128xf32>
    %250 = arith.addf %244, %249 : vector<2x128xf32>
    %c1 = arith.constant 1 : index
    %c0_63 = arith.constant 0 : index
    %c0_64 = arith.constant 0 : index
    %251 = vector.load %arg8[%c1, %c0_63, %c0_64] : memref<2x128x128xf32, #tpu.memory_space<vmem>>, vector<1x128x128xf32>
    %252 = vector.shape_cast %251 : vector<1x128x128xf32> to vector<128x128xf32>
    %cst_65 = arith.constant dense<0.000000e+00> : vector<2x128xf32>
    %253 = tpu.matmul %250, %252, %cst_65 {dimension_numbers = #tpu.dot_dimension_numbers<[1], [0], [0], [1], [0, 0, 1, 1], [], []>} : vector<2x128xf32>, vector<128x128xf32>, vector<2x128xf32> -> vector<2x128xf32>
    %254 = arith.addf %177, %253 : vector<2x128xf32>
    %255 = arith.mulf %57, %254 : vector<2x128xf32>
    %cst_66 = arith.constant 1.000000e+00 : f32
    %256 = vector.broadcast %cst_66 : f32 to vector<2x128xf32>
    %257 = arith.subf %256, %57 : vector<2x128xf32>
    %258 = arith.mulf %257, %3 : vector<2x128xf32>
    %259 = arith.addf %255, %258 : vector<2x128xf32>
    %c0_67 = arith.constant 0 : index
    %c0_68 = arith.constant 0 : index
    %260 = vector.load %arg12[%c0_67, %c0_68] : memref<2x128xf32, #tpu.memory_space<vmem>>, vector<2x128xf32>
    tpu.vector_store %arg12[%c0_67, %c0_68], %259 {strides = array<i32>} : memref<2x128xf32, #tpu.memory_space<vmem>>, vector<2x128xf32>,
    %c0_69 = arith.constant 0 : index
    %c0_70 = arith.constant 0 : index
    %c0_71 = arith.constant 0 : index
    %261 = vector.load %arg11[%c0_69, %c0_70, %c0_71] : memref<1x2x128xf32, #tpu.memory_space<vmem>>, vector<1x2x128xf32>
    %262 = vector.shape_cast %261 : vector<1x2x128xf32> to vector<2x128xf32>
    %263 = vector.shape_cast %259 : vector<2x128xf32> to vector<1x2x128xf32>
    tpu.vector_store %arg11[%c0_69, %c0_70, %c0_71], %263 {strides = array<i32>} : memref<1x2x128xf32, #tpu.memory_space<vmem>>, vector<1x2x128xf32>,
    return
  }
  func.func @transform_0(%arg0: i32) -> (i32, i32, i32) {
    %c0_i32 = arith.constant 0 : i32
    %c0_i32_0 = arith.constant 0 : i32
    %c0_i32_1 = arith.constant 0 : i32
    return %arg0, %c0_i32, %c0_i32_0 : i32, i32, i32
  }
  func.func @transform_1(%arg0: i32) -> (i32, i32) {
    %c0_i32 = arith.constant 0 : i32
    %c0_i32_0 = arith.constant 0 : i32
    %c0_i32_1 = arith.constant 0 : i32
    return %c0_i32, %c0_i32_0 : i32, i32
  }
  func.func @transform_2(%arg0: i32) -> (i32, i32) {
    %c0_i32 = arith.constant 0 : i32
    %c0_i32_0 = arith.constant 0 : i32
    %c0_i32_1 = arith.constant 0 : i32
    return %c0_i32, %c0_i32_0 : i32, i32
  }
  func.func @transform_3(%arg0: i32) -> (i32, i32) {
    %c0_i32 = arith.constant 0 : i32
    %c0_i32_0 = arith.constant 0 : i32
    %c0_i32_1 = arith.constant 0 : i32
    return %c0_i32, %c0_i32_0 : i32, i32
  }
  func.func @transform_4(%arg0: i32) -> (i32, i32) {
    %c0_i32 = arith.constant 0 : i32
    %c0_i32_0 = arith.constant 0 : i32
    %c0_i32_1 = arith.constant 0 : i32
    return %c0_i32, %c0_i32_0 : i32, i32
  }
  func.func @transform_5(%arg0: i32) -> (i32, i32) {
    %c0_i32 = arith.constant 0 : i32
    %c0_i32_0 = arith.constant 0 : i32
    %c0_i32_1 = arith.constant 0 : i32
    return %c0_i32, %c0_i32_0 : i32, i32
  }
  func.func @transform_6(%arg0: i32) -> (i32, i32) {
    %c0_i32 = arith.constant 0 : i32
    %c0_i32_0 = arith.constant 0 : i32
    %c0_i32_1 = arith.constant 0 : i32
    return %c0_i32, %c0_i32_0 : i32, i32
  }
  func.func @transform_7(%arg0: i32) -> (i32, i32, i32) {
    %c0_i32 = arith.constant 0 : i32
    %c0_i32_0 = arith.constant 0 : i32
    %c0_i32_1 = arith.constant 0 : i32
    %c0_i32_2 = arith.constant 0 : i32
    return %c0_i32, %c0_i32_0, %c0_i32_1 : i32, i32, i32
  }
  func.func @transform_8(%arg0: i32) -> (i32, i32) {
    %c0_i32 = arith.constant 0 : i32
    %c0_i32_0 = arith.constant 0 : i32
    %c0_i32_1 = arith.constant 0 : i32
    return %c0_i32, %c0_i32_0 : i32, i32
  }
  func.func @transform_9(%arg0: i32) -> (i32, i32) {
    %c0_i32 = arith.constant 0 : i32
    %c0_i32_0 = arith.constant 0 : i32
    %c0_i32_1 = arith.constant 0 : i32
    return %c0_i32, %c0_i32_0 : i32, i32
  }
  func.func @transform_10(%arg0: i32) -> (i32, i32, i32) {
    %c0_i32 = arith.constant 0 : i32
    %c0_i32_0 = arith.constant 0 : i32
    %c0_i32_1 = arith.constant 0 : i32
    return %arg0, %c0_i32, %c0_i32_0 : i32, i32, i32
  }
}

</mosaic_0001>

<llo_original>
// kernel: rim_forward.1
$region0: #{rim_forward.1}
  #allocation0 [shape = 'u32[]', space=smem, size = 0x4, offset = 0x4, fixed_abs, tag = 'smem constant byte address 0x4 - core index']
  #allocation1 [shape = 'u32[144,128]{1,0:T(1,128)}', space=vmem, size = 0x12000, scoped, tag = 'internal scratch']
  #allocation2 [shape = 'f32[2,128]{1,0:T(2,128)}', space=vmem, size = 0x400, scoped, tag = 'scratch operand']
  %s0 = inlined_call_operand.vmem [shape: f32[5,2,16], index: 0, kind: input, shape index: {}]
  %s1 = inlined_call_operand.vmem [shape: f32[2,128], index: 1, kind: input, shape index: {}]
  %s2 = inlined_call_operand.vmem [shape: f32[16,48], index: 2, kind: input, shape index: {}]
  %s3 = inlined_call_operand.vmem [shape: f32[1,48], index: 3, kind: input, shape index: {}]
  %s4 = inlined_call_operand.vmem [shape: f32[128,448], index: 4, kind: input, shape index: {}]
  %s5 = inlined_call_operand.vmem [shape: f32[128,384], index: 5, kind: input, shape index: {}]
  %s6 = inlined_call_operand.vmem [shape: f32[128,512], index: 6, kind: input, shape index: {}]
  %s7 = inlined_call_operand.hbm [shape: f32[2,128,128], index: 7, kind: input, shape index: {}]
  %s8 = inlined_call_operand.vmem [shape: f32[64,4], index: 8, kind: input, shape index: {}]
  %s9 = inlined_call_operand.vmem [shape: f32[4,128], index: 9, kind: input, shape index: {}]
  %s10 = inlined_call_operand.vmem [shape: f32[5,2,128], index: 10, kind: output, shape index: {}]
  %s11 = sld [smem:[#allocation0]]
  $region81: #{rim_forward.1} parent=0
    _
  %s13 = ssub.s32 1, %s11
  %s14 = scalar_select 0, %s13, %s11
  $region1: #{rim_forward.1} parent=0
    #allocation3 [shape = 'u8[131072]{0}', space=vmem, size = 0x20000, scoped, tag = 'input window, operand 7, single buffered']
    #allocation4 [shape = 's32[2]{0}', space=sflag, size = 0x8, scoped, tag = 'scoped memory for rim_forward.1']
    %15 = vsyncpa [#allocation4], 0
    loop: start=0, step=1, limit=7
    $region2: #{rim_forward.1} parent=1 // loop_pre_header
      _
    $region3: #{rim_forward.1} parent=1 // loop_header
      %s17 = sphi 0, %s21
      %p18 = scmp.ge.s32.totalorder %s17, 7
      %s27 = sphi 0, %s29
      %s30 = sphi 0, %s27
      %s31 = sphi 0, %s30
      %s47 = sphi 0, %s31
      %s51 = sphi 0, %s51
      %s53 = sphi 0, %s51
      %s54 = sphi 0, %s53
      %s68 = sphi 0, %s54
      %s72 = sphi 0, %s72
      %s74 = sphi 0, %s72
      %s75 = sphi 0, %s74
      %s89 = sphi 0, %s75
      %s93 = sphi 0, %s93
      %s95 = sphi 0, %s93
      %s96 = sphi 0, %s95
      %s110 = sphi 0, %s96
      %s114 = sphi 0, %s114
      %s116 = sphi 0, %s114
      %s117 = sphi 0, %s116
      %s131 = sphi 0, %s117
      %s135 = sphi 0, %s135
      %s137 = sphi 0, %s135
      %s138 = sphi 0, %s137
      %s152 = sphi 0, %s138
      %s156 = sphi 0, %s156
      %s158 = sphi 0, %s156
      %s159 = sphi 0, %s158
      %s173 = sphi 0, %s159
      %s177 = sphi 0, %s177
      %s179 = sphi 0, %s177
      %s180 = sphi 0, %s179
      %s194 = sphi 0, %s180
      %s198 = sphi 0, %s198
      %s200 = sphi 0, %s198
      %s201 = sphi 0, %s200
      %s215 = sphi 0, %s201
      %s219 = sphi 0, %s219
      %s221 = sphi 0, %s219
      %s222 = sphi 0, %s221
      %s236 = sphi 0, %s222
      %s242 = sphi 0, %s244
      %s245 = sphi 0, %s242
      %s246 = sphi 0, %s245
      %s262 = sphi 0, %s246
    $region4: #{rim_forward.1} parent=1 // loop_header_branch
      %20 = sbr.rel (%p18) target = $region8
    $region5: #{rim_forward.1} parent=1 // loop_body
      %s22 = ssub.s32 %s17, 1
      %s23 = ssub.s32 %s17, 2
      %s24 = sadd.s32 %s17, 1
      %s25 = ssub.s32 %s17, %s24
      %p26 = scmp.eq.s32.totalorder %s25, 0
      %s28 = sadd.s32 %s27, 1
      %s29 = scalar_select %p26, %s27, %s28
      %p32 = pneg %p26
      %p33 = scmp.eq.s32.totalorder %s17, 4
      %p34 = por %p32, %p33
      %p35 = scmp.ne.s32.totalorder %s27, %s30
      %p36 = scmp.eq.s32.totalorder %s17, 0
      %p37 = por %p35, %p36
      %p38 = scmp.ne.s32.totalorder %s27, %s30
      %p39 = scmp.eq.s32.totalorder %s22, 4
      %p40 = por %p38, %p39
      %p41 = scmp.ne.s32.totalorder %s30, %s31
      %p42 = scmp.eq.s32.totalorder %s22, 0
      %p43 = por %p41, %p42
      %p44 = scmp.ne.s32.totalorder %s30, %s31
      %p45 = scmp.eq.s32.totalorder %s23, 4
      %p46 = por %p44, %p45
      %p48 = scmp.ne.s32.totalorder %s31, %s47
      %p49 = scmp.eq.s32.totalorder %s23, 0
      %p50 = por %p48, %p49
      %s52 = sadd.s32 %s51, 1
      %p55 = scmp.eq.s32.totalorder %s17, 4
      %p56 = scmp.ne.s32.totalorder %s51, %s53
      %p57 = scmp.eq.s32.totalorder %s17, 0
      %p58 = por %p56, %p57
      %p59 = scmp.ne.s32.totalorder %s51, %s53
      %p60 = scmp.eq.s32.totalorder %s22, 4
      %p61 = por %p59, %p60
      %p62 = scmp.ne.s32.totalorder %s53, %s54
      %p63 = scmp.eq.s32.totalorder %s22, 0
      %p64 = por %p62, %p63
      %p65 = scmp.ne.s32.totalorder %s53, %s54
      %p66 = scmp.eq.s32.totalorder %s23, 4
      %p67 = por %p65, %p66
      %p69 = scmp.ne.s32.totalorder %s54, %s68
      %p70 = scmp.eq.s32.totalorder %s23, 0
      %p71 = por %p69, %p70
      %s73 = sadd.s32 %s72, 1
      %p76 = scmp.eq.s32.totalorder %s17, 4
      %p77 = scmp.ne.s32.totalorder %s72, %s74
      %p78 = scmp.eq.s32.totalorder %s17, 0
      %p79 = por %p77, %p78
      %p80 = scmp.ne.s32.totalorder %s72, %s74
      %p81 = scmp.eq.s32.totalorder %s22, 4
      %p82 = por %p80, %p81
      %p83 = scmp.ne.s32.totalorder %s74, %s75
      %p84 = scmp.eq.s32.totalorder %s22, 0
      %p85 = por %p83, %p84
      %p86 = scmp.ne.s32.totalorder %s74, %s75
      %p87 = scmp.eq.s32.totalorder %s23, 4
      %p88 = por %p86, %p87
      %p90 = scmp.ne.s32.totalorder %s75, %s89
      %p91 = scmp.eq.s32.totalorder %s23, 0
      %p92 = por %p90, %p91
      %s94 = sadd.s32 %s93, 1
      %p97 = scmp.eq.s32.totalorder %s17, 4
      %p98 = scmp.ne.s32.totalorder %s93, %s95
      %p99 = scmp.eq.s32.totalorder %s17, 0
      %p100 = por %p98, %p99
      %p101 = scmp.ne.s32.totalorder %s93, %s95
      %p102 = scmp.eq.s32.totalorder %s22, 4
      %p103 = por %p101, %p102
      %p104 = scmp.ne.s32.totalorder %s95, %s96
      %p105 = scmp.eq.s32.totalorder %s22, 0
      %p106 = por %p104, %p105
      %p107 = scmp.ne.s32.totalorder %s95, %s96
      %p108 = scmp.eq.s32.totalorder %s23, 4
      %p109 = por %p107, %p108
      %p111 = scmp.ne.s32.totalorder %s96, %s110
      %p112 = scmp.eq.s32.totalorder %s23, 0
      %p113 = por %p111, %p112
      %s115 = sadd.s32 %s114, 1
      %p118 = scmp.eq.s32.totalorder %s17, 4
      %p119 = scmp.ne.s32.totalorder %s114, %s116
      %p120 = scmp.eq.s32.totalorder %s17, 0
      %p121 = por %p119, %p120
      %p122 = scmp.ne.s32.totalorder %s114, %s116
      %p123 = scmp.eq.s32.totalorder %s22, 4
      %p124 = por %p122, %p123
      %p125 = scmp.ne.s32.totalorder %s116, %s117
      %p126 = scmp.eq.s32.totalorder %s22, 0
      %p127 = por %p125, %p126
      %p128 = scmp.ne.s32.totalorder %s116, %s117
      %p129 = scmp.eq.s32.totalorder %s23, 4
      %p130 = por %p128, %p129
      %p132 = scmp.ne.s32.totalorder %s117, %s131
      %p133 = scmp.eq.s32.totalorder %s23, 0
      %p134 = por %p132, %p133
      %s136 = sadd.s32 %s135, 1
      %p139 = scmp.eq.s32.totalorder %s17, 4
      %p140 = scmp.ne.s32.totalorder %s135, %s137
      %p141 = scmp.eq.s32.totalorder %s17, 0
      %p142 = por %p140, %p141
      %p143 = scmp.ne.s32.totalorder %s135, %s137
      %p144 = scmp.eq.s32.totalorder %s22, 4
      %p145 = por %p143, %p144
      %p146 = scmp.ne.s32.totalorder %s137, %s138
      %p147 = scmp.eq.s32.totalorder %s22, 0
      %p148 = por %p146, %p147
      %p149 = scmp.ne.s32.totalorder %s137, %s138
      %p150 = scmp.eq.s32.totalorder %s23, 4
      %p151 = por %p149, %p150
      %p153 = scmp.ne.s32.totalorder %s138, %s152
      %p154 = scmp.eq.s32.totalorder %s23, 0
      %p155 = por %p153, %p154
      %s157 = sadd.s32 %s156, 1
      %p160 = scmp.eq.s32.totalorder %s17, 4
      %p161 = scmp.ne.s32.totalorder %s156, %s158
      %p162 = scmp.eq.s32.totalorder %s17, 0
      %p163 = por %p161, %p162
      %p164 = scmp.ne.s32.totalorder %s156, %s158
      %p165 = scmp.eq.s32.totalorder %s22, 4
      %p166 = por %p164, %p165
      %p167 = scmp.ne.s32.totalorder %s158, %s159
      %p168 = scmp.eq.s32.totalorder %s22, 0
      %p169 = por %p167, %p168
      %p170 = scmp.ne.s32.totalorder %s158, %s159
      %p171 = scmp.eq.s32.totalorder %s23, 4
      %p172 = por %p170, %p171
      %p174 = scmp.ne.s32.totalorder %s159, %s173
      %p175 = scmp.eq.s32.totalorder %s23, 0
      %p176 = por %p174, %p175
      %s178 = sadd.s32 %s177, 1
      %p181 = scmp.eq.s32.totalorder %s17, 4
      %p182 = scmp.ne.s32.totalorder %s177, %s179
      %p183 = scmp.eq.s32.totalorder %s17, 0
      %p184 = por %p182, %p183
      %p185 = scmp.ne.s32.totalorder %s177, %s179
      %p186 = scmp.eq.s32.totalorder %s22, 4
      %p187 = por %p185, %p186
      %p188 = scmp.ne.s32.totalorder %s179, %s180
      %p189 = scmp.eq.s32.totalorder %s22, 0
      %p190 = por %p188, %p189
      %p191 = scmp.ne.s32.totalorder %s179, %s180
      %p192 = scmp.eq.s32.totalorder %s23, 4
      %p193 = por %p191, %p192
      %p195 = scmp.ne.s32.totalorder %s180, %s194
      %p196 = scmp.eq.s32.totalorder %s23, 0
      %p197 = por %p195, %p196
      %s199 = sadd.s32 %s198, 1
      %p202 = scmp.eq.s32.totalorder %s17, 4
      %p203 = scmp.ne.s32.totalorder %s198, %s200
      %p204 = scmp.eq.s32.totalorder %s17, 0
      %p205 = por %p203, %p204
      %p206 = scmp.ne.s32.totalorder %s198, %s200
      %p207 = scmp.eq.s32.totalorder %s22, 4
      %p208 = por %p206, %p207
      %p209 = scmp.ne.s32.totalorder %s200, %s201
      %p210 = scmp.eq.s32.totalorder %s22, 0
      %p211 = por %p209, %p210
      %p212 = scmp.ne.s32.totalorder %s200, %s201
      %p213 = scmp.eq.s32.totalorder %s23, 4
      %p214 = por %p212, %p213
      %p216 = scmp.ne.s32.totalorder %s201, %s215
      %p217 = scmp.eq.s32.totalorder %s23, 0
      %p218 = por %p216, %p217
      %s220 = sadd.s32 %s219, 1
      %p223 = scmp.eq.s32.totalorder %s17, 4
      %p224 = scmp.ne.s32.totalorder %s219, %s221
      %p225 = scmp.eq.s32.totalorder %s17, 0
      %p226 = por %p224, %p225
      %p227 = scmp.ne.s32.totalorder %s219, %s221
      %p228 = scmp.eq.s32.totalorder %s22, 4
      %p229 = por %p227, %p228
      %p230 = scmp.ne.s32.totalorder %s221, %s222
      %p231 = scmp.eq.s32.totalorder %s22, 0
      %p232 = por %p230, %p231
      %p233 = scmp.ne.s32.totalorder %s221, %s222
      %p234 = scmp.eq.s32.totalorder %s23, 4
      %p235 = por %p233, %p234
      %p237 = scmp.ne.s32.totalorder %s222, %s236
      %p238 = scmp.eq.s32.totalorder %s23, 0
      %p239 = por %p237, %p238
      %s240 = ssub.s32 %s17, %s24
      %p241 = scmp.eq.s32.totalorder %s240, 0
      %s243 = sadd.s32 %s242, 1
      %s244 = scalar_select %p241, %s242, %s243
      %p247 = pneg %p241
      %p248 = scmp.eq.s32.totalorder %s17, 4
      %p249 = por %p247, %p248
      %p250 = scmp.ne.s32.totalorder %s242, %s245
      %p251 = scmp.eq.s32.totalorder %s17, 0
      %p252 = por %p250, %p251
      %p253 = scmp.ne.s32.totalorder %s242, %s245
      %p254 = scmp.eq.s32.totalorder %s22, 4
      %p255 = por %p253, %p254
      %p256 = scmp.ne.s32.totalorder %s245, %s246
      %p257 = scmp.eq.s32.totalorder %s22, 0
      %p258 = por %p256, %p257
      %p259 = scmp.ne.s32.totalorder %s245, %s246
      %p260 = scmp.eq.s32.totalorder %s23, 4
      %p261 = por %p259, %p260
      %p263 = scmp.ne.s32.totalorder %s246, %s262
      %p264 = scmp.eq.s32.totalorder %s23, 0
      %p265 = por %p263, %p264
      %p266 = scmp.le.s32.totalorder 1, %s17
      %p267 = scmp.lt.s32.totalorder %s17, 6
      %p268 = pnand %p266, %p267
      %p269 = pneg %p268
      // Predicated region
      $region9: #{rim_forward.1} parent=5 // pred_check
        _
      $region10: #{rim_forward.1} parent=5 // pred_check_branch
        %271 = sbr.rel (%p268) target = $region12
      $region11: #{rim_forward.1} parent=5 // pred_region
        %s272 = ssub.s32 %s17, 1
        // Predicated region
        $region13: #{rim_forward.1} parent=11 // pred_check
          %p273 = pneg %p64
        $region14: #{rim_forward.1} parent=11 // pred_check_branch
          %275 = sbr.rel (%p273) target = $region16
        $region15: #{rim_forward.1} parent=11 // pred_region
          _
        $region16: #{rim_forward.1} parent=11 // pred_fallthru
          _
        // Predicated region
        $region17: #{rim_forward.1} parent=11 // pred_check
          %p276 = pneg %p85
        $region18: #{rim_forward.1} parent=11 // pred_check_branch
          %278 = sbr.rel (%p276) target = $region20
        $region19: #{rim_forward.1} parent=11 // pred_region
          _
        $region20: #{rim_forward.1} parent=11 // pred_fallthru
          _
        // Predicated region
        $region21: #{rim_forward.1} parent=11 // pred_check
          %p279 = pneg %p106
        $region22: #{rim_forward.1} parent=11 // pred_check_branch
          %281 = sbr.rel (%p279) target = $region24
        $region23: #{rim_forward.1} parent=11 // pred_region
          _
        $region24: #{rim_forward.1} parent=11 // pred_fallthru
          _
        // Predicated region
        $region25: #{rim_forward.1} parent=11 // pred_check
          %p282 = pneg %p127
        $region26: #{rim_forward.1} parent=11 // pred_check_branch
          %284 = sbr.rel (%p282) target = $region28
        $region27: #{rim_forward.1} parent=11 // pred_region
          _
        $region28: #{rim_forward.1} parent=11 // pred_fallthru
          _
        // Predicated region
        $region29: #{rim_forward.1} parent=11 // pred_check
          %p285 = pneg %p148
        $region30: #{rim_forward.1} parent=11 // pred_check_branch
          %287 = sbr.rel (%p285) target = $region32
        $region31: #{rim_forward.1} parent=11 // pred_region
          _
        $region32: #{rim_forward.1} parent=11 // pred_fallthru
          _
        // Predicated region
        $region33: #{rim_forward.1} parent=11 // pred_check
          %p288 = pneg %p169
        $region34: #{rim_forward.1} parent=11 // pred_check_branch
          %290 = sbr.rel (%p288) target = $region36
        $region35: #{rim_forward.1} parent=11 // pred_region
          _
        $region36: #{rim_forward.1} parent=11 // pred_fallthru
          _
        // Predicated region
        $region37: #{rim_forward.1} parent=11 // pred_check
          %p291 = pneg %p190
        $region38: #{rim_forward.1} parent=11 // pred_check_branch
          %293 = sbr.rel (%p291) target = $region40
        $region39: #{rim_forward.1} parent=11 // pred_region
          %s295 = ssub.s32 4096, 4096
          %296 = vsyncadd [#allocation4], %s295
          %s297 = sshll.u32 [#allocation3], 4
          %s298 = int_to_ptr.vmem [resolvable:$true] %s297
          %303 = dma.hbm_to_vmem [thread:$0]  %s7, 4096, %s298, [#allocation4], 128, 128, 8
        $region40: #{rim_forward.1} parent=11 // pred_fallthru
          _
        // Predicated region
        $region41: #{rim_forward.1} parent=11 // pred_check
          %p304 = pneg %p211
        $region42: #{rim_forward.1} parent=11 // pred_check_branch
          %306 = sbr.rel (%p304) target = $region44
        $region43: #{rim_forward.1} parent=11 // pred_region
          _
        $region44: #{rim_forward.1} parent=11 // pred_fallthru
          _
        // Predicated region
        $region45: #{rim_forward.1} parent=11 // pred_check
          %p307 = pneg %p232
        $region46: #{rim_forward.1} parent=11 // pred_check_branch
          %309 = sbr.rel (%p307) target = $region48
        $region47: #{rim_forward.1} parent=11 // pred_region
          _
        $region48: #{rim_forward.1} parent=11 // pred_fallthru
          _
      $region12: #{rim_forward.1} parent=5 // pred_fallthru
        _
      %p310 = scmp.lt.s32.totalorder %s17, 5
      // Predicated region
      $region49: #{rim_forward.1} parent=5 // pred_check
        %p311 = pneg %p310
      $region50: #{rim_forward.1} parent=5 // pred_check_branch
        %313 = sbr.rel (%p311) target = $region52
      $region51: #{rim_forward.1} parent=5 // pred_region
        // Predicated region
        $region53: #{rim_forward.1} parent=51 // pred_check
          %p314 = pneg %p37
        $region54: #{rim_forward.1} parent=51 // pred_check_branch
          %316 = sbr.rel (%p314) target = $region56
        $region55: #{rim_forward.1} parent=51 // pred_region
          %p317 = scmp.lt.s32.totalorder %s17, 4
          %s318 = scalar_select %p317, %s17, 4
          %s319 = smul.addr %s318, 2
          %s320 = scalar_lea.vmem %s0, %s319
        $region56: #{rim_forward.1} parent=51 // pred_fallthru
          _
      $region52: #{rim_forward.1} parent=5 // pred_fallthru
        _
      %p321 = scmp.le.s32.totalorder 1, %s17
      %p322 = scmp.lt.s32.totalorder %s17, 6
      %p323 = pnand %p321, %p322
      %p324 = pneg %p323
      // Predicated region
      $region57: #{rim_forward.1} parent=5 // pred_check
        _
      $region58: #{rim_forward.1} parent=5 // pred_check_branch
        %326 = sbr.rel (%p323) target = $region60
      $region59: #{rim_forward.1} parent=5 // pred_region
        %s327 = ssub.s32 %s17, 1
        // Predicated region
        $region61: #{rim_forward.1} parent=59 // pred_check
          %p328 = pneg %p190
        $region62: #{rim_forward.1} parent=59 // pred_check_branch
          %330 = sbr.rel (%p328) target = $region64
        $region63: #{rim_forward.1} parent=59 // pred_region
          %331 = dma.done [#allocation4], 4096
        $region64: #{rim_forward.1} parent=59 // pred_fallthru
          _
        %p332 = scmp.lt.s32.totalorder %s22, 4
        %s333 = scalar_select %p332, %s22, 4
        %s334 = smul.addr %s333, 2
        %s335 = scalar_lea.vmem %s0, %s334
        %p336 = pneg %p43
        %p337 = pneg %p40
        %p338 = pneg %p64
        %p339 = pneg %p61
        %p340 = pneg %p85
        %p341 = pneg %p82
        %p342 = pneg %p106
        %p343 = pneg %p103
        %p344 = pneg %p127
        %p345 = pneg %p124
        %p346 = pneg %p148
        %p347 = pneg %p145
        %p348 = pneg %p169
        %p349 = pneg %p166
        %p350 = pneg %p190
        %p351 = pneg %p187
        %p352 = pneg %p211
        %p353 = pneg %p208
        %p354 = pneg %p232
        %p355 = pneg %p229
        %p356 = pneg %p258
        %p357 = pneg %p255
        %p358 = scmp.lt.s32.totalorder %s22, 4
        %s359 = scalar_select %p358, %s22, 4
        %s360 = smul.addr %s359, 2
        %s361 = scalar_lea.vmem %s10, %s360
        %p362 = scmp.lt.s32.totalorder %s22, 4
        %s363 = scalar_select %p362, %s22, 4
        %s364 = smul.addr %s363, 2
        %s365 = scalar_lea.vmem %s0, %s364
        %p366 = scmp.lt.s32.totalorder %s22, 4
        %s367 = scalar_select %p366, %s22, 4
        %s368 = smul.addr %s367, 2
        %s369 = scalar_lea.vmem %s10, %s368
        %p370 = scmp.eq.s32.totalorder %s22, 0
        // Predicated region
        $region65: #{rim_forward.1} parent=59 // pred_check
          %p371 = pneg %p370
        $region66: #{rim_forward.1} parent=59 // pred_check_branch
          %373 = sbr.rel (%p371) target = $region68
        $region67: #{rim_forward.1} parent=59 // pred_region
          %v374 = vld [vmem:[%s1] sm:$0x3]
          %375 = vst [vmem:[#allocation2] sm:$0x3] %v374
        $region68: #{rim_forward.1} parent=59 // pred_fallthru
          _
        %v376 = vld [vmem:[#allocation2] sm:$0x3]
        %v377 = vld [vmem:[%s365] sm:$0x3]
        %v378 = vld [vmem:[%s8] sm:$0xff]
        %v379 = vld [vmem:[%s8 + $0x8] sm:$0xff]
        %v380 = vld [vmem:[%s8 + $0x10] sm:$0xff]
        %v381 = vld [vmem:[%s8 + $0x18] sm:$0xff]
        %v382 = vld [vmem:[%s8 + $0x20] sm:$0xff]
        %v383 = vld [vmem:[%s8 + $0x28] sm:$0xff]
        %v384 = vld [vmem:[%s8 + $0x30] sm:$0xff]
        %v385 = vld [vmem:[%s8 + $0x38] sm:$0xff]
        %v386 = vld [vmem:[%s9] sm:$0xf]
        %v387 = vld [vmem:[%s3] sm:$0x1]
        %v388 = vld [vmem:[%s2] sm:$0xff]
        %v389 = vld [vmem:[%s2 + $0x8] sm:$0xff]
        %v391 = vlaneseq
        %v392 = vshrl.u32 %v391, 7
        %v393 = vsub.s32 0, %v392
        %v394 = vrot.slane %v387, %v393
        %vm396 = vcmask 130048
        %v398 = vsel %vm396, %v377, 0
        %400 = vmatprep.subr.mxu0 0.0
        %401 = vmatpush1.msra.mxu0 0.0
        %402 = vmatprep.subr.mxu0 0.0
        %403 = vmatpush1.msra.mxu0 0.0
        %404 = vmatprep.subr.mxu0 0.0
        %405 = vmatpush1.msra.mxu0 0.0
        %406 = vmatprep.subr.mxu0 0.0
        %407 = vmatpush1.msra.mxu0 0.0
        %408 = vmatprep.subr.mxu0 0.0
        %409 = vmatpush1.msra.mxu0 0.0
        %410 = vmatprep.subr.mxu0 0.0
        %411 = vmatpush1.msra.mxu0 0.0
        %412 = vmatprep.subr.mxu0 0.0
        %413 = vmatpush1.msra.mxu0 0.0
        %414 = vmatprep.subr.mxu0 0.0
        %415 = vmatpush1.msra.mxu0 0.0
        %416 = vmatprep.subr.mxu0 0.0
        %417 = vmatpush1.msra.mxu0 0.0
        %418 = vmatprep.subr.mxu0 0.0
        %419 = vmatpush1.msra.mxu0 0.0
        %420 = vmatprep.subr.mxu0 0.0
        %421 = vmatpush1.msra.mxu0 0.0
        %422 = vmatprep.subr.mxu0 0.0
        %423 = vmatpush1.msra.mxu0 0.0
        %424 = vmatprep.subr.mxu0 0.0
        %425 = vmatpush1.msra.mxu0 0.0
        %426 = vmatprep.subr.mxu0 0.0
        %427 = vmatpush1.msra.mxu0 0.0
        %428 = vmatprep.subr.mxu0 0.0
        %429 = vmatpush1.msra.mxu0 %v389
        %430 = vmatprep.subr.mxu0 0.0
        %431 = vmatpush1.msra.mxu0 %v388
        %432 = vmatprep.subr.mxu0 0.0
        %433 = vmatpush2.msra.mxu0 0.0
        %434 = vmatprep.subr.mxu0 0.0
        %435 = vmatpush2.msra.mxu0 0.0
        %436 = vmatprep.subr.mxu0 0.0
        %437 = vmatpush2.msra.mxu0 0.0
        %438 = vmatprep.subr.mxu0 0.0
        %439 = vmatpush2.msra.mxu0 0.0
        %440 = vmatprep.subr.mxu0 0.0
        %441 = vmatpush2.msra.mxu0 0.0
        %442 = vmatprep.subr.mxu0 0.0
        %443 = vmatpush2.msra.mxu0 0.0
        %444 = vmatprep.subr.mxu0 0.0
        %445 = vmatpush2.msra.mxu0 0.0
        %446 = vmatprep.subr.mxu0 0.0
        %447 = vmatpush2.msra.mxu0 0.0
        %448 = vmatprep.subr.mxu0 0.0
        %449 = vmatpush2.msra.mxu0 0.0
        %450 = vmatprep.subr.mxu0 0.0
        %451 = vmatpush2.msra.mxu0 0.0
        %452 = vmatprep.subr.mxu0 0.0
        %453 = vmatpush2.msra.mxu0 0.0
        %454 = vmatprep.subr.mxu0 0.0
        %455 = vmatpush2.msra.mxu0 0.0
        %456 = vmatprep.subr.mxu0 0.0
        %457 = vmatpush2.msra.mxu0 0.0
        %458 = vmatprep.subr.mxu0 0.0
        %459 = vmatpush2.msra.mxu0 0.0
        %460 = vmatprep.subr.mxu0 0.0
        %461 = vmatpush2.msra.mxu0 0.0
        %462 = vmatprep.subr.mxu0 0.0
        %463 = vmatpush2.msra.mxu0 0.0
        %464 = vmatprep.mubr.f32.mxu0 0.0
        %465 = vmatmul.mubr.f32.gmra.mxu0 %v398
        %v466 = vpop.f32.mrf.mxu0
        %v467 = vadd.f32 %v394, %v466
        %v468 = vpop.f32.mrf.mxu0
        %469 = vdwg.mxu0
        %v470 = vld [vmem:[%s4] sm:$0xff]
        %v471 = vld [vmem:[%s4 + $0x8] sm:$0xff]
        %v472 = vld [vmem:[%s4 + $0x10] sm:$0xff]
        %v473 = vld [vmem:[%s4 + $0x18] sm:$0xff]
        %v474 = vld [vmem:[%s4 + $0x20] sm:$0xff]
        %v475 = vld [vmem:[%s4 + $0x28] sm:$0xff]
        %v476 = vld [vmem:[%s4 + $0x30] sm:$0xff]
        %v477 = vld [vmem:[%s4 + $0x38] sm:$0xff]
        %v478 = vld [vmem:[%s4 + $0x40] sm:$0xff]
        %v479 = vld [vmem:[%s4 + $0x48] sm:$0xff]
        %v480 = vld [vmem:[%s4 + $0x50] sm:$0xff]
        %v481 = vld [vmem:[%s4 + $0x58] sm:$0xff]
        %v482 = vld [vmem:[%s4 + $0x60] sm:$0xff]
        %v483 = vld [vmem:[%s4 + $0x68] sm:$0xff]
        %v484 = vld [vmem:[%s4 + $0x70] sm:$0xff]
        %v485 = vld [vmem:[%s4 + $0x78] sm:$0xff]
        %v486 = vld [vmem:[%s4 + $0x80] sm:$0xff]
        %v487 = vld [vmem:[%s4 + $0x88] sm:$0xff]
        %v488 = vld [vmem:[%s4 + $0x90] sm:$0xff]
        %v489 = vld [vmem:[%s4 + $0x98] sm:$0xff]
        %v490 = vld [vmem:[%s4 + $0xa0] sm:$0xff]
        %v491 = vld [vmem:[%s4 + $0xa8] sm:$0xff]
        %v492 = vld [vmem:[%s4 + $0xb0] sm:$0xff]
        %v493 = vld [vmem:[%s4 + $0xb8] sm:$0xff]
        %v494 = vld [vmem:[%s4 + $0xc0] sm:$0xff]
        %v495 = vld [vmem:[%s4 + $0xc8] sm:$0xff]
        %v496 = vld [vmem:[%s4 + $0xd0] sm:$0xff]
        %v497 = vld [vmem:[%s4 + $0xd8] sm:$0xff]
        %v498 = vld [vmem:[%s4 + $0xe0] sm:$0xff]
        %v499 = vld [vmem:[%s4 + $0xe8] sm:$0xff]
        %v500 = vld [vmem:[%s4 + $0xf0] sm:$0xff]
        %v501 = vld [vmem:[%s4 + $0xf8] sm:$0xff]
        %v502 = vld [vmem:[%s4 + $0x100] sm:$0xff]
        %v503 = vld [vmem:[%s4 + $0x108] sm:$0xff]
        %v504 = vld [vmem:[%s4 + $0x110] sm:$0xff]
        %v505 = vld [vmem:[%s4 + $0x118] sm:$0xff]
        %v506 = vld [vmem:[%s4 + $0x120] sm:$0xff]
        %v507 = vld [vmem:[%s4 + $0x128] sm:$0xff]
        %v508 = vld [vmem:[%s4 + $0x130] sm:$0xff]
        %v509 = vld [vmem:[%s4 + $0x138] sm:$0xff]
        %v510 = vld [vmem:[%s4 + $0x140] sm:$0xff]
        %v511 = vld [vmem:[%s4 + $0x148] sm:$0xff]
        %v512 = vld [vmem:[%s4 + $0x150] sm:$0xff]
        %v513 = vld [vmem:[%s4 + $0x158] sm:$0xff]
        %v514 = vld [vmem:[%s4 + $0x160] sm:$0xff]
        %v515 = vld [vmem:[%s4 + $0x168] sm:$0xff]
        %v516 = vld [vmem:[%s4 + $0x170] sm:$0xff]
        %v517 = vld [vmem:[%s4 + $0x178] sm:$0xff]
        %v518 = vld [vmem:[%s4 + $0x180] sm:$0xff]
        %v519 = vld [vmem:[%s4 + $0x188] sm:$0xff]
        %v520 = vld [vmem:[%s4 + $0x190] sm:$0xff]
        %v521 = vld [vmem:[%s4 + $0x198] sm:$0xff]
        %v522 = vld [vmem:[%s4 + $0x1a0] sm:$0xff]
        %v523 = vld [vmem:[%s4 + $0x1a8] sm:$0xff]
        %v524 = vld [vmem:[%s4 + $0x1b0] sm:$0xff]
        %v525 = vld [vmem:[%s4 + $0x1b8] sm:$0xff]
        %v526 = vld [vmem:[%s4 + $0x1c0] sm:$0xff]
        %v527 = vld [vmem:[%s4 + $0x1c8] sm:$0xff]
        %v528 = vld [vmem:[%s4 + $0x1d0] sm:$0xff]
        %v529 = vld [vmem:[%s4 + $0x1d8] sm:$0xff]
        %v530 = vld [vmem:[%s4 + $0x1e0] sm:$0xff]
        %v531 = vld [vmem:[%s4 + $0x1e8] sm:$0xff]
        %v532 = vld [vmem:[%s4 + $0x1f0] sm:$0xff]
        %v533 = vld [vmem:[%s4 + $0x1f8] sm:$0xff]
        %534 = vmatprep.subr.mxu0 %v531
        %535 = vmatpush1.msra.mxu0 %v530
        %536 = vmatprep.subr.mxu0 %v527
        %537 = vmatpush1.msra.mxu0 %v526
        %538 = vmatprep.subr.mxu0 %v523
        %539 = vmatpush1.msra.mxu0 %v522
        %540 = vmatprep.subr.mxu0 %v519
        %541 = vmatpush1.msra.mxu0 %v518
        %542 = vmatprep.subr.mxu0 %v515
        %543 = vmatpush1.msra.mxu0 %v514
        %544 = vmatprep.subr.mxu0 %v511
        %545 = vmatpush1.msra.mxu0 %v510
        %546 = vmatprep.subr.mxu0 %v507
        %547 = vmatpush1.msra.mxu0 %v506
        %548 = vmatprep.subr.mxu0 %v503
        %549 = vmatpush1.msra.mxu0 %v502
        %550 = vmatprep.subr.mxu0 %v499
        %551 = vmatpush1.msra.mxu0 %v498
        %552 = vmatprep.subr.mxu0 %v495
        %553 = vmatpush1.msra.mxu0 %v494
        %554 = vmatprep.subr.mxu0 %v491
        %555 = vmatpush1.msra.mxu0 %v490
        %556 = vmatprep.subr.mxu0 %v487
        %557 = vmatpush1.msra.mxu0 %v486
        %558 = vmatprep.subr.mxu0 %v483
        %559 = vmatpush1.msra.mxu0 %v482
        %560 = vmatprep.subr.mxu0 %v479
        %561 = vmatpush1.msra.mxu0 %v478
        %562 = vmatprep.subr.mxu0 %v475
        %563 = vmatpush1.msra.mxu0 %v474
        %564 = vmatprep.subr.mxu0 %v471
        %565 = vmatpush1.msra.mxu0 %v470
        %566 = vmatprep.subr.mxu0 0.0
        %567 = vmatpush2.msra.mxu0 0.0
        %568 = vmatprep.subr.mxu0 0.0
        %569 = vmatpush2.msra.mxu0 0.0
        %570 = vmatprep.subr.mxu0 0.0
        %571 = vmatpush2.msra.mxu0 0.0
        %572 = vmatprep.subr.mxu0 0.0
        %573 = vmatpush2.msra.mxu0 0.0
        %574 = vmatprep.subr.mxu0 0.0
        %575 = vmatpush2.msra.mxu0 0.0
        %576 = vmatprep.subr.mxu0 0.0
        %577 = vmatpush2.msra.mxu0 0.0
        %578 = vmatprep.subr.mxu0 0.0
        %579 = vmatpush2.msra.mxu0 0.0
        %580 = vmatprep.subr.mxu0 0.0
        %581 = vmatpush2.msra.mxu0 0.0
        %582 = vmatprep.subr.mxu0 0.0
        %583 = vmatpush2.msra.mxu0 0.0
        %584 = vmatprep.subr.mxu0 0.0
        %585 = vmatpush2.msra.mxu0 0.0
        %586 = vmatprep.subr.mxu0 0.0
        %587 = vmatpush2.msra.mxu0 0.0
        %588 = vmatprep.subr.mxu0 0.0
        %589 = vmatpush2.msra.mxu0 0.0
        %590 = vmatprep.subr.mxu0 0.0
        %591 = vmatpush2.msra.mxu0 0.0
        %592 = vmatprep.subr.mxu0 0.0
        %593 = vmatpush2.msra.mxu0 0.0
        %594 = vmatprep.subr.mxu0 0.0
        %595 = vmatpush2.msra.mxu0 0.0
        %596 = vmatprep.subr.mxu0 0.0
        %597 = vmatpush2.msra.mxu0 0.0
        %598 = vmatprep.mubr.f32.mxu0 0.0
        %599 = vmatmul.mubr.f32.gmra.mxu0 %v376
        %v600 = vpop.f32.mrf.mxu0
        %v601 = vadd.f32 0.0, %v600
        %v602 = vpop.f32.mrf.mxu0
        %v603 = vadd.f32 0.0, %v602
        %604 = vdwg.mxu0
        %605 = vmatprep.subr.mxu0 %v533
        %606 = vmatpush1.msra.mxu0 %v532
        %607 = vmatprep.subr.mxu0 %v529
        %608 = vmatpush1.msra.mxu0 %v528
        %609 = vmatprep.subr.mxu0 %v525
        %610 = vmatpush1.msra.mxu0 %v524
        %611 = vmatprep.subr.mxu0 %v521
        %612 = vmatpush1.msra.mxu0 %v520
        %613 = vmatprep.subr.mxu0 %v517
        %614 = vmatpush1.msra.mxu0 %v516
        %615 = vmatprep.subr.mxu0 %v513
        %616 = vmatpush1.msra.mxu0 %v512
        %617 = vmatprep.subr.mxu0 %v509
        %618 = vmatpush1.msra.mxu0 %v508
        %619 = vmatprep.subr.mxu0 %v505
        %620 = vmatpush1.msra.mxu0 %v504
        %621 = vmatprep.subr.mxu0 %v501
        %622 = vmatpush1.msra.mxu0 %v500
        %623 = vmatprep.subr.mxu0 %v497
        %624 = vmatpush1.msra.mxu0 %v496
        %625 = vmatprep.subr.mxu0 %v493
        %626 = vmatpush1.msra.mxu0 %v492
        %627 = vmatprep.subr.mxu0 %v489
        %628 = vmatpush1.msra.mxu0 %v488
        %629 = vmatprep.subr.mxu0 %v485
        %630 = vmatpush1.msra.mxu0 %v484
        %631 = vmatprep.subr.mxu0 %v481
        %632 = vmatpush1.msra.mxu0 %v480
        %633 = vmatprep.subr.mxu0 %v477
        %634 = vmatpush1.msra.mxu0 %v476
        %635 = vmatprep.subr.mxu0 %v473
        %636 = vmatpush1.msra.mxu0 %v472
        %637 = vmatprep.subr.mxu0 0.0
        %638 = vmatpush2.msra.mxu0 0.0
        %639 = vmatprep.subr.mxu0 0.0
        %640 = vmatpush2.msra.mxu0 0.0
        %641 = vmatprep.subr.mxu0 0.0
        %642 = vmatpush2.msra.mxu0 0.0
        %643 = vmatprep.subr.mxu0 0.0
        %644 = vmatpush2.msra.mxu0 0.0
        %645 = vmatprep.subr.mxu0 0.0
        %646 = vmatpush2.msra.mxu0 0.0
        %647 = vmatprep.subr.mxu0 0.0
        %648 = vmatpush2.msra.mxu0 0.0
        %649 = vmatprep.subr.mxu0 0.0
        %650 = vmatpush2.msra.mxu0 0.0
        %651 = vmatprep.subr.mxu0 0.0
        %652 = vmatpush2.msra.mxu0 0.0
        %653 = vmatprep.subr.mxu0 0.0
        %654 = vmatpush2.msra.mxu0 0.0
        %655 = vmatprep.subr.mxu0 0.0
        %656 = vmatpush2.msra.mxu0 0.0
        %657 = vmatprep.subr.mxu0 0.0
        %658 = vmatpush2.msra.mxu0 0.0
        %659 = vmatprep.subr.mxu0 0.0
        %660 = vmatpush2.msra.mxu0 0.0
        %661 = vmatprep.subr.mxu0 0.0
        %662 = vmatpush2.msra.mxu0 0.0
        %663 = vmatprep.subr.mxu0 0.0
        %664 = vmatpush2.msra.mxu0 0.0
        %665 = vmatprep.subr.mxu0 0.0
        %666 = vmatpush2.msra.mxu0 0.0
        %667 = vmatprep.subr.mxu0 0.0
        %668 = vmatpush2.msra.mxu0 0.0
        %669 = vmatprep.mubr.f32.mxu0 0.0
        %670 = vmatmul.mubr.f32.gmra.mxu0 %v376
        %v671 = vpop.f32.mrf.mxu0
        %v672 = vadd.f32 0.0, %v671
        %v673 = vpop.f32.mrf.mxu0
        %v674 = vadd.f32 0.0, %v673
        %675 = vdwg.mxu0
        %677 = vrot.lane.b32.xlu0 %v467, 16
        %v678 = vpop.permute.xlu0 %677
        %680 = vrot.lane.b32.xlu0 %v467, 32
        %v681 = vpop.permute.xlu0 %680
        %683 = vrot.lane.b32.xlu0 %v467, 48
        %v684 = vpop.permute.xlu0 %683
        %v686 = vsel %vm396, %v467, %v678
        %vm687 = vcmask 261120
        %v688 = vsel %vm687, %v686, %v681
        %vm689 = vcmask 392192
        %v690 = vsel %vm689, %v688, %v684
        %691 = vrot.lane.b32.xlu0 %v394, 16
        %v692 = vpop.permute.xlu0 %691
        %694 = vrot.lane.b32.xlu0 %v394, 32
        %v695 = vpop.permute.xlu0 %694
        %697 = vrot.lane.b32.xlu0 %v394, 48
        %v698 = vpop.permute.xlu0 %697
        %v700 = vsel %vm396, %v387, %v692
        %v701 = vsel %vm687, %v700, %v695
        %v702 = vsel %vm689, %v701, %v698
        %v703 = vmul.f32 %v601, %v690
        %vm704 = vcmask 523264
        %v706 = vsel %vm704, %v703, 0
        %708 = vmatprep.subr.mxu0 0.0
        %709 = vmatpush1.msra.mxu0 0.0
        %710 = vmatprep.subr.mxu0 0.0
        %711 = vmatpush1.msra.mxu0 0.0
        %712 = vmatprep.subr.mxu0 0.0
        %713 = vmatpush1.msra.mxu0 0.0
        %714 = vmatprep.subr.mxu0 0.0
        %715 = vmatpush1.msra.mxu0 0.0
        %716 = vmatprep.subr.mxu0 0.0
        %717 = vmatpush1.msra.mxu0 0.0
        %718 = vmatprep.subr.mxu0 0.0
        %719 = vmatpush1.msra.mxu0 0.0
        %720 = vmatprep.subr.mxu0 0.0
        %721 = vmatpush1.msra.mxu0 0.0
        %722 = vmatprep.subr.mxu0 0.0
        %723 = vmatpush1.msra.mxu0 0.0
        %724 = vmatprep.subr.mxu0 0.0
        %725 = vmatpush1.msra.mxu0 %v385
        %726 = vmatprep.subr.mxu0 0.0
        %727 = vmatpush1.msra.mxu0 %v384
        %728 = vmatprep.subr.mxu0 0.0
        %729 = vmatpush1.msra.mxu0 %v383
        %730 = vmatprep.subr.mxu0 0.0
        %731 = vmatpush1.msra.mxu0 %v382
        %732 = vmatprep.subr.mxu0 0.0
        %733 = vmatpush1.msra.mxu0 %v381
        %734 = vmatprep.subr.mxu0 0.0
        %735 = vmatpush1.msra.mxu0 %v380
        %736 = vmatprep.subr.mxu0 0.0
        %737 = vmatpush1.msra.mxu0 %v379
        %738 = vmatprep.subr.mxu0 0.0
        %739 = vmatpush1.msra.mxu0 %v378
        %740 = vmatprep.subr.mxu0 0.0
        %741 = vmatpush2.msra.mxu0 0.0
        %742 = vmatprep.subr.mxu0 0.0
        %743 = vmatpush2.msra.mxu0 0.0
        %744 = vmatprep.subr.mxu0 0.0
        %745 = vmatpush2.msra.mxu0 0.0
        %746 = vmatprep.subr.mxu0 0.0
        %747 = vmatpush2.msra.mxu0 0.0
        %748 = vmatprep.subr.mxu0 0.0
        %749 = vmatpush2.msra.mxu0 0.0
        %750 = vmatprep.subr.mxu0 0.0
        %751 = vmatpush2.msra.mxu0 0.0
        %752 = vmatprep.subr.mxu0 0.0
        %753 = vmatpush2.msra.mxu0 0.0
        %754 = vmatprep.subr.mxu0 0.0
        %755 = vmatpush2.msra.mxu0 0.0
        %756 = vmatprep.subr.mxu0 0.0
        %757 = vmatpush2.msra.mxu0 0.0
        %758 = vmatprep.subr.mxu0 0.0
        %759 = vmatpush2.msra.mxu0 0.0
        %760 = vmatprep.subr.mxu0 0.0
        %761 = vmatpush2.msra.mxu0 0.0
        %762 = vmatprep.subr.mxu0 0.0
        %763 = vmatpush2.msra.mxu0 0.0
        %764 = vmatprep.subr.mxu0 0.0
        %765 = vmatpush2.msra.mxu0 0.0
        %766 = vmatprep.subr.mxu0 0.0
        %767 = vmatpush2.msra.mxu0 0.0
        %768 = vmatprep.subr.mxu0 0.0
        %769 = vmatpush2.msra.mxu0 0.0
        %770 = vmatprep.subr.mxu0 0.0
        %771 = vmatpush2.msra.mxu0 0.0
        %772 = vmatprep.mubr.f32.mxu0 0.0
        %773 = vmatmul.mubr.f32.gmra.mxu0 %v706
        %v774 = vpop.f32.mrf.mxu0
        %v775 = vadd.f32 0.0, %v774
        %v776 = vpop.f32.mrf.mxu0
        %777 = vdwg.mxu0
        %v778 = vmul.f32 %v775, 0.25
        %v779 = vlaneseq
        %v780 = vshrl.u32 %v779, 7
        %v781 = vsub.s32 0, %v780
        %v782 = vrot.slane %v702, %v781
        %v783 = vmul.f32 %v601, %v782
        %v785 = vsel %vm704, %v783, 0
        %787 = vmatprep.subr.mxu0 0.0
        %788 = vmatpush1.msra.mxu0 0.0
        %789 = vmatprep.subr.mxu0 0.0
        %790 = vmatpush1.msra.mxu0 0.0
        %791 = vmatprep.subr.mxu0 0.0
        %792 = vmatpush1.msra.mxu0 0.0
        %793 = vmatprep.subr.mxu0 0.0
        %794 = vmatpush1.msra.mxu0 0.0
        %795 = vmatprep.subr.mxu0 0.0
        %796 = vmatpush1.msra.mxu0 0.0
        %797 = vmatprep.subr.mxu0 0.0
        %798 = vmatpush1.msra.mxu0 0.0
        %799 = vmatprep.subr.mxu0 0.0
        %800 = vmatpush1.msra.mxu0 0.0
        %801 = vmatprep.subr.mxu0 0.0
        %802 = vmatpush1.msra.mxu0 0.0
        %803 = vmatprep.subr.mxu0 0.0
        %804 = vmatpush1.msra.mxu0 %v385
        %805 = vmatprep.subr.mxu0 0.0
        %806 = vmatpush1.msra.mxu0 %v384
        %807 = vmatprep.subr.mxu0 0.0
        %808 = vmatpush1.msra.mxu0 %v383
        %809 = vmatprep.subr.mxu0 0.0
        %810 = vmatpush1.msra.mxu0 %v382
        %811 = vmatprep.subr.mxu0 0.0
        %812 = vmatpush1.msra.mxu0 %v381
        %813 = vmatprep.subr.mxu0 0.0
        %814 = vmatpush1.msra.mxu0 %v380
        %815 = vmatprep.subr.mxu0 0.0
        %816 = vmatpush1.msra.mxu0 %v379
        %817 = vmatprep.subr.mxu0 0.0
        %818 = vmatpush1.msra.mxu0 %v378
        %819 = vmatprep.subr.mxu0 0.0
        %820 = vmatpush2.msra.mxu0 0.0
        %821 = vmatprep.subr.mxu0 0.0
        %822 = vmatpush2.msra.mxu0 0.0
        %823 = vmatprep.subr.mxu0 0.0
        %824 = vmatpush2.msra.mxu0 0.0
        %825 = vmatprep.subr.mxu0 0.0
        %826 = vmatpush2.msra.mxu0 0.0
        %827 = vmatprep.subr.mxu0 0.0
        %828 = vmatpush2.msra.mxu0 0.0
        %829 = vmatprep.subr.mxu0 0.0
        %830 = vmatpush2.msra.mxu0 0.0
        %831 = vmatprep.subr.mxu0 0.0
        %832 = vmatpush2.msra.mxu0 0.0
        %833 = vmatprep.subr.mxu0 0.0
        %834 = vmatpush2.msra.mxu0 0.0
        %835 = vmatprep.subr.mxu0 0.0
        %836 = vmatpush2.msra.mxu0 0.0
        %837 = vmatprep.subr.mxu0 0.0
        %838 = vmatpush2.msra.mxu0 0.0
        %839 = vmatprep.subr.mxu0 0.0
        %840 = vmatpush2.msra.mxu0 0.0
        %841 = vmatprep.subr.mxu0 0.0
        %842 = vmatpush2.msra.mxu0 0.0
        %843 = vmatprep.subr.mxu0 0.0
        %844 = vmatpush2.msra.mxu0 0.0
        %845 = vmatprep.subr.mxu0 0.0
        %846 = vmatpush2.msra.mxu0 0.0
        %847 = vmatprep.subr.mxu0 0.0
        %848 = vmatpush2.msra.mxu0 0.0
        %849 = vmatprep.subr.mxu0 0.0
        %850 = vmatpush2.msra.mxu0 0.0
        %851 = vmatprep.mubr.f32.mxu0 0.0
        %852 = vmatmul.mubr.f32.gmra.mxu0 %v785
        %v853 = vpop.f32.mrf.mxu0
        %v854 = vadd.f32 0.0, %v853
        %v855 = vpop.f32.mrf.mxu0
        %856 = vdwg.mxu0
        %v857 = vmul.f32 %v854, 0.25
        %v858 = vlaneseq
        %v859 = vshrl.u32 %v858, 7
        %v860 = vsub.s32 0, %v859
        %v861 = vrot.slane %v778, %v860
        %863 = vbcast.lane.b32.xlu0 %v861, 256
        %v864 = vpop.permute.xlu0 %863
        %v865 = vlaneseq
        %v866 = vshrl.u32 %v865, 7
        %v867 = vsub.s32 1, %v866
        %v868 = vrot.slane %v778, %v867
        %870 = vbcast.lane.b32.xlu0 %v868, 256
        %v871 = vpop.permute.xlu0 %870
        %v874 = vunpack.c.l.s4 1966171168
        %v875 = vunpack.c.0.s8 %v874
        %v876 = vlaneseq
        %v877 = vshrl.u32 %v876, 7
        %v878 = vsub.s32 %v875, %v877
        %v879 = vrot.slane %v778, %v878
        %v880 = vcombine.high %v879, %v879
        %v882 = vunpack.c.l.s4 1966171168
        %v883 = vunpack.c.0.s8 %v882
        %v884 = vlaneseq
        %v885 = vshrl.u32 %v884, 7
        %v886 = vsub.s32 %v883, %v885
        %v887 = vrot.slane %v879, %v886
        %v889 = vunpack.c.l.s4 1966171168
        %v890 = vunpack.c.0.s8 %v889
        %v891 = vlaneseq
        %v892 = vshrl.u32 %v891, 7
        %v893 = vsub.s32 %v890, %v892
        %v894 = vrot.slane %v880, %v893
        %v895 = vlaneseq
        %v896 = vshrl.u32 %v895, 7
        %v897 = vlaneseq
        %v898 = vand.u32 %v897, 127
        %v899 = vlaneseq
        %v900 = vshrl.u32 %v899, 7
        %v901 = vsub.s32 0, %v900
        %v902 = vrot.slane %v887, %v901
        %v903 = vlaneseq
        %v904 = vshrl.u32 %v903, 7
        %v905 = vsub.s32 0, %v904
        %v906 = vrot.slane %v894, %v905
        %vm909 = vcmp.gt.f32.partialorder %v902, %v864
        %vm910 = vcmp.gt.f32.partialorder %v906, %v871
        %vm911 = vcmp.eq.f32.partialorder %v902, %v864
        %vm912 = vcmp.eq.f32.partialorder %v906, %v871
        %vm913 = vcmp.lt.s32.totalorder %v898, %v896
        %v914 = vsel %vm913, 1, 0
        %vm915 = vcmp.eq.s32.totalorder %v914, 1
        %vm916 = vmand %vm911, %vm915
        %vm917 = vmand %vm912, %vm915
        %vm918 = vmor %vm909, %vm916
        %vm919 = vmor %vm910, %vm917
        %v920 = vsel %vm918, 1, 0
        %v921 = vsel %vm919, 1, 0
        %v922 = vcvt.s32.f32 %v920
        %v923 = vcvt.s32.f32 %v921
        %vm924 = vcmask 27648
        %v925 = vsel %vm924, %v922, 0.0
        %926 = vadd.xlane.f32.xlu0 %v925
        %v927 = vpop.xlane.xlu0 %926
        %v928 = vsel %vm924, %v923, 0.0
        %929 = vadd.xlane.f32.xlu0 %v928
        %v930 = vpop.xlane.xlu0 %929
        %vm931 = vcmp.lt.f32.partialorder %v927, 2.0
        %vm932 = vcmp.lt.f32.partialorder %v930, 2.0
        %v933 = vsel %vm931, 1, 0
        %v934 = vsel %vm932, 1, 0
        %v935 = vcvt.s32.f32 %v933
        %v936 = vcvt.s32.f32 %v934
        %v939 = vlaneseq
        %v940 = vshrl.u32 %v939, 7
        %v941 = vsub.s32 %v898, %v940
        %v942 = vrot.slane %v935, %v941
        %v943 = vlaneseq
        %v944 = vshrl.u32 %v943, 7
        %v945 = vsub.s32 %v898, %v944
        %v946 = vrot.slane %v936, %v945
        %vm947 = vcmask 1041409
        %v948 = vsel %vm947, %v946, %v942
        %vm949 = vcmask 31744
        %v950 = vsel %vm949, %v948, 0
        %vm952 = vcmask 1043456
        %v954 = vsel %vm952, %v386, 0
        %956 = vmatprep.subr.mxu0 0.0
        %957 = vmatpush1.msra.mxu0 0.0
        %958 = vmatprep.subr.mxu0 0.0
        %959 = vmatpush1.msra.mxu0 0.0
        %960 = vmatprep.subr.mxu0 0.0
        %961 = vmatpush1.msra.mxu0 0.0
        %962 = vmatprep.subr.mxu0 0.0
        %963 = vmatpush1.msra.mxu0 0.0
        %964 = vmatprep.subr.mxu0 0.0
        %965 = vmatpush1.msra.mxu0 0.0
        %966 = vmatprep.subr.mxu0 0.0
        %967 = vmatpush1.msra.mxu0 0.0
        %968 = vmatprep.subr.mxu0 0.0
        %969 = vmatpush1.msra.mxu0 0.0
        %970 = vmatprep.subr.mxu0 0.0
        %971 = vmatpush1.msra.mxu0 0.0
        %972 = vmatprep.subr.mxu0 0.0
        %973 = vmatpush1.msra.mxu0 0.0
        %974 = vmatprep.subr.mxu0 0.0
        %975 = vmatpush1.msra.mxu0 0.0
        %976 = vmatprep.subr.mxu0 0.0
        %977 = vmatpush1.msra.mxu0 0.0
        %978 = vmatprep.subr.mxu0 0.0
        %979 = vmatpush1.msra.mxu0 0.0
        %980 = vmatprep.subr.mxu0 0.0
        %981 = vmatpush1.msra.mxu0 0.0
        %982 = vmatprep.subr.mxu0 0.0
        %983 = vmatpush1.msra.mxu0 0.0
        %984 = vmatprep.subr.mxu0 0.0
        %985 = vmatpush1.msra.mxu0 0.0
        %986 = vmatprep.subr.mxu0 0.0
        %987 = vmatpush1.msra.mxu0 %v954
        %988 = vmatprep.subr.mxu0 0.0
        %989 = vmatpush2.msra.mxu0 0.0
        %990 = vmatprep.subr.mxu0 0.0
        %991 = vmatpush2.msra.mxu0 0.0
        %992 = vmatprep.subr.mxu0 0.0
        %993 = vmatpush2.msra.mxu0 0.0
        %994 = vmatprep.subr.mxu0 0.0
        %995 = vmatpush2.msra.mxu0 0.0
        %996 = vmatprep.subr.mxu0 0.0
        %997 = vmatpush2.msra.mxu0 0.0
        %998 = vmatprep.subr.mxu0 0.0
        %999 = vmatpush2.msra.mxu0 0.0
        %1000 = vmatprep.subr.mxu0 0.0
        %1001 = vmatpush2.msra.mxu0 0.0
        %1002 = vmatprep.subr.mxu0 0.0
        %1003 = vmatpush2.msra.mxu0 0.0
        %1004 = vmatprep.subr.mxu0 0.0
        %1005 = vmatpush2.msra.mxu0 0.0
        %1006 = vmatprep.subr.mxu0 0.0
        %1007 = vmatpush2.msra.mxu0 0.0
        %1008 = vmatprep.subr.mxu0 0.0
        %1009 = vmatpush2.msra.mxu0 0.0
        %1010 = vmatprep.subr.mxu0 0.0
        %1011 = vmatpush2.msra.mxu0 0.0
        %1012 = vmatprep.subr.mxu0 0.0
        %1013 = vmatpush2.msra.mxu0 0.0
        %1014 = vmatprep.subr.mxu0 0.0
        %1015 = vmatpush2.msra.mxu0 0.0
        %1016 = vmatprep.subr.mxu0 0.0
        %1017 = vmatpush2.msra.mxu0 0.0
        %1018 = vmatprep.subr.mxu0 0.0
        %1019 = vmatpush2.msra.mxu0 0.0
        %1020 = vmatprep.mubr.f32.mxu0 0.0
        %1021 = vmatmul.mubr.f32.gmra.mxu0 %v950
        %v1022 = vpop.f32.mrf.mxu0
        %v1023 = vadd.f32 0.0, %v1022
        %v1024 = vpop.f32.mrf.mxu0
        %1025 = vdwg.mxu0
        %v1026 = vmax.f32 %v778, %v857
        %v1027 = vsub.f32 %v778, %v1026
        %v1028 = vmul.f32 %v1027, 1.442695
        %v1029 = vpow.pop %v1028
        %v1030 = vsub.f32 %v857, %v1026
        %v1031 = vmul.f32 %v1030, 1.442695
        %v1032 = vpow.pop %v1031
        %v1033 = vadd.f32 %v1029, %v1032
        %v1034 = vrcp.pop %v1033
        %v1035 = vmul.f32 %v1029, %v1034
        %v1036 = vmul.f32 %v1032, %v1034
        %1037 = vrot.lane.b32.xlu0 %v467, 112
        %v1038 = vpop.permute.xlu0 %1037
        %1040 = vrot.lane.b32.xlu0 %v467, 80
        %v1041 = vpop.permute.xlu0 %1040
        %v1043 = vsel %vm687, %v1038, %v678
        %v1044 = vsel %vm704, %v1043, %v684
        %vm1045 = vcmask 785408
        %v1046 = vsel %vm1045, %v1044, %v1041
        %1047 = vrot.lane.b32.xlu0 %v394, 112
        %v1048 = vpop.permute.xlu0 %1047
        %1050 = vrot.lane.b32.xlu0 %v394, 80
        %v1051 = vpop.permute.xlu0 %1050
        %v1053 = vsel %vm687, %v1048, %v692
        %v1054 = vsel %vm704, %v1053, %v698
        %v1055 = vsel %vm1045, %v1054, %v1051
        %v1057 = vsel %vm949, %v1035, 0
        %1059 = vmatprep.subr.mxu0 0.0
        %1060 = vmatpush1.msra.mxu0 0.0
        %1061 = vmatprep.subr.mxu0 0.0
        %1062 = vmatpush1.msra.mxu0 0.0
        %1063 = vmatprep.subr.mxu0 0.0
        %1064 = vmatpush1.msra.mxu0 0.0
        %1065 = vmatprep.subr.mxu0 0.0
        %1066 = vmatpush1.msra.mxu0 0.0
        %1067 = vmatprep.subr.mxu0 0.0
        %1068 = vmatpush1.msra.mxu0 0.0
        %1069 = vmatprep.subr.mxu0 0.0
        %1070 = vmatpush1.msra.mxu0 0.0
        %1071 = vmatprep.subr.mxu0 0.0
        %1072 = vmatpush1.msra.mxu0 0.0
        %1073 = vmatprep.subr.mxu0 0.0
        %1074 = vmatpush1.msra.mxu0 0.0
        %1075 = vmatprep.subr.mxu0 0.0
        %1076 = vmatpush1.msra.mxu0 0.0
        %1077 = vmatprep.subr.mxu0 0.0
        %1078 = vmatpush1.msra.mxu0 0.0
        %1079 = vmatprep.subr.mxu0 0.0
        %1080 = vmatpush1.msra.mxu0 0.0
        %1081 = vmatprep.subr.mxu0 0.0
        %1082 = vmatpush1.msra.mxu0 0.0
        %1083 = vmatprep.subr.mxu0 0.0
        %1084 = vmatpush1.msra.mxu0 0.0
        %1085 = vmatprep.subr.mxu0 0.0
        %1086 = vmatpush1.msra.mxu0 0.0
        %1087 = vmatprep.subr.mxu0 0.0
        %1088 = vmatpush1.msra.mxu0 0.0
        %1089 = vmatprep.subr.mxu0 0.0
        %1090 = vmatpush1.msra.mxu0 %v954
        %1091 = vmatprep.subr.mxu0 0.0
        %1092 = vmatpush2.msra.mxu0 0.0
        %1093 = vmatprep.subr.mxu0 0.0
        %1094 = vmatpush2.msra.mxu0 0.0
        %1095 = vmatprep.subr.mxu0 0.0
        %1096 = vmatpush2.msra.mxu0 0.0
        %1097 = vmatprep.subr.mxu0 0.0
        %1098 = vmatpush2.msra.mxu0 0.0
        %1099 = vmatprep.subr.mxu0 0.0
        %1100 = vmatpush2.msra.mxu0 0.0
        %1101 = vmatprep.subr.mxu0 0.0
        %1102 = vmatpush2.msra.mxu0 0.0
        %1103 = vmatprep.subr.mxu0 0.0
        %1104 = vmatpush2.msra.mxu0 0.0
        %1105 = vmatprep.subr.mxu0 0.0
        %1106 = vmatpush2.msra.mxu0 0.0
        %1107 = vmatprep.subr.mxu0 0.0
        %1108 = vmatpush2.msra.mxu0 0.0
        %1109 = vmatprep.subr.mxu0 0.0
        %1110 = vmatpush2.msra.mxu0 0.0
        %1111 = vmatprep.subr.mxu0 0.0
        %1112 = vmatpush2.msra.mxu0 0.0
        %1113 = vmatprep.subr.mxu0 0.0
        %1114 = vmatpush2.msra.mxu0 0.0
        %1115 = vmatprep.subr.mxu0 0.0
        %1116 = vmatpush2.msra.mxu0 0.0
        %1117 = vmatprep.subr.mxu0 0.0
        %1118 = vmatpush2.msra.mxu0 0.0
        %1119 = vmatprep.subr.mxu0 0.0
        %1120 = vmatpush2.msra.mxu0 0.0
        %1121 = vmatprep.subr.mxu0 0.0
        %1122 = vmatpush2.msra.mxu0 0.0
        %1123 = vmatprep.mubr.f32.mxu0 0.0
        %1124 = vmatmul.mubr.f32.gmra.mxu0 %v1057
        %v1125 = vpop.f32.mrf.mxu0
        %v1126 = vadd.f32 0.0, %v1125
        %v1127 = vpop.f32.mrf.mxu0
        %1128 = vdwg.mxu0
        %v1130 = vsel %vm949, %v1036, 0
        %1132 = vmatprep.subr.mxu0 0.0
        %1133 = vmatpush1.msra.mxu0 0.0
        %1134 = vmatprep.subr.mxu0 0.0
        %1135 = vmatpush1.msra.mxu0 0.0
        %1136 = vmatprep.subr.mxu0 0.0
        %1137 = vmatpush1.msra.mxu0 0.0
        %1138 = vmatprep.subr.mxu0 0.0
        %1139 = vmatpush1.msra.mxu0 0.0
        %1140 = vmatprep.subr.mxu0 0.0
        %1141 = vmatpush1.msra.mxu0 0.0
        %1142 = vmatprep.subr.mxu0 0.0
        %1143 = vmatpush1.msra.mxu0 0.0
        %1144 = vmatprep.subr.mxu0 0.0
        %1145 = vmatpush1.msra.mxu0 0.0
        %1146 = vmatprep.subr.mxu0 0.0
        %1147 = vmatpush1.msra.mxu0 0.0
        %1148 = vmatprep.subr.mxu0 0.0
        %1149 = vmatpush1.msra.mxu0 0.0
        %1150 = vmatprep.subr.mxu0 0.0
        %1151 = vmatpush1.msra.mxu0 0.0
        %1152 = vmatprep.subr.mxu0 0.0
        %1153 = vmatpush1.msra.mxu0 0.0
        %1154 = vmatprep.subr.mxu0 0.0
        %1155 = vmatpush1.msra.mxu0 0.0
        %1156 = vmatprep.subr.mxu0 0.0
        %1157 = vmatpush1.msra.mxu0 0.0
        %1158 = vmatprep.subr.mxu0 0.0
        %1159 = vmatpush1.msra.mxu0 0.0
        %1160 = vmatprep.subr.mxu0 0.0
        %1161 = vmatpush1.msra.mxu0 0.0
        %1162 = vmatprep.subr.mxu0 0.0
        %1163 = vmatpush1.msra.mxu0 %v954
        %1164 = vmatprep.subr.mxu0 0.0
        %1165 = vmatpush2.msra.mxu0 0.0
        %1166 = vmatprep.subr.mxu0 0.0
        %1167 = vmatpush2.msra.mxu0 0.0
        %1168 = vmatprep.subr.mxu0 0.0
        %1169 = vmatpush2.msra.mxu0 0.0
        %1170 = vmatprep.subr.mxu0 0.0
        %1171 = vmatpush2.msra.mxu0 0.0
        %1172 = vmatprep.subr.mxu0 0.0
        %1173 = vmatpush2.msra.mxu0 0.0
        %1174 = vmatprep.subr.mxu0 0.0
        %1175 = vmatpush2.msra.mxu0 0.0
        %1176 = vmatprep.subr.mxu0 0.0
        %1177 = vmatpush2.msra.mxu0 0.0
        %1178 = vmatprep.subr.mxu0 0.0
        %1179 = vmatpush2.msra.mxu0 0.0
        %1180 = vmatprep.subr.mxu0 0.0
        %1181 = vmatpush2.msra.mxu0 0.0
        %1182 = vmatprep.subr.mxu0 0.0
        %1183 = vmatpush2.msra.mxu0 0.0
        %1184 = vmatprep.subr.mxu0 0.0
        %1185 = vmatpush2.msra.mxu0 0.0
        %1186 = vmatprep.subr.mxu0 0.0
        %1187 = vmatpush2.msra.mxu0 0.0
        %1188 = vmatprep.subr.mxu0 0.0
        %1189 = vmatpush2.msra.mxu0 0.0
        %1190 = vmatprep.subr.mxu0 0.0
        %1191 = vmatpush2.msra.mxu0 0.0
        %1192 = vmatprep.subr.mxu0 0.0
        %1193 = vmatpush2.msra.mxu0 0.0
        %1194 = vmatprep.subr.mxu0 0.0
        %1195 = vmatpush2.msra.mxu0 0.0
        %1196 = vmatprep.mubr.f32.mxu0 0.0
        %1197 = vmatmul.mubr.f32.gmra.mxu0 %v1130
        %v1198 = vpop.f32.mrf.mxu0
        %v1199 = vadd.f32 0.0, %v1198
        %v1200 = vpop.f32.mrf.mxu0
        %1201 = vdwg.mxu0
        %v1202 = vmul.f32 %v1126, %v1046
        %v1203 = vlaneseq
        %v1204 = vshrl.u32 %v1203, 7
        %v1205 = vsub.s32 0, %v1204
        %v1206 = vrot.slane %v1055, %v1205
        %v1207 = vmul.f32 %v1199, %v1206
        %v1208 = vadd.f32 %v1202, %v1207
        %v1209 = vmul.f32 %v1208, %v1023
        %v1210 = vld [vmem:[%s5] sm:$0xff]
        %v1211 = vld [vmem:[%s5 + $0x8] sm:$0xff]
        %v1212 = vld [vmem:[%s5 + $0x10] sm:$0xff]
        %v1213 = vld [vmem:[%s5 + $0x18] sm:$0xff]
        %v1214 = vld [vmem:[%s5 + $0x20] sm:$0xff]
        %v1215 = vld [vmem:[%s5 + $0x28] sm:$0xff]
        %v1216 = vld [vmem:[%s5 + $0x30] sm:$0xff]
        %v1217 = vld [vmem:[%s5 + $0x38] sm:$0xff]
        %v1218 = vld [vmem:[%s5 + $0x40] sm:$0xff]
        %v1219 = vld [vmem:[%s5 + $0x48] sm:$0xff]
        %v1220 = vld [vmem:[%s5 + $0x50] sm:$0xff]
        %v1221 = vld [vmem:[%s5 + $0x58] sm:$0xff]
        %v1222 = vld [vmem:[%s5 + $0x60] sm:$0xff]
        %v1223 = vld [vmem:[%s5 + $0x68] sm:$0xff]
        %v1224 = vld [vmem:[%s5 + $0x70] sm:$0xff]
        %v1225 = vld [vmem:[%s5 + $0x78] sm:$0xff]
        %v1226 = vld [vmem:[%s5 + $0x80] sm:$0xff]
        %v1227 = vld [vmem:[%s5 + $0x88] sm:$0xff]
        %v1228 = vld [vmem:[%s5 + $0x90] sm:$0xff]
        %v1229 = vld [vmem:[%s5 + $0x98] sm:$0xff]
        %v1230 = vld [vmem:[%s5 + $0xa0] sm:$0xff]
        %v1231 = vld [vmem:[%s5 + $0xa8] sm:$0xff]
        %v1232 = vld [vmem:[%s5 + $0xb0] sm:$0xff]
        %v1233 = vld [vmem:[%s5 + $0xb8] sm:$0xff]
        %v1234 = vld [vmem:[%s5 + $0xc0] sm:$0xff]
        %v1235 = vld [vmem:[%s5 + $0xc8] sm:$0xff]
        %v1236 = vld [vmem:[%s5 + $0xd0] sm:$0xff]
        %v1237 = vld [vmem:[%s5 + $0xd8] sm:$0xff]
        %v1238 = vld [vmem:[%s5 + $0xe0] sm:$0xff]
        %v1239 = vld [vmem:[%s5 + $0xe8] sm:$0xff]
        %v1240 = vld [vmem:[%s5 + $0xf0] sm:$0xff]
        %v1241 = vld [vmem:[%s5 + $0xf8] sm:$0xff]
        %v1242 = vld [vmem:[%s5 + $0x100] sm:$0xff]
        %v1243 = vld [vmem:[%s5 + $0x108] sm:$0xff]
        %v1244 = vld [vmem:[%s5 + $0x110] sm:$0xff]
        %v1245 = vld [vmem:[%s5 + $0x118] sm:$0xff]
        %v1246 = vld [vmem:[%s5 + $0x120] sm:$0xff]
        %v1247 = vld [vmem:[%s5 + $0x128] sm:$0xff]
        %v1248 = vld [vmem:[%s5 + $0x130] sm:$0xff]
        %v1249 = vld [vmem:[%s5 + $0x138] sm:$0xff]
        %v1250 = vld [vmem:[%s5 + $0x140] sm:$0xff]
        %v1251 = vld [vmem:[%s5 + $0x148] sm:$0xff]
        %v1252 = vld [vmem:[%s5 + $0x150] sm:$0xff]
        %v1253 = vld [vmem:[%s5 + $0x158] sm:$0xff]
        %v1254 = vld [vmem:[%s5 + $0x160] sm:$0xff]
        %v1255 = vld [vmem:[%s5 + $0x168] sm:$0xff]
        %v1256 = vld [vmem:[%s5 + $0x170] sm:$0xff]
        %v1257 = vld [vmem:[%s5 + $0x178] sm:$0xff]
        %1258 = vmatprep.subr.mxu0 %v1256
        %1259 = vmatpush1.msra.mxu0 %v1255
        %1260 = vmatprep.subr.mxu0 %v1253
        %1261 = vmatpush1.msra.mxu0 %v1252
        %1262 = vmatprep.subr.mxu0 %v1250
        %1263 = vmatpush1.msra.mxu0 %v1249
        %1264 = vmatprep.subr.mxu0 %v1247
        %1265 = vmatpush1.msra.mxu0 %v1246
        %1266 = vmatprep.subr.mxu0 %v1244
        %1267 = vmatpush1.msra.mxu0 %v1243
        %1268 = vmatprep.subr.mxu0 %v1241
        %1269 = vmatpush1.msra.mxu0 %v1240
        %1270 = vmatprep.subr.mxu0 %v1238
        %1271 = vmatpush1.msra.mxu0 %v1237
        %1272 = vmatprep.subr.mxu0 %v1235
        %1273 = vmatpush1.msra.mxu0 %v1234
        %1274 = vmatprep.subr.mxu0 %v1232
        %1275 = vmatpush1.msra.mxu0 %v1231
        %1276 = vmatprep.subr.mxu0 %v1229
        %1277 = vmatpush1.msra.mxu0 %v1228
        %1278 = vmatprep.subr.mxu0 %v1226
        %1279 = vmatpush1.msra.mxu0 %v1225
        %1280 = vmatprep.subr.mxu0 %v1223
        %1281 = vmatpush1.msra.mxu0 %v1222
        %1282 = vmatprep.subr.mxu0 %v1220
        %1283 = vmatpush1.msra.mxu0 %v1219
        %1284 = vmatprep.subr.mxu0 %v1217
        %1285 = vmatpush1.msra.mxu0 %v1216
        %1286 = vmatprep.subr.mxu0 %v1214
        %1287 = vmatpush1.msra.mxu0 %v1213
        %1288 = vmatprep.subr.mxu0 %v1211
        %1289 = vmatpush1.msra.mxu0 %v1210
        %1290 = vmatprep.subr.mxu0 0.0
        %1291 = vmatpush2.msra.mxu0 0.0
        %1292 = vmatprep.subr.mxu0 0.0
        %1293 = vmatpush2.msra.mxu0 0.0
        %1294 = vmatprep.subr.mxu0 0.0
        %1295 = vmatpush2.msra.mxu0 0.0
        %1296 = vmatprep.subr.mxu0 0.0
        %1297 = vmatpush2.msra.mxu0 0.0
        %1298 = vmatprep.subr.mxu0 0.0
        %1299 = vmatpush2.msra.mxu0 0.0
        %1300 = vmatprep.subr.mxu0 0.0
        %1301 = vmatpush2.msra.mxu0 0.0
        %1302 = vmatprep.subr.mxu0 0.0
        %1303 = vmatpush2.msra.mxu0 0.0
        %1304 = vmatprep.subr.mxu0 0.0
        %1305 = vmatpush2.msra.mxu0 0.0
        %1306 = vmatprep.subr.mxu0 0.0
        %1307 = vmatpush2.msra.mxu0 0.0
        %1308 = vmatprep.subr.mxu0 0.0
        %1309 = vmatpush2.msra.mxu0 0.0
        %1310 = vmatprep.subr.mxu0 0.0
        %1311 = vmatpush2.msra.mxu0 0.0
        %1312 = vmatprep.subr.mxu0 0.0
        %1313 = vmatpush2.msra.mxu0 0.0
        %1314 = vmatprep.subr.mxu0 0.0
        %1315 = vmatpush2.msra.mxu0 0.0
        %1316 = vmatprep.subr.mxu0 0.0
        %1317 = vmatpush2.msra.mxu0 0.0
        %1318 = vmatprep.subr.mxu0 0.0
        %1319 = vmatpush2.msra.mxu0 0.0
        %1320 = vmatprep.subr.mxu0 0.0
        %1321 = vmatpush2.msra.mxu0 0.0
        %1322 = vmatprep.mubr.f32.mxu0 0.0
        %1323 = vmatmul.mubr.f32.gmra.mxu0 %v1209
        %v1324 = vpop.f32.mrf.mxu0
        %v1325 = vadd.f32 0.0, %v1324
        %v1326 = vpop.f32.mrf.mxu0
        %v1327 = vadd.f32 0.0, %v1326
        %1328 = vdwg.mxu0
        %1329 = vmatprep.subr.mxu0 0.0
        %1330 = vmatpush1.msra.mxu0 %v1257
        %1331 = vmatprep.subr.mxu0 0.0
        %1332 = vmatpush1.msra.mxu0 %v1254
        %1333 = vmatprep.subr.mxu0 0.0
        %1334 = vmatpush1.msra.mxu0 %v1251
        %1335 = vmatprep.subr.mxu0 0.0
        %1336 = vmatpush1.msra.mxu0 %v1248
        %1337 = vmatprep.subr.mxu0 0.0
        %1338 = vmatpush1.msra.mxu0 %v1245
        %1339 = vmatprep.subr.mxu0 0.0
        %1340 = vmatpush1.msra.mxu0 %v1242
        %1341 = vmatprep.subr.mxu0 0.0
        %1342 = vmatpush1.msra.mxu0 %v1239
        %1343 = vmatprep.subr.mxu0 0.0
        %1344 = vmatpush1.msra.mxu0 %v1236
        %1345 = vmatprep.subr.mxu0 0.0
        %1346 = vmatpush1.msra.mxu0 %v1233
        %1347 = vmatprep.subr.mxu0 0.0
        %1348 = vmatpush1.msra.mxu0 %v1230
        %1349 = vmatprep.subr.mxu0 0.0
        %1350 = vmatpush1.msra.mxu0 %v1227
        %1351 = vmatprep.subr.mxu0 0.0
        %1352 = vmatpush1.msra.mxu0 %v1224
        %1353 = vmatprep.subr.mxu0 0.0
        %1354 = vmatpush1.msra.mxu0 %v1221
        %1355 = vmatprep.subr.mxu0 0.0
        %1356 = vmatpush1.msra.mxu0 %v1218
        %1357 = vmatprep.subr.mxu0 0.0
        %1358 = vmatpush1.msra.mxu0 %v1215
        %1359 = vmatprep.subr.mxu0 0.0
        %1360 = vmatpush1.msra.mxu0 %v1212
        %1361 = vmatprep.subr.mxu0 0.0
        %1362 = vmatpush2.msra.mxu0 0.0
        %1363 = vmatprep.subr.mxu0 0.0
        %1364 = vmatpush2.msra.mxu0 0.0
        %1365 = vmatprep.subr.mxu0 0.0
        %1366 = vmatpush2.msra.mxu0 0.0
        %1367 = vmatprep.subr.mxu0 0.0
        %1368 = vmatpush2.msra.mxu0 0.0
        %1369 = vmatprep.subr.mxu0 0.0
        %1370 = vmatpush2.msra.mxu0 0.0
        %1371 = vmatprep.subr.mxu0 0.0
        %1372 = vmatpush2.msra.mxu0 0.0
        %1373 = vmatprep.subr.mxu0 0.0
        %1374 = vmatpush2.msra.mxu0 0.0
        %1375 = vmatprep.subr.mxu0 0.0
        %1376 = vmatpush2.msra.mxu0 0.0
        %1377 = vmatprep.subr.mxu0 0.0
        %1378 = vmatpush2.msra.mxu0 0.0
        %1379 = vmatprep.subr.mxu0 0.0
        %1380 = vmatpush2.msra.mxu0 0.0
        %1381 = vmatprep.subr.mxu0 0.0
        %1382 = vmatpush2.msra.mxu0 0.0
        %1383 = vmatprep.subr.mxu0 0.0
        %1384 = vmatpush2.msra.mxu0 0.0
        %1385 = vmatprep.subr.mxu0 0.0
        %1386 = vmatpush2.msra.mxu0 0.0
        %1387 = vmatprep.subr.mxu0 0.0
        %1388 = vmatpush2.msra.mxu0 0.0
        %1389 = vmatprep.subr.mxu0 0.0
        %1390 = vmatpush2.msra.mxu0 0.0
        %1391 = vmatprep.subr.mxu0 0.0
        %1392 = vmatpush2.msra.mxu0 0.0
        %1393 = vmatprep.mubr.f32.mxu0 0.0
        %1394 = vmatmul.mubr.f32.gmra.mxu0 %v1209
        %v1395 = vpop.f32.mrf.mxu0
        %v1396 = vadd.f32 0.0, %v1395
        %v1397 = vpop.f32.mrf.mxu0
        %1398 = vdwg.mxu0
        %1401 = vrot.lane.b32.xlu0 %v601, 64
        %v1402 = vpop.permute.xlu0 %1401
        %1403 = vrot.lane.b32.xlu0 %v603, 64
        %v1404 = vpop.permute.xlu0 %1403
        %v1405 = vsel %vm704, %v1402, %v1404
        %v1407 = vadd.f32 %v1325, %v1405
        %v1408 = vxor.u32 %v1407, 2147483648
        %v1409 = vmul.f32 %v1408, 1.442695
        %v1410 = vpow.pop %v1409
        %v1411 = vadd.f32 %v1410, 1.0
        %v1412 = vrcp.pop %v1411
        %v1413 = vmul.f32 1.0, %v1412
        %1415 = vrot.lane.b32.xlu0 %v672, 64
        %v1416 = vpop.permute.xlu0 %1415
        %v1417 = vsel %vm704, %v1404, %v1416
        %v1419 = vadd.f32 %v1327, %v1417
        %v1420 = vxor.u32 %v1419, 2147483648
        %v1421 = vmul.f32 %v1420, 1.442695
        %v1422 = vpow.pop %v1421
        %v1423 = vadd.f32 %v1422, 1.0
        %v1424 = vrcp.pop %v1423
        %v1425 = vmul.f32 1.0, %v1424
        %1427 = vrot.lane.b32.xlu0 %v674, 64
        %v1428 = vpop.permute.xlu0 %1427
        %v1429 = vsel %vm704, %v1416, %v1428
        %v1431 = vmul.f32 %v1413, %v1429
        %v1432 = vadd.f32 %v1396, %v1431
        %v1433 = vtanh.pop %v1432
        %v1434 = vsub.f32 %v376, %v1433
        %v1435 = vmul.f32 %v1425, %v1434
        %v1436 = vadd.f32 %v1433, %v1435
        %v1437 = vld [vmem:[%s6] sm:$0xff]
        %v1438 = vld [vmem:[%s6 + $0x8] sm:$0xff]
        %v1439 = vld [vmem:[%s6 + $0x10] sm:$0xff]
        %v1440 = vld [vmem:[%s6 + $0x18] sm:$0xff]
        %v1441 = vld [vmem:[%s6 + $0x20] sm:$0xff]
        %v1442 = vld [vmem:[%s6 + $0x28] sm:$0xff]
        %v1443 = vld [vmem:[%s6 + $0x30] sm:$0xff]
        %v1444 = vld [vmem:[%s6 + $0x38] sm:$0xff]
        %v1445 = vld [vmem:[%s6 + $0x40] sm:$0xff]
        %v1446 = vld [vmem:[%s6 + $0x48] sm:$0xff]
        %v1447 = vld [vmem:[%s6 + $0x50] sm:$0xff]
        %v1448 = vld [vmem:[%s6 + $0x58] sm:$0xff]
        %v1449 = vld [vmem:[%s6 + $0x60] sm:$0xff]
        %v1450 = vld [vmem:[%s6 + $0x68] sm:$0xff]
        %v1451 = vld [vmem:[%s6 + $0x70] sm:$0xff]
        %v1452 = vld [vmem:[%s6 + $0x78] sm:$0xff]
        %v1453 = vld [vmem:[%s6 + $0x80] sm:$0xff]
        %v1454 = vld [vmem:[%s6 + $0x88] sm:$0xff]
        %v1455 = vld [vmem:[%s6 + $0x90] sm:$0xff]
        %v1456 = vld [vmem:[%s6 + $0x98] sm:$0xff]
        %v1457 = vld [vmem:[%s6 + $0xa0] sm:$0xff]
        %v1458 = vld [vmem:[%s6 + $0xa8] sm:$0xff]
        %v1459 = vld [vmem:[%s6 + $0xb0] sm:$0xff]
        %v1460 = vld [vmem:[%s6 + $0xb8] sm:$0xff]
        %v1461 = vld [vmem:[%s6 + $0xc0] sm:$0xff]
        %v1462 = vld [vmem:[%s6 + $0xc8] sm:$0xff]
        %v1463 = vld [vmem:[%s6 + $0xd0] sm:$0xff]
        %v1464 = vld [vmem:[%s6 + $0xd8] sm:$0xff]
        %v1465 = vld [vmem:[%s6 + $0xe0] sm:$0xff]
        %v1466 = vld [vmem:[%s6 + $0xe8] sm:$0xff]
        %v1467 = vld [vmem:[%s6 + $0xf0] sm:$0xff]
        %v1468 = vld [vmem:[%s6 + $0xf8] sm:$0xff]
        %v1469 = vld [vmem:[%s6 + $0x100] sm:$0xff]
        %v1470 = vld [vmem:[%s6 + $0x108] sm:$0xff]
        %v1471 = vld [vmem:[%s6 + $0x110] sm:$0xff]
        %v1472 = vld [vmem:[%s6 + $0x118] sm:$0xff]
        %v1473 = vld [vmem:[%s6 + $0x120] sm:$0xff]
        %v1474 = vld [vmem:[%s6 + $0x128] sm:$0xff]
        %v1475 = vld [vmem:[%s6 + $0x130] sm:$0xff]
        %v1476 = vld [vmem:[%s6 + $0x138] sm:$0xff]
        %v1477 = vld [vmem:[%s6 + $0x140] sm:$0xff]
        %v1478 = vld [vmem:[%s6 + $0x148] sm:$0xff]
        %v1479 = vld [vmem:[%s6 + $0x150] sm:$0xff]
        %v1480 = vld [vmem:[%s6 + $0x158] sm:$0xff]
        %v1481 = vld [vmem:[%s6 + $0x160] sm:$0xff]
        %v1482 = vld [vmem:[%s6 + $0x168] sm:$0xff]
        %v1483 = vld [vmem:[%s6 + $0x170] sm:$0xff]
        %v1484 = vld [vmem:[%s6 + $0x178] sm:$0xff]
        %v1485 = vld [vmem:[%s6 + $0x180] sm:$0xff]
        %v1486 = vld [vmem:[%s6 + $0x188] sm:$0xff]
        %v1487 = vld [vmem:[%s6 + $0x190] sm:$0xff]
        %v1488 = vld [vmem:[%s6 + $0x198] sm:$0xff]
        %v1489 = vld [vmem:[%s6 + $0x1a0] sm:$0xff]
        %v1490 = vld [vmem:[%s6 + $0x1a8] sm:$0xff]
        %v1491 = vld [vmem:[%s6 + $0x1b0] sm:$0xff]
        %v1492 = vld [vmem:[%s6 + $0x1b8] sm:$0xff]
        %v1493 = vld [vmem:[%s6 + $0x1c0] sm:$0xff]
        %v1494 = vld [vmem:[%s6 + $0x1c8] sm:$0xff]
        %v1495 = vld [vmem:[%s6 + $0x1d0] sm:$0xff]
        %v1496 = vld [vmem:[%s6 + $0x1d8] sm:$0xff]
        %v1497 = vld [vmem:[%s6 + $0x1e0] sm:$0xff]
        %v1498 = vld [vmem:[%s6 + $0x1e8] sm:$0xff]
        %v1499 = vld [vmem:[%s6 + $0x1f0] sm:$0xff]
        %v1500 = vld [vmem:[%s6 + $0x1f8] sm:$0xff]
        %1501 = vmatprep.subr.mxu0 %v1498
        %1502 = vmatpush1.msra.mxu0 %v1497
        %1503 = vmatprep.subr.mxu0 %v1494
        %1504 = vmatpush1.msra.mxu0 %v1493
        %1505 = vmatprep.subr.mxu0 %v1490
        %1506 = vmatpush1.msra.mxu0 %v1489
        %1507 = vmatprep.subr.mxu0 %v1486
        %1508 = vmatpush1.msra.mxu0 %v1485
        %1509 = vmatprep.subr.mxu0 %v1482
        %1510 = vmatpush1.msra.mxu0 %v1481
        %1511 = vmatprep.subr.mxu0 %v1478
        %1512 = vmatpush1.msra.mxu0 %v1477
        %1513 = vmatprep.subr.mxu0 %v1474
        %1514 = vmatpush1.msra.mxu0 %v1473
        %1515 = vmatprep.subr.mxu0 %v1470
        %1516 = vmatpush1.msra.mxu0 %v1469
        %1517 = vmatprep.subr.mxu0 %v1466
        %1518 = vmatpush1.msra.mxu0 %v1465
        %1519 = vmatprep.subr.mxu0 %v1462
        %1520 = vmatpush1.msra.mxu0 %v1461
        %1521 = vmatprep.subr.mxu0 %v1458
        %1522 = vmatpush1.msra.mxu0 %v1457
        %1523 = vmatprep.subr.mxu0 %v1454
        %1524 = vmatpush1.msra.mxu0 %v1453
        %1525 = vmatprep.subr.mxu0 %v1450
        %1526 = vmatpush1.msra.mxu0 %v1449
        %1527 = vmatprep.subr.mxu0 %v1446
        %1528 = vmatpush1.msra.mxu0 %v1445
        %1529 = vmatprep.subr.mxu0 %v1442
        %1530 = vmatpush1.msra.mxu0 %v1441
        %1531 = vmatprep.subr.mxu0 %v1438
        %1532 = vmatpush1.msra.mxu0 %v1437
        %1533 = vmatprep.subr.mxu0 0.0
        %1534 = vmatpush2.msra.mxu0 0.0
        %1535 = vmatprep.subr.mxu0 0.0
        %1536 = vmatpush2.msra.mxu0 0.0
        %1537 = vmatprep.subr.mxu0 0.0
        %1538 = vmatpush2.msra.mxu0 0.0
        %1539 = vmatprep.subr.mxu0 0.0
        %1540 = vmatpush2.msra.mxu0 0.0
        %1541 = vmatprep.subr.mxu0 0.0
        %1542 = vmatpush2.msra.mxu0 0.0
        %1543 = vmatprep.subr.mxu0 0.0
        %1544 = vmatpush2.msra.mxu0 0.0
        %1545 = vmatprep.subr.mxu0 0.0
        %1546 = vmatpush2.msra.mxu0 0.0
        %1547 = vmatprep.subr.mxu0 0.0
        %1548 = vmatpush2.msra.mxu0 0.0
        %1549 = vmatprep.subr.mxu0 0.0
        %1550 = vmatpush2.msra.mxu0 0.0
        %1551 = vmatprep.subr.mxu0 0.0
        %1552 = vmatpush2.msra.mxu0 0.0
        %1553 = vmatprep.subr.mxu0 0.0
        %1554 = vmatpush2.msra.mxu0 0.0
        %1555 = vmatprep.subr.mxu0 0.0
        %1556 = vmatpush2.msra.mxu0 0.0
        %1557 = vmatprep.subr.mxu0 0.0
        %1558 = vmatpush2.msra.mxu0 0.0
        %1559 = vmatprep.subr.mxu0 0.0
        %1560 = vmatpush2.msra.mxu0 0.0
        %1561 = vmatprep.subr.mxu0 0.0
        %1562 = vmatpush2.msra.mxu0 0.0
        %1563 = vmatprep.subr.mxu0 0.0
        %1564 = vmatpush2.msra.mxu0 0.0
        %1565 = vmatprep.mubr.f32.mxu0 0.0
        %1566 = vmatmul.mubr.f32.gmra.mxu0 %v1436
        %v1567 = vpop.f32.mrf.mxu0
        %v1568 = vadd.f32 0.0, %v1567
        %v1569 = vpop.f32.mrf.mxu0
        %v1570 = vadd.f32 0.0, %v1569
        %1571 = vdwg.mxu0
        %1572 = vmatprep.subr.mxu0 %v1500
        %1573 = vmatpush1.msra.mxu0 %v1499
        %1574 = vmatprep.subr.mxu0 %v1496
        %1575 = vmatpush1.msra.mxu0 %v1495
        %1576 = vmatprep.subr.mxu0 %v1492
        %1577 = vmatpush1.msra.mxu0 %v1491
        %1578 = vmatprep.subr.mxu0 %v1488
        %1579 = vmatpush1.msra.mxu0 %v1487
        %1580 = vmatprep.subr.mxu0 %v1484
        %1581 = vmatpush1.msra.mxu0 %v1483
        %1582 = vmatprep.subr.mxu0 %v1480
        %1583 = vmatpush1.msra.mxu0 %v1479
        %1584 = vmatprep.subr.mxu0 %v1476
        %1585 = vmatpush1.msra.mxu0 %v1475
        %1586 = vmatprep.subr.mxu0 %v1472
        %1587 = vmatpush1.msra.mxu0 %v1471
        %1588 = vmatprep.subr.mxu0 %v1468
        %1589 = vmatpush1.msra.mxu0 %v1467
        %1590 = vmatprep.subr.mxu0 %v1464
        %1591 = vmatpush1.msra.mxu0 %v1463
        %1592 = vmatprep.subr.mxu0 %v1460
        %1593 = vmatpush1.msra.mxu0 %v1459
        %1594 = vmatprep.subr.mxu0 %v1456
        %1595 = vmatpush1.msra.mxu0 %v1455
        %1596 = vmatprep.subr.mxu0 %v1452
        %1597 = vmatpush1.msra.mxu0 %v1451
        %1598 = vmatprep.subr.mxu0 %v1448
        %1599 = vmatpush1.msra.mxu0 %v1447
        %1600 = vmatprep.subr.mxu0 %v1444
        %1601 = vmatpush1.msra.mxu0 %v1443
        %1602 = vmatprep.subr.mxu0 %v1440
        %1603 = vmatpush1.msra.mxu0 %v1439
        %1604 = vmatprep.subr.mxu0 0.0
        %1605 = vmatpush2.msra.mxu0 0.0
        %1606 = vmatprep.subr.mxu0 0.0
        %1607 = vmatpush2.msra.mxu0 0.0
        %1608 = vmatprep.subr.mxu0 0.0
        %1609 = vmatpush2.msra.mxu0 0.0
        %1610 = vmatprep.subr.mxu0 0.0
        %1611 = vmatpush2.msra.mxu0 0.0
        %1612 = vmatprep.subr.mxu0 0.0
        %1613 = vmatpush2.msra.mxu0 0.0
        %1614 = vmatprep.subr.mxu0 0.0
        %1615 = vmatpush2.msra.mxu0 0.0
        %1616 = vmatprep.subr.mxu0 0.0
        %1617 = vmatpush2.msra.mxu0 0.0
        %1618 = vmatprep.subr.mxu0 0.0
        %1619 = vmatpush2.msra.mxu0 0.0
        %1620 = vmatprep.subr.mxu0 0.0
        %1621 = vmatpush2.msra.mxu0 0.0
        %1622 = vmatprep.subr.mxu0 0.0
        %1623 = vmatpush2.msra.mxu0 0.0
        %1624 = vmatprep.subr.mxu0 0.0
        %1625 = vmatpush2.msra.mxu0 0.0
        %1626 = vmatprep.subr.mxu0 0.0
        %1627 = vmatpush2.msra.mxu0 0.0
        %1628 = vmatprep.subr.mxu0 0.0
        %1629 = vmatpush2.msra.mxu0 0.0
        %1630 = vmatprep.subr.mxu0 0.0
        %1631 = vmatpush2.msra.mxu0 0.0
        %1632 = vmatprep.subr.mxu0 0.0
        %1633 = vmatpush2.msra.mxu0 0.0
        %1634 = vmatprep.subr.mxu0 0.0
        %1635 = vmatpush2.msra.mxu0 0.0
        %1636 = vmatprep.mubr.f32.mxu0 0.0
        %1637 = vmatmul.mubr.f32.gmra.mxu0 %v1436
        %v1638 = vpop.f32.mrf.mxu0
        %v1639 = vadd.f32 0.0, %v1638
        %v1640 = vpop.f32.mrf.mxu0
        %v1641 = vadd.f32 0.0, %v1640
        %1642 = vdwg.mxu0
        %v1643 = vmul.f32 %v1568, %v1570
        %v1645 = vsel %vm704, %v1643, 0
        %1647 = vmatprep.subr.mxu0 0.0
        %1648 = vmatpush1.msra.mxu0 0.0
        %1649 = vmatprep.subr.mxu0 0.0
        %1650 = vmatpush1.msra.mxu0 0.0
        %1651 = vmatprep.subr.mxu0 0.0
        %1652 = vmatpush1.msra.mxu0 0.0
        %1653 = vmatprep.subr.mxu0 0.0
        %1654 = vmatpush1.msra.mxu0 0.0
        %1655 = vmatprep.subr.mxu0 0.0
        %1656 = vmatpush1.msra.mxu0 0.0
        %1657 = vmatprep.subr.mxu0 0.0
        %1658 = vmatpush1.msra.mxu0 0.0
        %1659 = vmatprep.subr.mxu0 0.0
        %1660 = vmatpush1.msra.mxu0 0.0
        %1661 = vmatprep.subr.mxu0 0.0
        %1662 = vmatpush1.msra.mxu0 0.0
        %1663 = vmatprep.subr.mxu0 0.0
        %1664 = vmatpush1.msra.mxu0 %v385
        %1665 = vmatprep.subr.mxu0 0.0
        %1666 = vmatpush1.msra.mxu0 %v384
        %1667 = vmatprep.subr.mxu0 0.0
        %1668 = vmatpush1.msra.mxu0 %v383
        %1669 = vmatprep.subr.mxu0 0.0
        %1670 = vmatpush1.msra.mxu0 %v382
        %1671 = vmatprep.subr.mxu0 0.0
        %1672 = vmatpush1.msra.mxu0 %v381
        %1673 = vmatprep.subr.mxu0 0.0
        %1674 = vmatpush1.msra.mxu0 %v380
        %1675 = vmatprep.subr.mxu0 0.0
        %1676 = vmatpush1.msra.mxu0 %v379
        %1677 = vmatprep.subr.mxu0 0.0
        %1678 = vmatpush1.msra.mxu0 %v378
        %1679 = vmatprep.subr.mxu0 0.0
        %1680 = vmatpush2.msra.mxu0 0.0
        %1681 = vmatprep.subr.mxu0 0.0
        %1682 = vmatpush2.msra.mxu0 0.0
        %1683 = vmatprep.subr.mxu0 0.0
        %1684 = vmatpush2.msra.mxu0 0.0
        %1685 = vmatprep.subr.mxu0 0.0
        %1686 = vmatpush2.msra.mxu0 0.0
        %1687 = vmatprep.subr.mxu0 0.0
        %1688 = vmatpush2.msra.mxu0 0.0
        %1689 = vmatprep.subr.mxu0 0.0
        %1690 = vmatpush2.msra.mxu0 0.0
        %1691 = vmatprep.subr.mxu0 0.0
        %1692 = vmatpush2.msra.mxu0 0.0
        %1693 = vmatprep.subr.mxu0 0.0
        %1694 = vmatpush2.msra.mxu0 0.0
        %1695 = vmatprep.subr.mxu0 0.0
        %1696 = vmatpush2.msra.mxu0 0.0
        %1697 = vmatprep.subr.mxu0 0.0
        %1698 = vmatpush2.msra.mxu0 0.0
        %1699 = vmatprep.subr.mxu0 0.0
        %1700 = vmatpush2.msra.mxu0 0.0
        %1701 = vmatprep.subr.mxu0 0.0
        %1702 = vmatpush2.msra.mxu0 0.0
        %1703 = vmatprep.subr.mxu0 0.0
        %1704 = vmatpush2.msra.mxu0 0.0
        %1705 = vmatprep.subr.mxu0 0.0
        %1706 = vmatpush2.msra.mxu0 0.0
        %1707 = vmatprep.subr.mxu0 0.0
        %1708 = vmatpush2.msra.mxu0 0.0
        %1709 = vmatprep.subr.mxu0 0.0
        %1710 = vmatpush2.msra.mxu0 0.0
        %1711 = vmatprep.mubr.f32.mxu0 0.0
        %1712 = vmatmul.mubr.f32.gmra.mxu0 %v1645
        %v1713 = vpop.f32.mrf.mxu0
        %v1714 = vadd.f32 0.0, %v1713
        %v1715 = vpop.f32.mrf.mxu0
        %1716 = vdwg.mxu0
        %v1717 = vmul.f32 %v1714, 0.25
        %1719 = vrot.lane.b32.xlu0 %v1570, 112
        %v1720 = vpop.permute.xlu0 %1719
        %1722 = vrot.lane.b32.xlu0 %v1570, 48
        %v1723 = vpop.permute.xlu0 %1722
        %v1725 = vsel %vm689, %v1720, %v1723
        %v1726 = vmul.f32 %v1568, %v1725
        %v1728 = vsel %vm704, %v1726, 0
        %1730 = vmatprep.subr.mxu0 0.0
        %1731 = vmatpush1.msra.mxu0 0.0
        %1732 = vmatprep.subr.mxu0 0.0
        %1733 = vmatpush1.msra.mxu0 0.0
        %1734 = vmatprep.subr.mxu0 0.0
        %1735 = vmatpush1.msra.mxu0 0.0
        %1736 = vmatprep.subr.mxu0 0.0
        %1737 = vmatpush1.msra.mxu0 0.0
        %1738 = vmatprep.subr.mxu0 0.0
        %1739 = vmatpush1.msra.mxu0 0.0
        %1740 = vmatprep.subr.mxu0 0.0
        %1741 = vmatpush1.msra.mxu0 0.0
        %1742 = vmatprep.subr.mxu0 0.0
        %1743 = vmatpush1.msra.mxu0 0.0
        %1744 = vmatprep.subr.mxu0 0.0
        %1745 = vmatpush1.msra.mxu0 0.0
        %1746 = vmatprep.subr.mxu0 0.0
        %1747 = vmatpush1.msra.mxu0 %v385
        %1748 = vmatprep.subr.mxu0 0.0
        %1749 = vmatpush1.msra.mxu0 %v384
        %1750 = vmatprep.subr.mxu0 0.0
        %1751 = vmatpush1.msra.mxu0 %v383
        %1752 = vmatprep.subr.mxu0 0.0
        %1753 = vmatpush1.msra.mxu0 %v382
        %1754 = vmatprep.subr.mxu0 0.0
        %1755 = vmatpush1.msra.mxu0 %v381
        %1756 = vmatprep.subr.mxu0 0.0
        %1757 = vmatpush1.msra.mxu0 %v380
        %1758 = vmatprep.subr.mxu0 0.0
        %1759 = vmatpush1.msra.mxu0 %v379
        %1760 = vmatprep.subr.mxu0 0.0
        %1761 = vmatpush1.msra.mxu0 %v378
        %1762 = vmatprep.subr.mxu0 0.0
        %1763 = vmatpush2.msra.mxu0 0.0
        %1764 = vmatprep.subr.mxu0 0.0
        %1765 = vmatpush2.msra.mxu0 0.0
        %1766 = vmatprep.subr.mxu0 0.0
        %1767 = vmatpush2.msra.mxu0 0.0
        %1768 = vmatprep.subr.mxu0 0.0
        %1769 = vmatpush2.msra.mxu0 0.0
        %1770 = vmatprep.subr.mxu0 0.0
        %1771 = vmatpush2.msra.mxu0 0.0
        %1772 = vmatprep.subr.mxu0 0.0
        %1773 = vmatpush2.msra.mxu0 0.0
        %1774 = vmatprep.subr.mxu0 0.0
        %1775 = vmatpush2.msra.mxu0 0.0
        %1776 = vmatprep.subr.mxu0 0.0
        %1777 = vmatpush2.msra.mxu0 0.0
        %1778 = vmatprep.subr.mxu0 0.0
        %1779 = vmatpush2.msra.mxu0 0.0
        %1780 = vmatprep.subr.mxu0 0.0
        %1781 = vmatpush2.msra.mxu0 0.0
        %1782 = vmatprep.subr.mxu0 0.0
        %1783 = vmatpush2.msra.mxu0 0.0
        %1784 = vmatprep.subr.mxu0 0.0
        %1785 = vmatpush2.msra.mxu0 0.0
        %1786 = vmatprep.subr.mxu0 0.0
        %1787 = vmatpush2.msra.mxu0 0.0
        %1788 = vmatprep.subr.mxu0 0.0
        %1789 = vmatpush2.msra.mxu0 0.0
        %1790 = vmatprep.subr.mxu0 0.0
        %1791 = vmatpush2.msra.mxu0 0.0
        %1792 = vmatprep.subr.mxu0 0.0
        %1793 = vmatpush2.msra.mxu0 0.0
        %1794 = vmatprep.mubr.f32.mxu0 0.0
        %1795 = vmatmul.mubr.f32.gmra.mxu0 %v1728
        %v1796 = vpop.f32.mrf.mxu0
        %v1797 = vadd.f32 0.0, %v1796
        %v1798 = vpop.f32.mrf.mxu0
        %1799 = vdwg.mxu0
        %v1800 = vmul.f32 %v1797, 0.25
        %1801 = vrot.lane.b32.xlu0 %v1570, 96
        %v1802 = vpop.permute.xlu0 %1801
        %1804 = vrot.lane.b32.xlu0 %v1570, 32
        %v1805 = vpop.permute.xlu0 %1804
        %v1807 = vsel %vm687, %v1802, %v1805
        %v1808 = vmul.f32 %v1568, %v1807
        %v1810 = vsel %vm704, %v1808, 0
        %1812 = vmatprep.subr.mxu0 0.0
        %1813 = vmatpush1.msra.mxu0 0.0
        %1814 = vmatprep.subr.mxu0 0.0
        %1815 = vmatpush1.msra.mxu0 0.0
        %1816 = vmatprep.subr.mxu0 0.0
        %1817 = vmatpush1.msra.mxu0 0.0
        %1818 = vmatprep.subr.mxu0 0.0
        %1819 = vmatpush1.msra.mxu0 0.0
        %1820 = vmatprep.subr.mxu0 0.0
        %1821 = vmatpush1.msra.mxu0 0.0
        %1822 = vmatprep.subr.mxu0 0.0
        %1823 = vmatpush1.msra.mxu0 0.0
        %1824 = vmatprep.subr.mxu0 0.0
        %1825 = vmatpush1.msra.mxu0 0.0
        %1826 = vmatprep.subr.mxu0 0.0
        %1827 = vmatpush1.msra.mxu0 0.0
        %1828 = vmatprep.subr.mxu0 0.0
        %1829 = vmatpush1.msra.mxu0 %v385
        %1830 = vmatprep.subr.mxu0 0.0
        %1831 = vmatpush1.msra.mxu0 %v384
        %1832 = vmatprep.subr.mxu0 0.0
        %1833 = vmatpush1.msra.mxu0 %v383
        %1834 = vmatprep.subr.mxu0 0.0
        %1835 = vmatpush1.msra.mxu0 %v382
        %1836 = vmatprep.subr.mxu0 0.0
        %1837 = vmatpush1.msra.mxu0 %v381
        %1838 = vmatprep.subr.mxu0 0.0
        %1839 = vmatpush1.msra.mxu0 %v380
        %1840 = vmatprep.subr.mxu0 0.0
        %1841 = vmatpush1.msra.mxu0 %v379
        %1842 = vmatprep.subr.mxu0 0.0
        %1843 = vmatpush1.msra.mxu0 %v378
        %1844 = vmatprep.subr.mxu0 0.0
        %1845 = vmatpush2.msra.mxu0 0.0
        %1846 = vmatprep.subr.mxu0 0.0
        %1847 = vmatpush2.msra.mxu0 0.0
        %1848 = vmatprep.subr.mxu0 0.0
        %1849 = vmatpush2.msra.mxu0 0.0
        %1850 = vmatprep.subr.mxu0 0.0
        %1851 = vmatpush2.msra.mxu0 0.0
        %1852 = vmatprep.subr.mxu0 0.0
        %1853 = vmatpush2.msra.mxu0 0.0
        %1854 = vmatprep.subr.mxu0 0.0
        %1855 = vmatpush2.msra.mxu0 0.0
        %1856 = vmatprep.subr.mxu0 0.0
        %1857 = vmatpush2.msra.mxu0 0.0
        %1858 = vmatprep.subr.mxu0 0.0
        %1859 = vmatpush2.msra.mxu0 0.0
        %1860 = vmatprep.subr.mxu0 0.0
        %1861 = vmatpush2.msra.mxu0 0.0
        %1862 = vmatprep.subr.mxu0 0.0
        %1863 = vmatpush2.msra.mxu0 0.0
        %1864 = vmatprep.subr.mxu0 0.0
        %1865 = vmatpush2.msra.mxu0 0.0
        %1866 = vmatprep.subr.mxu0 0.0
        %1867 = vmatpush2.msra.mxu0 0.0
        %1868 = vmatprep.subr.mxu0 0.0
        %1869 = vmatpush2.msra.mxu0 0.0
        %1870 = vmatprep.subr.mxu0 0.0
        %1871 = vmatpush2.msra.mxu0 0.0
        %1872 = vmatprep.subr.mxu0 0.0
        %1873 = vmatpush2.msra.mxu0 0.0
        %1874 = vmatprep.subr.mxu0 0.0
        %1875 = vmatpush2.msra.mxu0 0.0
        %1876 = vmatprep.mubr.f32.mxu0 0.0
        %1877 = vmatmul.mubr.f32.gmra.mxu0 %v1810
        %v1878 = vpop.f32.mrf.mxu0
        %v1879 = vadd.f32 0.0, %v1878
        %v1880 = vpop.f32.mrf.mxu0
        %1881 = vdwg.mxu0
        %v1882 = vmul.f32 %v1879, 0.25
        %1883 = vrot.lane.b32.xlu0 %v1570, 80
        %v1884 = vpop.permute.xlu0 %1883
        %1886 = vrot.lane.b32.xlu0 %v1570, 16
        %v1887 = vpop.permute.xlu0 %1886
        %v1889 = vsel %vm396, %v1884, %v1887
        %v1890 = vmul.f32 %v1568, %v1889
        %v1892 = vsel %vm704, %v1890, 0
        %1894 = vmatprep.subr.mxu0 0.0
        %1895 = vmatpush1.msra.mxu0 0.0
        %1896 = vmatprep.subr.mxu0 0.0
        %1897 = vmatpush1.msra.mxu0 0.0
        %1898 = vmatprep.subr.mxu0 0.0
        %1899 = vmatpush1.msra.mxu0 0.0
        %1900 = vmatprep.subr.mxu0 0.0
        %1901 = vmatpush1.msra.mxu0 0.0
        %1902 = vmatprep.subr.mxu0 0.0
        %1903 = vmatpush1.msra.mxu0 0.0
        %1904 = vmatprep.subr.mxu0 0.0
        %1905 = vmatpush1.msra.mxu0 0.0
        %1906 = vmatprep.subr.mxu0 0.0
        %1907 = vmatpush1.msra.mxu0 0.0
        %1908 = vmatprep.subr.mxu0 0.0
        %1909 = vmatpush1.msra.mxu0 0.0
        %1910 = vmatprep.subr.mxu0 0.0
        %1911 = vmatpush1.msra.mxu0 %v385
        %1912 = vmatprep.subr.mxu0 0.0
        %1913 = vmatpush1.msra.mxu0 %v384
        %1914 = vmatprep.subr.mxu0 0.0
        %1915 = vmatpush1.msra.mxu0 %v383
        %1916 = vmatprep.subr.mxu0 0.0
        %1917 = vmatpush1.msra.mxu0 %v382
        %1918 = vmatprep.subr.mxu0 0.0
        %1919 = vmatpush1.msra.mxu0 %v381
        %1920 = vmatprep.subr.mxu0 0.0
        %1921 = vmatpush1.msra.mxu0 %v380
        %1922 = vmatprep.subr.mxu0 0.0
        %1923 = vmatpush1.msra.mxu0 %v379
        %1924 = vmatprep.subr.mxu0 0.0
        %1925 = vmatpush1.msra.mxu0 %v378
        %1926 = vmatprep.subr.mxu0 0.0
        %1927 = vmatpush2.msra.mxu0 0.0
        %1928 = vmatprep.subr.mxu0 0.0
        %1929 = vmatpush2.msra.mxu0 0.0
        %1930 = vmatprep.subr.mxu0 0.0
        %1931 = vmatpush2.msra.mxu0 0.0
        %1932 = vmatprep.subr.mxu0 0.0
        %1933 = vmatpush2.msra.mxu0 0.0
        %1934 = vmatprep.subr.mxu0 0.0
        %1935 = vmatpush2.msra.mxu0 0.0
        %1936 = vmatprep.subr.mxu0 0.0
        %1937 = vmatpush2.msra.mxu0 0.0
        %1938 = vmatprep.subr.mxu0 0.0
        %1939 = vmatpush2.msra.mxu0 0.0
        %1940 = vmatprep.subr.mxu0 0.0
        %1941 = vmatpush2.msra.mxu0 0.0
        %1942 = vmatprep.subr.mxu0 0.0
        %1943 = vmatpush2.msra.mxu0 0.0
        %1944 = vmatprep.subr.mxu0 0.0
        %1945 = vmatpush2.msra.mxu0 0.0
        %1946 = vmatprep.subr.mxu0 0.0
        %1947 = vmatpush2.msra.mxu0 0.0
        %1948 = vmatprep.subr.mxu0 0.0
        %1949 = vmatpush2.msra.mxu0 0.0
        %1950 = vmatprep.subr.mxu0 0.0
        %1951 = vmatpush2.msra.mxu0 0.0
        %1952 = vmatprep.subr.mxu0 0.0
        %1953 = vmatpush2.msra.mxu0 0.0
        %1954 = vmatprep.subr.mxu0 0.0
        %1955 = vmatpush2.msra.mxu0 0.0
        %1956 = vmatprep.subr.mxu0 0.0
        %1957 = vmatpush2.msra.mxu0 0.0
        %1958 = vmatprep.mubr.f32.mxu0 0.0
        %1959 = vmatmul.mubr.f32.gmra.mxu0 %v1892
        %v1960 = vpop.f32.mrf.mxu0
        %v1961 = vadd.f32 0.0, %v1960
        %v1962 = vpop.f32.mrf.mxu0
        %1963 = vdwg.mxu0
        %v1964 = vmul.f32 %v1961, 0.25
        %v1965 = vmax.f32 %v1717, %v1800
        %v1966 = vmax.f32 %v1965, %v1882
        %v1967 = vmax.f32 %v1966, %v1964
        %v1968 = vsub.f32 %v1717, %v1967
        %v1969 = vmul.f32 %v1968, 1.442695
        %v1970 = vpow.pop %v1969
        %v1971 = vsub.f32 %v1800, %v1967
        %v1972 = vmul.f32 %v1971, 1.442695
        %v1973 = vpow.pop %v1972
        %v1974 = vsub.f32 %v1882, %v1967
        %v1975 = vmul.f32 %v1974, 1.442695
        %v1976 = vpow.pop %v1975
        %v1977 = vsub.f32 %v1964, %v1967
        %v1978 = vmul.f32 %v1977, 1.442695
        %v1979 = vpow.pop %v1978
        %v1980 = vadd.f32 %v1970, %v1973
        %v1981 = vadd.f32 %v1980, %v1976
        %v1982 = vadd.f32 %v1981, %v1979
        %v1983 = vrcp.pop %v1982
        %v1984 = vmul.f32 %v1970, %v1983
        %v1986 = vmul.f32 %v1984, %v948
        %v1987 = vmul.f32 %v1973, %v1983
        %v1988 = vmul.f32 %v1987, %v948
        %v1989 = vmul.f32 %v1976, %v1983
        %v1990 = vmul.f32 %v1989, %v948
        %v1991 = vmul.f32 %v1979, %v1983
        %v1992 = vmul.f32 %v1991, %v948
        %v1994 = vsel %vm949, %v1986, 0
        %1996 = vmatprep.subr.mxu0 0.0
        %1997 = vmatpush1.msra.mxu0 0.0
        %1998 = vmatprep.subr.mxu0 0.0
        %1999 = vmatpush1.msra.mxu0 0.0
        %2000 = vmatprep.subr.mxu0 0.0
        %2001 = vmatpush1.msra.mxu0 0.0
        %2002 = vmatprep.subr.mxu0 0.0
        %2003 = vmatpush1.msra.mxu0 0.0
        %2004 = vmatprep.subr.mxu0 0.0
        %2005 = vmatpush1.msra.mxu0 0.0
        %2006 = vmatprep.subr.mxu0 0.0
        %2007 = vmatpush1.msra.mxu0 0.0
        %2008 = vmatprep.subr.mxu0 0.0
        %2009 = vmatpush1.msra.mxu0 0.0
        %2010 = vmatprep.subr.mxu0 0.0
        %2011 = vmatpush1.msra.mxu0 0.0
        %2012 = vmatprep.subr.mxu0 0.0
        %2013 = vmatpush1.msra.mxu0 0.0
        %2014 = vmatprep.subr.mxu0 0.0
        %2015 = vmatpush1.msra.mxu0 0.0
        %2016 = vmatprep.subr.mxu0 0.0
        %2017 = vmatpush1.msra.mxu0 0.0
        %2018 = vmatprep.subr.mxu0 0.0
        %2019 = vmatpush1.msra.mxu0 0.0
        %2020 = vmatprep.subr.mxu0 0.0
        %2021 = vmatpush1.msra.mxu0 0.0
        %2022 = vmatprep.subr.mxu0 0.0
        %2023 = vmatpush1.msra.mxu0 0.0
        %2024 = vmatprep.subr.mxu0 0.0
        %2025 = vmatpush1.msra.mxu0 0.0
        %2026 = vmatprep.subr.mxu0 0.0
        %2027 = vmatpush1.msra.mxu0 %v954
        %2028 = vmatprep.subr.mxu0 0.0
        %2029 = vmatpush2.msra.mxu0 0.0
        %2030 = vmatprep.subr.mxu0 0.0
        %2031 = vmatpush2.msra.mxu0 0.0
        %2032 = vmatprep.subr.mxu0 0.0
        %2033 = vmatpush2.msra.mxu0 0.0
        %2034 = vmatprep.subr.mxu0 0.0
        %2035 = vmatpush2.msra.mxu0 0.0
        %2036 = vmatprep.subr.mxu0 0.0
        %2037 = vmatpush2.msra.mxu0 0.0
        %2038 = vmatprep.subr.mxu0 0.0
        %2039 = vmatpush2.msra.mxu0 0.0
        %2040 = vmatprep.subr.mxu0 0.0
        %2041 = vmatpush2.msra.mxu0 0.0
        %2042 = vmatprep.subr.mxu0 0.0
        %2043 = vmatpush2.msra.mxu0 0.0
        %2044 = vmatprep.subr.mxu0 0.0
        %2045 = vmatpush2.msra.mxu0 0.0
        %2046 = vmatprep.subr.mxu0 0.0
        %2047 = vmatpush2.msra.mxu0 0.0
        %2048 = vmatprep.subr.mxu0 0.0
        %2049 = vmatpush2.msra.mxu0 0.0
        %2050 = vmatprep.subr.mxu0 0.0
        %2051 = vmatpush2.msra.mxu0 0.0
        %2052 = vmatprep.subr.mxu0 0.0
        %2053 = vmatpush2.msra.mxu0 0.0
        %2054 = vmatprep.subr.mxu0 0.0
        %2055 = vmatpush2.msra.mxu0 0.0
        %2056 = vmatprep.subr.mxu0 0.0
        %2057 = vmatpush2.msra.mxu0 0.0
        %2058 = vmatprep.subr.mxu0 0.0
        %2059 = vmatpush2.msra.mxu0 0.0
        %2060 = vmatprep.mubr.f32.mxu0 0.0
        %2061 = vmatmul.mubr.f32.gmra.mxu0 %v1994
        %v2062 = vpop.f32.mrf.mxu0
        %v2063 = vadd.f32 0.0, %v2062
        %v2064 = vpop.f32.mrf.mxu0
        %2065 = vdwg.mxu0
        %v2066 = vmul.f32 %v2063, %v1639
        %v2067 = vadd.f32 %v2066, 0.0
        %2069 = vrot.lane.b32.xlu0 %v1639, 96
        %v2070 = vpop.permute.xlu0 %2069
        %v2073 = vsel %vm949, %v1988, 0
        %2075 = vmatprep.subr.mxu0 0.0
        %2076 = vmatpush1.msra.mxu0 0.0
        %2077 = vmatprep.subr.mxu0 0.0
        %2078 = vmatpush1.msra.mxu0 0.0
        %2079 = vmatprep.subr.mxu0 0.0
        %2080 = vmatpush1.msra.mxu0 0.0
        %2081 = vmatprep.subr.mxu0 0.0
        %2082 = vmatpush1.msra.mxu0 0.0
        %2083 = vmatprep.subr.mxu0 0.0
        %2084 = vmatpush1.msra.mxu0 0.0
        %2085 = vmatprep.subr.mxu0 0.0
        %2086 = vmatpush1.msra.mxu0 0.0
        %2087 = vmatprep.subr.mxu0 0.0
        %2088 = vmatpush1.msra.mxu0 0.0
        %2089 = vmatprep.subr.mxu0 0.0
        %2090 = vmatpush1.msra.mxu0 0.0
        %2091 = vmatprep.subr.mxu0 0.0
        %2092 = vmatpush1.msra.mxu0 0.0
        %2093 = vmatprep.subr.mxu0 0.0
        %2094 = vmatpush1.msra.mxu0 0.0
        %2095 = vmatprep.subr.mxu0 0.0
        %2096 = vmatpush1.msra.mxu0 0.0
        %2097 = vmatprep.subr.mxu0 0.0
        %2098 = vmatpush1.msra.mxu0 0.0
        %2099 = vmatprep.subr.mxu0 0.0
        %2100 = vmatpush1.msra.mxu0 0.0
        %2101 = vmatprep.subr.mxu0 0.0
        %2102 = vmatpush1.msra.mxu0 0.0
        %2103 = vmatprep.subr.mxu0 0.0
        %2104 = vmatpush1.msra.mxu0 0.0
        %2105 = vmatprep.subr.mxu0 0.0
        %2106 = vmatpush1.msra.mxu0 %v954
        %2107 = vmatprep.subr.mxu0 0.0
        %2108 = vmatpush2.msra.mxu0 0.0
        %2109 = vmatprep.subr.mxu0 0.0
        %2110 = vmatpush2.msra.mxu0 0.0
        %2111 = vmatprep.subr.mxu0 0.0
        %2112 = vmatpush2.msra.mxu0 0.0
        %2113 = vmatprep.subr.mxu0 0.0
        %2114 = vmatpush2.msra.mxu0 0.0
        %2115 = vmatprep.subr.mxu0 0.0
        %2116 = vmatpush2.msra.mxu0 0.0
        %2117 = vmatprep.subr.mxu0 0.0
        %2118 = vmatpush2.msra.mxu0 0.0
        %2119 = vmatprep.subr.mxu0 0.0
        %2120 = vmatpush2.msra.mxu0 0.0
        %2121 = vmatprep.subr.mxu0 0.0
        %2122 = vmatpush2.msra.mxu0 0.0
        %2123 = vmatprep.subr.mxu0 0.0
        %2124 = vmatpush2.msra.mxu0 0.0
        %2125 = vmatprep.subr.mxu0 0.0
        %2126 = vmatpush2.msra.mxu0 0.0
        %2127 = vmatprep.subr.mxu0 0.0
        %2128 = vmatpush2.msra.mxu0 0.0
        %2129 = vmatprep.subr.mxu0 0.0
        %2130 = vmatpush2.msra.mxu0 0.0
        %2131 = vmatprep.subr.mxu0 0.0
        %2132 = vmatpush2.msra.mxu0 0.0
        %2133 = vmatprep.subr.mxu0 0.0
        %2134 = vmatpush2.msra.mxu0 0.0
        %2135 = vmatprep.subr.mxu0 0.0
        %2136 = vmatpush2.msra.mxu0 0.0
        %2137 = vmatprep.subr.mxu0 0.0
        %2138 = vmatpush2.msra.mxu0 0.0
        %2139 = vmatprep.mubr.f32.mxu0 0.0
        %2140 = vmatmul.mubr.f32.gmra.mxu0 %v2073
        %v2141 = vpop.f32.mrf.mxu0
        %v2142 = vadd.f32 0.0, %v2141
        %v2143 = vpop.f32.mrf.mxu0
        %2144 = vdwg.mxu0
        %v2145 = vmul.f32 %v2142, %v2070
        %v2146 = vadd.f32 %v2067, %v2145
        %2147 = vrot.lane.b32.xlu0 %v1639, 64
        %v2148 = vpop.permute.xlu0 %2147
        %v2151 = vsel %vm949, %v1990, 0
        %2153 = vmatprep.subr.mxu0 0.0
        %2154 = vmatpush1.msra.mxu0 0.0
        %2155 = vmatprep.subr.mxu0 0.0
        %2156 = vmatpush1.msra.mxu0 0.0
        %2157 = vmatprep.subr.mxu0 0.0
        %2158 = vmatpush1.msra.mxu0 0.0
        %2159 = vmatprep.subr.mxu0 0.0
        %2160 = vmatpush1.msra.mxu0 0.0
        %2161 = vmatprep.subr.mxu0 0.0
        %2162 = vmatpush1.msra.mxu0 0.0
        %2163 = vmatprep.subr.mxu0 0.0
        %2164 = vmatpush1.msra.mxu0 0.0
        %2165 = vmatprep.subr.mxu0 0.0
        %2166 = vmatpush1.msra.mxu0 0.0
        %2167 = vmatprep.subr.mxu0 0.0
        %2168 = vmatpush1.msra.mxu0 0.0
        %2169 = vmatprep.subr.mxu0 0.0
        %2170 = vmatpush1.msra.mxu0 0.0
        %2171 = vmatprep.subr.mxu0 0.0
        %2172 = vmatpush1.msra.mxu0 0.0
        %2173 = vmatprep.subr.mxu0 0.0
        %2174 = vmatpush1.msra.mxu0 0.0
        %2175 = vmatprep.subr.mxu0 0.0
        %2176 = vmatpush1.msra.mxu0 0.0
        %2177 = vmatprep.subr.mxu0 0.0
        %2178 = vmatpush1.msra.mxu0 0.0
        %2179 = vmatprep.subr.mxu0 0.0
        %2180 = vmatpush1.msra.mxu0 0.0
        %2181 = vmatprep.subr.mxu0 0.0
        %2182 = vmatpush1.msra.mxu0 0.0
        %2183 = vmatprep.subr.mxu0 0.0
        %2184 = vmatpush1.msra.mxu0 %v954
        %2185 = vmatprep.subr.mxu0 0.0
        %2186 = vmatpush2.msra.mxu0 0.0
        %2187 = vmatprep.subr.mxu0 0.0
        %2188 = vmatpush2.msra.mxu0 0.0
        %2189 = vmatprep.subr.mxu0 0.0
        %2190 = vmatpush2.msra.mxu0 0.0
        %2191 = vmatprep.subr.mxu0 0.0
        %2192 = vmatpush2.msra.mxu0 0.0
        %2193 = vmatprep.subr.mxu0 0.0
        %2194 = vmatpush2.msra.mxu0 0.0
        %2195 = vmatprep.subr.mxu0 0.0
        %2196 = vmatpush2.msra.mxu0 0.0
        %2197 = vmatprep.subr.mxu0 0.0
        %2198 = vmatpush2.msra.mxu0 0.0
        %2199 = vmatprep.subr.mxu0 0.0
        %2200 = vmatpush2.msra.mxu0 0.0
        %2201 = vmatprep.subr.mxu0 0.0
        %2202 = vmatpush2.msra.mxu0 0.0
        %2203 = vmatprep.subr.mxu0 0.0
        %2204 = vmatpush2.msra.mxu0 0.0
        %2205 = vmatprep.subr.mxu0 0.0
        %2206 = vmatpush2.msra.mxu0 0.0
        %2207 = vmatprep.subr.mxu0 0.0
        %2208 = vmatpush2.msra.mxu0 0.0
        %2209 = vmatprep.subr.mxu0 0.0
        %2210 = vmatpush2.msra.mxu0 0.0
        %2211 = vmatprep.subr.mxu0 0.0
        %2212 = vmatpush2.msra.mxu0 0.0
        %2213 = vmatprep.subr.mxu0 0.0
        %2214 = vmatpush2.msra.mxu0 0.0
        %2215 = vmatprep.subr.mxu0 0.0
        %2216 = vmatpush2.msra.mxu0 0.0
        %2217 = vmatprep.mubr.f32.mxu0 0.0
        %2218 = vmatmul.mubr.f32.gmra.mxu0 %v2151
        %v2219 = vpop.f32.mrf.mxu0
        %v2220 = vadd.f32 0.0, %v2219
        %v2221 = vpop.f32.mrf.mxu0
        %2222 = vdwg.mxu0
        %v2223 = vmul.f32 %v2220, %v2148
        %v2224 = vadd.f32 %v2146, %v2223
        %2225 = vrot.lane.b32.xlu0 %v1639, 32
        %v2226 = vpop.permute.xlu0 %2225
        %v2229 = vsel %vm949, %v1992, 0
        %2231 = vmatprep.subr.mxu0 0.0
        %2232 = vmatpush1.msra.mxu0 0.0
        %2233 = vmatprep.subr.mxu0 0.0
        %2234 = vmatpush1.msra.mxu0 0.0
        %2235 = vmatprep.subr.mxu0 0.0
        %2236 = vmatpush1.msra.mxu0 0.0
        %2237 = vmatprep.subr.mxu0 0.0
        %2238 = vmatpush1.msra.mxu0 0.0
        %2239 = vmatprep.subr.mxu0 0.0
        %2240 = vmatpush1.msra.mxu0 0.0
        %2241 = vmatprep.subr.mxu0 0.0
        %2242 = vmatpush1.msra.mxu0 0.0
        %2243 = vmatprep.subr.mxu0 0.0
        %2244 = vmatpush1.msra.mxu0 0.0
        %2245 = vmatprep.subr.mxu0 0.0
        %2246 = vmatpush1.msra.mxu0 0.0
        %2247 = vmatprep.subr.mxu0 0.0
        %2248 = vmatpush1.msra.mxu0 0.0
        %2249 = vmatprep.subr.mxu0 0.0
        %2250 = vmatpush1.msra.mxu0 0.0
        %2251 = vmatprep.subr.mxu0 0.0
        %2252 = vmatpush1.msra.mxu0 0.0
        %2253 = vmatprep.subr.mxu0 0.0
        %2254 = vmatpush1.msra.mxu0 0.0
        %2255 = vmatprep.subr.mxu0 0.0
        %2256 = vmatpush1.msra.mxu0 0.0
        %2257 = vmatprep.subr.mxu0 0.0
        %2258 = vmatpush1.msra.mxu0 0.0
        %2259 = vmatprep.subr.mxu0 0.0
        %2260 = vmatpush1.msra.mxu0 0.0
        %2261 = vmatprep.subr.mxu0 0.0
        %2262 = vmatpush1.msra.mxu0 %v954
        %2263 = vmatprep.subr.mxu0 0.0
        %2264 = vmatpush2.msra.mxu0 0.0
        %2265 = vmatprep.subr.mxu0 0.0
        %2266 = vmatpush2.msra.mxu0 0.0
        %2267 = vmatprep.subr.mxu0 0.0
        %2268 = vmatpush2.msra.mxu0 0.0
        %2269 = vmatprep.subr.mxu0 0.0
        %2270 = vmatpush2.msra.mxu0 0.0
        %2271 = vmatprep.subr.mxu0 0.0
        %2272 = vmatpush2.msra.mxu0 0.0
        %2273 = vmatprep.subr.mxu0 0.0
        %2274 = vmatpush2.msra.mxu0 0.0
        %2275 = vmatprep.subr.mxu0 0.0
        %2276 = vmatpush2.msra.mxu0 0.0
        %2277 = vmatprep.subr.mxu0 0.0
        %2278 = vmatpush2.msra.mxu0 0.0
        %2279 = vmatprep.subr.mxu0 0.0
        %2280 = vmatpush2.msra.mxu0 0.0
        %2281 = vmatprep.subr.mxu0 0.0
        %2282 = vmatpush2.msra.mxu0 0.0
        %2283 = vmatprep.subr.mxu0 0.0
        %2284 = vmatpush2.msra.mxu0 0.0
        %2285 = vmatprep.subr.mxu0 0.0
        %2286 = vmatpush2.msra.mxu0 0.0
        %2287 = vmatprep.subr.mxu0 0.0
        %2288 = vmatpush2.msra.mxu0 0.0
        %2289 = vmatprep.subr.mxu0 0.0
        %2290 = vmatpush2.msra.mxu0 0.0
        %2291 = vmatprep.subr.mxu0 0.0
        %2292 = vmatpush2.msra.mxu0 0.0
        %2293 = vmatprep.subr.mxu0 0.0
        %2294 = vmatpush2.msra.mxu0 0.0
        %2295 = vmatprep.mubr.f32.mxu0 0.0
        %2296 = vmatmul.mubr.f32.gmra.mxu0 %v2229
        %v2297 = vpop.f32.mrf.mxu0
        %v2298 = vadd.f32 0.0, %v2297
        %v2299 = vpop.f32.mrf.mxu0
        %2300 = vdwg.mxu0
        %v2301 = vmul.f32 %v2298, %v2226
        %v2302 = vadd.f32 %v2224, %v2301
        %v2303 = vld [vmem:[#allocation3] sm:$0xff]
        %v2304 = vld [vmem:[#allocation3 + $0x8] sm:$0xff]
        %v2305 = vld [vmem:[#allocation3 + $0x10] sm:$0xff]
        %v2306 = vld [vmem:[#allocation3 + $0x18] sm:$0xff]
        %v2307 = vld [vmem:[#allocation3 + $0x20] sm:$0xff]
        %v2308 = vld [vmem:[#allocation3 + $0x28] sm:$0xff]
        %v2309 = vld [vmem:[#allocation3 + $0x30] sm:$0xff]
        %v2310 = vld [vmem:[#allocation3 + $0x38] sm:$0xff]
        %v2311 = vld [vmem:[#allocation3 + $0x40] sm:$0xff]
        %v2312 = vld [vmem:[#allocation3 + $0x48] sm:$0xff]
        %v2313 = vld [vmem:[#allocation3 + $0x50] sm:$0xff]
        %v2314 = vld [vmem:[#allocation3 + $0x58] sm:$0xff]
        %v2315 = vld [vmem:[#allocation3 + $0x60] sm:$0xff]
        %v2316 = vld [vmem:[#allocation3 + $0x68] sm:$0xff]
        %v2317 = vld [vmem:[#allocation3 + $0x70] sm:$0xff]
        %v2318 = vld [vmem:[#allocation3 + $0x78] sm:$0xff]
        %2319 = vmatprep.subr.mxu0 0.0
        %2320 = vmatpush1.msra.mxu0 %v2318
        %2321 = vmatprep.subr.mxu0 0.0
        %2322 = vmatpush1.msra.mxu0 %v2317
        %2323 = vmatprep.subr.mxu0 0.0
        %2324 = vmatpush1.msra.mxu0 %v2316
        %2325 = vmatprep.subr.mxu0 0.0
        %2326 = vmatpush1.msra.mxu0 %v2315
        %2327 = vmatprep.subr.mxu0 0.0
        %2328 = vmatpush1.msra.mxu0 %v2314
        %2329 = vmatprep.subr.mxu0 0.0
        %2330 = vmatpush1.msra.mxu0 %v2313
        %2331 = vmatprep.subr.mxu0 0.0
        %2332 = vmatpush1.msra.mxu0 %v2312
        %2333 = vmatprep.subr.mxu0 0.0
        %2334 = vmatpush1.msra.mxu0 %v2311
        %2335 = vmatprep.subr.mxu0 0.0
        %2336 = vmatpush1.msra.mxu0 %v2310
        %2337 = vmatprep.subr.mxu0 0.0
        %2338 = vmatpush1.msra.mxu0 %v2309
        %2339 = vmatprep.subr.mxu0 0.0
        %2340 = vmatpush1.msra.mxu0 %v2308
        %2341 = vmatprep.subr.mxu0 0.0
        %2342 = vmatpush1.msra.mxu0 %v2307
        %2343 = vmatprep.subr.mxu0 0.0
        %2344 = vmatpush1.msra.mxu0 %v2306
        %2345 = vmatprep.subr.mxu0 0.0
        %2346 = vmatpush1.msra.mxu0 %v2305
        %2347 = vmatprep.subr.mxu0 0.0
        %2348 = vmatpush1.msra.mxu0 %v2304
        %2349 = vmatprep.subr.mxu0 0.0
        %2350 = vmatpush1.msra.mxu0 %v2303
        %2351 = vmatprep.subr.mxu0 0.0
        %2352 = vmatpush2.msra.mxu0 0.0
        %2353 = vmatprep.subr.mxu0 0.0
        %2354 = vmatpush2.msra.mxu0 0.0
        %2355 = vmatprep.subr.mxu0 0.0
        %2356 = vmatpush2.msra.mxu0 0.0
        %2357 = vmatprep.subr.mxu0 0.0
        %2358 = vmatpush2.msra.mxu0 0.0
        %2359 = vmatprep.subr.mxu0 0.0
        %2360 = vmatpush2.msra.mxu0 0.0
        %2361 = vmatprep.subr.mxu0 0.0
        %2362 = vmatpush2.msra.mxu0 0.0
        %2363 = vmatprep.subr.mxu0 0.0
        %2364 = vmatpush2.msra.mxu0 0.0
        %2365 = vmatprep.subr.mxu0 0.0
        %2366 = vmatpush2.msra.mxu0 0.0
        %2367 = vmatprep.subr.mxu0 0.0
        %2368 = vmatpush2.msra.mxu0 0.0
        %2369 = vmatprep.subr.mxu0 0.0
        %2370 = vmatpush2.msra.mxu0 0.0
        %2371 = vmatprep.subr.mxu0 0.0
        %2372 = vmatpush2.msra.mxu0 0.0
        %2373 = vmatprep.subr.mxu0 0.0
        %2374 = vmatpush2.msra.mxu0 0.0
        %2375 = vmatprep.subr.mxu0 0.0
        %2376 = vmatpush2.msra.mxu0 0.0
        %2377 = vmatprep.subr.mxu0 0.0
        %2378 = vmatpush2.msra.mxu0 0.0
        %2379 = vmatprep.subr.mxu0 0.0
        %2380 = vmatpush2.msra.mxu0 0.0
        %2381 = vmatprep.subr.mxu0 0.0
        %2382 = vmatpush2.msra.mxu0 0.0
        %2383 = vmatprep.mubr.f32.mxu0 0.0
        %2384 = vmatmul.mubr.f32.gmra.mxu0 %v2302
        %v2385 = vpop.f32.mrf.mxu0
        %v2386 = vadd.f32 0.0, %v2385
        %v2387 = vpop.f32.mrf.mxu0
        %2388 = vdwg.mxu0
        %v2389 = vadd.f32 %v1436, %v2386
        %2390 = vrot.lane.b32.xlu0 %v1643, 64
        %v2391 = vpop.permute.xlu0 %2390
        %v2392 = vsel %vm704, %v2391, 0
        %2394 = vmatprep.subr.mxu0 0.0
        %2395 = vmatpush1.msra.mxu0 0.0
        %2396 = vmatprep.subr.mxu0 0.0
        %2397 = vmatpush1.msra.mxu0 0.0
        %2398 = vmatprep.subr.mxu0 0.0
        %2399 = vmatpush1.msra.mxu0 0.0
        %2400 = vmatprep.subr.mxu0 0.0
        %2401 = vmatpush1.msra.mxu0 0.0
        %2402 = vmatprep.subr.mxu0 0.0
        %2403 = vmatpush1.msra.mxu0 0.0
        %2404 = vmatprep.subr.mxu0 0.0
        %2405 = vmatpush1.msra.mxu0 0.0
        %2406 = vmatprep.subr.mxu0 0.0
        %2407 = vmatpush1.msra.mxu0 0.0
        %2408 = vmatprep.subr.mxu0 0.0
        %2409 = vmatpush1.msra.mxu0 0.0
        %2410 = vmatprep.subr.mxu0 0.0
        %2411 = vmatpush1.msra.mxu0 %v385
        %2412 = vmatprep.subr.mxu0 0.0
        %2413 = vmatpush1.msra.mxu0 %v384
        %2414 = vmatprep.subr.mxu0 0.0
        %2415 = vmatpush1.msra.mxu0 %v383
        %2416 = vmatprep.subr.mxu0 0.0
        %2417 = vmatpush1.msra.mxu0 %v382
        %2418 = vmatprep.subr.mxu0 0.0
        %2419 = vmatpush1.msra.mxu0 %v381
        %2420 = vmatprep.subr.mxu0 0.0
        %2421 = vmatpush1.msra.mxu0 %v380
        %2422 = vmatprep.subr.mxu0 0.0
        %2423 = vmatpush1.msra.mxu0 %v379
        %2424 = vmatprep.subr.mxu0 0.0
        %2425 = vmatpush1.msra.mxu0 %v378
        %2426 = vmatprep.subr.mxu0 0.0
        %2427 = vmatpush2.msra.mxu0 0.0
        %2428 = vmatprep.subr.mxu0 0.0
        %2429 = vmatpush2.msra.mxu0 0.0
        %2430 = vmatprep.subr.mxu0 0.0
        %2431 = vmatpush2.msra.mxu0 0.0
        %2432 = vmatprep.subr.mxu0 0.0
        %2433 = vmatpush2.msra.mxu0 0.0
        %2434 = vmatprep.subr.mxu0 0.0
        %2435 = vmatpush2.msra.mxu0 0.0
        %2436 = vmatprep.subr.mxu0 0.0
        %2437 = vmatpush2.msra.mxu0 0.0
        %2438 = vmatprep.subr.mxu0 0.0
        %2439 = vmatpush2.msra.mxu0 0.0
        %2440 = vmatprep.subr.mxu0 0.0
        %2441 = vmatpush2.msra.mxu0 0.0
        %2442 = vmatprep.subr.mxu0 0.0
        %2443 = vmatpush2.msra.mxu0 0.0
        %2444 = vmatprep.subr.mxu0 0.0
        %2445 = vmatpush2.msra.mxu0 0.0
        %2446 = vmatprep.subr.mxu0 0.0
        %2447 = vmatpush2.msra.mxu0 0.0
        %2448 = vmatprep.subr.mxu0 0.0
        %2449 = vmatpush2.msra.mxu0 0.0
        %2450 = vmatprep.subr.mxu0 0.0
        %2451 = vmatpush2.msra.mxu0 0.0
        %2452 = vmatprep.subr.mxu0 0.0
        %2453 = vmatpush2.msra.mxu0 0.0
        %2454 = vmatprep.subr.mxu0 0.0
        %2455 = vmatpush2.msra.mxu0 0.0
        %2456 = vmatprep.subr.mxu0 0.0
        %2457 = vmatpush2.msra.mxu0 0.0
        %2458 = vmatprep.mubr.f32.mxu0 0.0
        %2459 = vmatmul.mubr.f32.gmra.mxu0 %v2392
        %v2460 = vpop.f32.mrf.mxu0
        %v2461 = vadd.f32 0.0, %v2460
        %v2462 = vpop.f32.mrf.mxu0
        %2463 = vdwg.mxu0
        %v2464 = vmul.f32 %v2461, 0.25
        %v2465 = vsel %vm689, %v1723, %v1720
        %2467 = vrot.lane.b32.xlu0 %v2465, 64
        %v2468 = vpop.permute.xlu0 %2467
        %v2470 = vmul.f32 %v1568, %v2468
        %2472 = vrot.lane.b32.xlu0 %v2470, 64
        %v2473 = vpop.permute.xlu0 %2472
        %v2474 = vsel %vm704, %v2473, 0
        %2476 = vmatprep.subr.mxu0 0.0
        %2477 = vmatpush1.msra.mxu0 0.0
        %2478 = vmatprep.subr.mxu0 0.0
        %2479 = vmatpush1.msra.mxu0 0.0
        %2480 = vmatprep.subr.mxu0 0.0
        %2481 = vmatpush1.msra.mxu0 0.0
        %2482 = vmatprep.subr.mxu0 0.0
        %2483 = vmatpush1.msra.mxu0 0.0
        %2484 = vmatprep.subr.mxu0 0.0
        %2485 = vmatpush1.msra.mxu0 0.0
        %2486 = vmatprep.subr.mxu0 0.0
        %2487 = vmatpush1.msra.mxu0 0.0
        %2488 = vmatprep.subr.mxu0 0.0
        %2489 = vmatpush1.msra.mxu0 0.0
        %2490 = vmatprep.subr.mxu0 0.0
        %2491 = vmatpush1.msra.mxu0 0.0
        %2492 = vmatprep.subr.mxu0 0.0
        %2493 = vmatpush1.msra.mxu0 %v385
        %2494 = vmatprep.subr.mxu0 0.0
        %2495 = vmatpush1.msra.mxu0 %v384
        %2496 = vmatprep.subr.mxu0 0.0
        %2497 = vmatpush1.msra.mxu0 %v383
        %2498 = vmatprep.subr.mxu0 0.0
        %2499 = vmatpush1.msra.mxu0 %v382
        %2500 = vmatprep.subr.mxu0 0.0
        %2501 = vmatpush1.msra.mxu0 %v381
        %2502 = vmatprep.subr.mxu0 0.0
        %2503 = vmatpush1.msra.mxu0 %v380
        %2504 = vmatprep.subr.mxu0 0.0
        %2505 = vmatpush1.msra.mxu0 %v379
        %2506 = vmatprep.subr.mxu0 0.0
        %2507 = vmatpush1.msra.mxu0 %v378
        %2508 = vmatprep.subr.mxu0 0.0
        %2509 = vmatpush2.msra.mxu0 0.0
        %2510 = vmatprep.subr.mxu0 0.0
        %2511 = vmatpush2.msra.mxu0 0.0
        %2512 = vmatprep.subr.mxu0 0.0
        %2513 = vmatpush2.msra.mxu0 0.0
        %2514 = vmatprep.subr.mxu0 0.0
        %2515 = vmatpush2.msra.mxu0 0.0
        %2516 = vmatprep.subr.mxu0 0.0
        %2517 = vmatpush2.msra.mxu0 0.0
        %2518 = vmatprep.subr.mxu0 0.0
        %2519 = vmatpush2.msra.mxu0 0.0
        %2520 = vmatprep.subr.mxu0 0.0
        %2521 = vmatpush2.msra.mxu0 0.0
        %2522 = vmatprep.subr.mxu0 0.0
        %2523 = vmatpush2.msra.mxu0 0.0
        %2524 = vmatprep.subr.mxu0 0.0
        %2525 = vmatpush2.msra.mxu0 0.0
        %2526 = vmatprep.subr.mxu0 0.0
        %2527 = vmatpush2.msra.mxu0 0.0
        %2528 = vmatprep.subr.mxu0 0.0
        %2529 = vmatpush2.msra.mxu0 0.0
        %2530 = vmatprep.subr.mxu0 0.0
        %2531 = vmatpush2.msra.mxu0 0.0
        %2532 = vmatprep.subr.mxu0 0.0
        %2533 = vmatpush2.msra.mxu0 0.0
        %2534 = vmatprep.subr.mxu0 0.0
        %2535 = vmatpush2.msra.mxu0 0.0
        %2536 = vmatprep.subr.mxu0 0.0
        %2537 = vmatpush2.msra.mxu0 0.0
        %2538 = vmatprep.subr.mxu0 0.0
        %2539 = vmatpush2.msra.mxu0 0.0
        %2540 = vmatprep.mubr.f32.mxu0 0.0
        %2541 = vmatmul.mubr.f32.gmra.mxu0 %v2474
        %v2542 = vpop.f32.mrf.mxu0
        %v2543 = vadd.f32 0.0, %v2542
        %v2544 = vpop.f32.mrf.mxu0
        %2545 = vdwg.mxu0
        %v2546 = vmul.f32 %v2543, 0.25
        %v2547 = vsel %vm687, %v1805, %v1802
        %2549 = vrot.lane.b32.xlu0 %v2547, 64
        %v2550 = vpop.permute.xlu0 %2549
        %v2552 = vmul.f32 %v1568, %v2550
        %2554 = vrot.lane.b32.xlu0 %v2552, 64
        %v2555 = vpop.permute.xlu0 %2554
        %v2556 = vsel %vm704, %v2555, 0
        %2558 = vmatprep.subr.mxu0 0.0
        %2559 = vmatpush1.msra.mxu0 0.0
        %2560 = vmatprep.subr.mxu0 0.0
        %2561 = vmatpush1.msra.mxu0 0.0
        %2562 = vmatprep.subr.mxu0 0.0
        %2563 = vmatpush1.msra.mxu0 0.0
        %2564 = vmatprep.subr.mxu0 0.0
        %2565 = vmatpush1.msra.mxu0 0.0
        %2566 = vmatprep.subr.mxu0 0.0
        %2567 = vmatpush1.msra.mxu0 0.0
        %2568 = vmatprep.subr.mxu0 0.0
        %2569 = vmatpush1.msra.mxu0 0.0
        %2570 = vmatprep.subr.mxu0 0.0
        %2571 = vmatpush1.msra.mxu0 0.0
        %2572 = vmatprep.subr.mxu0 0.0
        %2573 = vmatpush1.msra.mxu0 0.0
        %2574 = vmatprep.subr.mxu0 0.0
        %2575 = vmatpush1.msra.mxu0 %v385
        %2576 = vmatprep.subr.mxu0 0.0
        %2577 = vmatpush1.msra.mxu0 %v384
        %2578 = vmatprep.subr.mxu0 0.0
        %2579 = vmatpush1.msra.mxu0 %v383
        %2580 = vmatprep.subr.mxu0 0.0
        %2581 = vmatpush1.msra.mxu0 %v382
        %2582 = vmatprep.subr.mxu0 0.0
        %2583 = vmatpush1.msra.mxu0 %v381
        %2584 = vmatprep.subr.mxu0 0.0
        %2585 = vmatpush1.msra.mxu0 %v380
        %2586 = vmatprep.subr.mxu0 0.0
        %2587 = vmatpush1.msra.mxu0 %v379
        %2588 = vmatprep.subr.mxu0 0.0
        %2589 = vmatpush1.msra.mxu0 %v378
        %2590 = vmatprep.subr.mxu0 0.0
        %2591 = vmatpush2.msra.mxu0 0.0
        %2592 = vmatprep.subr.mxu0 0.0
        %2593 = vmatpush2.msra.mxu0 0.0
        %2594 = vmatprep.subr.mxu0 0.0
        %2595 = vmatpush2.msra.mxu0 0.0
        %2596 = vmatprep.subr.mxu0 0.0
        %2597 = vmatpush2.msra.mxu0 0.0
        %2598 = vmatprep.subr.mxu0 0.0
        %2599 = vmatpush2.msra.mxu0 0.0
        %2600 = vmatprep.subr.mxu0 0.0
        %2601 = vmatpush2.msra.mxu0 0.0
        %2602 = vmatprep.subr.mxu0 0.0
        %2603 = vmatpush2.msra.mxu0 0.0
        %2604 = vmatprep.subr.mxu0 0.0
        %2605 = vmatpush2.msra.mxu0 0.0
        %2606 = vmatprep.subr.mxu0 0.0
        %2607 = vmatpush2.msra.mxu0 0.0
        %2608 = vmatprep.subr.mxu0 0.0
        %2609 = vmatpush2.msra.mxu0 0.0
        %2610 = vmatprep.subr.mxu0 0.0
        %2611 = vmatpush2.msra.mxu0 0.0
        %2612 = vmatprep.subr.mxu0 0.0
        %2613 = vmatpush2.msra.mxu0 0.0
        %2614 = vmatprep.subr.mxu0 0.0
        %2615 = vmatpush2.msra.mxu0 0.0
        %2616 = vmatprep.subr.mxu0 0.0
        %2617 = vmatpush2.msra.mxu0 0.0
        %2618 = vmatprep.subr.mxu0 0.0
        %2619 = vmatpush2.msra.mxu0 0.0
        %2620 = vmatprep.subr.mxu0 0.0
        %2621 = vmatpush2.msra.mxu0 0.0
        %2622 = vmatprep.mubr.f32.mxu0 0.0
        %2623 = vmatmul.mubr.f32.gmra.mxu0 %v2556
        %v2624 = vpop.f32.mrf.mxu0
        %v2625 = vadd.f32 0.0, %v2624
        %v2626 = vpop.f32.mrf.mxu0
        %2627 = vdwg.mxu0
        %v2628 = vmul.f32 %v2625, 0.25
        %v2629 = vsel %vm396, %v1887, %v1884
        %2631 = vrot.lane.b32.xlu0 %v2629, 64
        %v2632 = vpop.permute.xlu0 %2631
        %v2634 = vmul.f32 %v1568, %v2632
        %2636 = vrot.lane.b32.xlu0 %v2634, 64
        %v2637 = vpop.permute.xlu0 %2636
        %v2638 = vsel %vm704, %v2637, 0
        %2640 = vmatprep.subr.mxu0 0.0
        %2641 = vmatpush1.msra.mxu0 0.0
        %2642 = vmatprep.subr.mxu0 0.0
        %2643 = vmatpush1.msra.mxu0 0.0
        %2644 = vmatprep.subr.mxu0 0.0
        %2645 = vmatpush1.msra.mxu0 0.0
        %2646 = vmatprep.subr.mxu0 0.0
        %2647 = vmatpush1.msra.mxu0 0.0
        %2648 = vmatprep.subr.mxu0 0.0
        %2649 = vmatpush1.msra.mxu0 0.0
        %2650 = vmatprep.subr.mxu0 0.0
        %2651 = vmatpush1.msra.mxu0 0.0
        %2652 = vmatprep.subr.mxu0 0.0
        %2653 = vmatpush1.msra.mxu0 0.0
        %2654 = vmatprep.subr.mxu0 0.0
        %2655 = vmatpush1.msra.mxu0 0.0
        %2656 = vmatprep.subr.mxu0 0.0
        %2657 = vmatpush1.msra.mxu0 %v385
        %2658 = vmatprep.subr.mxu0 0.0
        %2659 = vmatpush1.msra.mxu0 %v384
        %2660 = vmatprep.subr.mxu0 0.0
        %2661 = vmatpush1.msra.mxu0 %v383
        %2662 = vmatprep.subr.mxu0 0.0
        %2663 = vmatpush1.msra.mxu0 %v382
        %2664 = vmatprep.subr.mxu0 0.0
        %2665 = vmatpush1.msra.mxu0 %v381
        %2666 = vmatprep.subr.mxu0 0.0
        %2667 = vmatpush1.msra.mxu0 %v380
        %2668 = vmatprep.subr.mxu0 0.0
        %2669 = vmatpush1.msra.mxu0 %v379
        %2670 = vmatprep.subr.mxu0 0.0
        %2671 = vmatpush1.msra.mxu0 %v378
        %2672 = vmatprep.subr.mxu0 0.0
        %2673 = vmatpush2.msra.mxu0 0.0
        %2674 = vmatprep.subr.mxu0 0.0
        %2675 = vmatpush2.msra.mxu0 0.0
        %2676 = vmatprep.subr.mxu0 0.0
        %2677 = vmatpush2.msra.mxu0 0.0
        %2678 = vmatprep.subr.mxu0 0.0
        %2679 = vmatpush2.msra.mxu0 0.0
        %2680 = vmatprep.subr.mxu0 0.0
        %2681 = vmatpush2.msra.mxu0 0.0
        %2682 = vmatprep.subr.mxu0 0.0
        %2683 = vmatpush2.msra.mxu0 0.0
        %2684 = vmatprep.subr.mxu0 0.0
        %2685 = vmatpush2.msra.mxu0 0.0
        %2686 = vmatprep.subr.mxu0 0.0
        %2687 = vmatpush2.msra.mxu0 0.0
        %2688 = vmatprep.subr.mxu0 0.0
        %2689 = vmatpush2.msra.mxu0 0.0
        %2690 = vmatprep.subr.mxu0 0.0
        %2691 = vmatpush2.msra.mxu0 0.0
        %2692 = vmatprep.subr.mxu0 0.0
        %2693 = vmatpush2.msra.mxu0 0.0
        %2694 = vmatprep.subr.mxu0 0.0
        %2695 = vmatpush2.msra.mxu0 0.0
        %2696 = vmatprep.subr.mxu0 0.0
        %2697 = vmatpush2.msra.mxu0 0.0
        %2698 = vmatprep.subr.mxu0 0.0
        %2699 = vmatpush2.msra.mxu0 0.0
        %2700 = vmatprep.subr.mxu0 0.0
        %2701 = vmatpush2.msra.mxu0 0.0
        %2702 = vmatprep.subr.mxu0 0.0
        %2703 = vmatpush2.msra.mxu0 0.0
        %2704 = vmatprep.mubr.f32.mxu0 0.0
        %2705 = vmatmul.mubr.f32.gmra.mxu0 %v2638
        %v2706 = vpop.f32.mrf.mxu0
        %v2707 = vadd.f32 0.0, %v2706
        %v2708 = vpop.f32.mrf.mxu0
        %2709 = vdwg.mxu0
        %v2710 = vmul.f32 %v2707, 0.25
        %v2711 = vmax.f32 %v2464, %v2546
        %v2712 = vmax.f32 %v2711, %v2628
        %v2713 = vmax.f32 %v2712, %v2710
        %v2714 = vsub.f32 %v2464, %v2713
        %v2715 = vmul.f32 %v2714, 1.442695
        %v2716 = vpow.pop %v2715
        %v2717 = vsub.f32 %v2546, %v2713
        %v2718 = vmul.f32 %v2717, 1.442695
        %v2719 = vpow.pop %v2718
        %v2720 = vsub.f32 %v2628, %v2713
        %v2721 = vmul.f32 %v2720, 1.442695
        %v2722 = vpow.pop %v2721
        %v2723 = vsub.f32 %v2710, %v2713
        %v2724 = vmul.f32 %v2723, 1.442695
        %v2725 = vpow.pop %v2724
        %v2726 = vadd.f32 %v2716, %v2719
        %v2727 = vadd.f32 %v2726, %v2722
        %v2728 = vadd.f32 %v2727, %v2725
        %v2729 = vrcp.pop %v2728
        %v2730 = vmul.f32 %v2716, %v2729
        %v2731 = vmul.f32 %v2730, %v948
        %v2732 = vmul.f32 %v2719, %v2729
        %v2733 = vmul.f32 %v2732, %v948
        %v2734 = vmul.f32 %v2722, %v2729
        %v2735 = vmul.f32 %v2734, %v948
        %v2736 = vmul.f32 %v2725, %v2729
        %v2737 = vmul.f32 %v2736, %v948
        %v2739 = vsel %vm949, %v2731, 0
        %2741 = vmatprep.subr.mxu0 0.0
        %2742 = vmatpush1.msra.mxu0 0.0
        %2743 = vmatprep.subr.mxu0 0.0
        %2744 = vmatpush1.msra.mxu0 0.0
        %2745 = vmatprep.subr.mxu0 0.0
        %2746 = vmatpush1.msra.mxu0 0.0
        %2747 = vmatprep.subr.mxu0 0.0
        %2748 = vmatpush1.msra.mxu0 0.0
        %2749 = vmatprep.subr.mxu0 0.0
        %2750 = vmatpush1.msra.mxu0 0.0
        %2751 = vmatprep.subr.mxu0 0.0
        %2752 = vmatpush1.msra.mxu0 0.0
        %2753 = vmatprep.subr.mxu0 0.0
        %2754 = vmatpush1.msra.mxu0 0.0
        %2755 = vmatprep.subr.mxu0 0.0
        %2756 = vmatpush1.msra.mxu0 0.0
        %2757 = vmatprep.subr.mxu0 0.0
        %2758 = vmatpush1.msra.mxu0 0.0
        %2759 = vmatprep.subr.mxu0 0.0
        %2760 = vmatpush1.msra.mxu0 0.0
        %2761 = vmatprep.subr.mxu0 0.0
        %2762 = vmatpush1.msra.mxu0 0.0
        %2763 = vmatprep.subr.mxu0 0.0
        %2764 = vmatpush1.msra.mxu0 0.0
        %2765 = vmatprep.subr.mxu0 0.0
        %2766 = vmatpush1.msra.mxu0 0.0
        %2767 = vmatprep.subr.mxu0 0.0
        %2768 = vmatpush1.msra.mxu0 0.0
        %2769 = vmatprep.subr.mxu0 0.0
        %2770 = vmatpush1.msra.mxu0 0.0
        %2771 = vmatprep.subr.mxu0 0.0
        %2772 = vmatpush1.msra.mxu0 %v954
        %2773 = vmatprep.subr.mxu0 0.0
        %2774 = vmatpush2.msra.mxu0 0.0
        %2775 = vmatprep.subr.mxu0 0.0
        %2776 = vmatpush2.msra.mxu0 0.0
        %2777 = vmatprep.subr.mxu0 0.0
        %2778 = vmatpush2.msra.mxu0 0.0
        %2779 = vmatprep.subr.mxu0 0.0
        %2780 = vmatpush2.msra.mxu0 0.0
        %2781 = vmatprep.subr.mxu0 0.0
        %2782 = vmatpush2.msra.mxu0 0.0
        %2783 = vmatprep.subr.mxu0 0.0
        %2784 = vmatpush2.msra.mxu0 0.0
        %2785 = vmatprep.subr.mxu0 0.0
        %2786 = vmatpush2.msra.mxu0 0.0
        %2787 = vmatprep.subr.mxu0 0.0
        %2788 = vmatpush2.msra.mxu0 0.0
        %2789 = vmatprep.subr.mxu0 0.0
        %2790 = vmatpush2.msra.mxu0 0.0
        %2791 = vmatprep.subr.mxu0 0.0
        %2792 = vmatpush2.msra.mxu0 0.0
        %2793 = vmatprep.subr.mxu0 0.0
        %2794 = vmatpush2.msra.mxu0 0.0
        %2795 = vmatprep.subr.mxu0 0.0
        %2796 = vmatpush2.msra.mxu0 0.0
        %2797 = vmatprep.subr.mxu0 0.0
        %2798 = vmatpush2.msra.mxu0 0.0
        %2799 = vmatprep.subr.mxu0 0.0
        %2800 = vmatpush2.msra.mxu0 0.0
        %2801 = vmatprep.subr.mxu0 0.0
        %2802 = vmatpush2.msra.mxu0 0.0
        %2803 = vmatprep.subr.mxu0 0.0
        %2804 = vmatpush2.msra.mxu0 0.0
        %2805 = vmatprep.mubr.f32.mxu0 0.0
        %2806 = vmatmul.mubr.f32.gmra.mxu0 %v2739
        %v2807 = vpop.f32.mrf.mxu0
        %v2808 = vadd.f32 0.0, %v2807
        %v2809 = vpop.f32.mrf.mxu0
        %2810 = vdwg.mxu0
        %v2811 = vmul.f32 %v2808, %v1641
        %v2812 = vadd.f32 %v2811, 0.0
        %2814 = vrot.lane.b32.xlu0 %v1641, 96
        %v2815 = vpop.permute.xlu0 %2814
        %v2818 = vsel %vm949, %v2733, 0
        %2820 = vmatprep.subr.mxu0 0.0
        %2821 = vmatpush1.msra.mxu0 0.0
        %2822 = vmatprep.subr.mxu0 0.0
        %2823 = vmatpush1.msra.mxu0 0.0
        %2824 = vmatprep.subr.mxu0 0.0
        %2825 = vmatpush1.msra.mxu0 0.0
        %2826 = vmatprep.subr.mxu0 0.0
        %2827 = vmatpush1.msra.mxu0 0.0
        %2828 = vmatprep.subr.mxu0 0.0
        %2829 = vmatpush1.msra.mxu0 0.0
        %2830 = vmatprep.subr.mxu0 0.0
        %2831 = vmatpush1.msra.mxu0 0.0
        %2832 = vmatprep.subr.mxu0 0.0
        %2833 = vmatpush1.msra.mxu0 0.0
        %2834 = vmatprep.subr.mxu0 0.0
        %2835 = vmatpush1.msra.mxu0 0.0
        %2836 = vmatprep.subr.mxu0 0.0
        %2837 = vmatpush1.msra.mxu0 0.0
        %2838 = vmatprep.subr.mxu0 0.0
        %2839 = vmatpush1.msra.mxu0 0.0
        %2840 = vmatprep.subr.mxu0 0.0
        %2841 = vmatpush1.msra.mxu0 0.0
        %2842 = vmatprep.subr.mxu0 0.0
        %2843 = vmatpush1.msra.mxu0 0.0
        %2844 = vmatprep.subr.mxu0 0.0
        %2845 = vmatpush1.msra.mxu0 0.0
        %2846 = vmatprep.subr.mxu0 0.0
        %2847 = vmatpush1.msra.mxu0 0.0
        %2848 = vmatprep.subr.mxu0 0.0
        %2849 = vmatpush1.msra.mxu0 0.0
        %2850 = vmatprep.subr.mxu0 0.0
        %2851 = vmatpush1.msra.mxu0 %v954
        %2852 = vmatprep.subr.mxu0 0.0
        %2853 = vmatpush2.msra.mxu0 0.0
        %2854 = vmatprep.subr.mxu0 0.0
        %2855 = vmatpush2.msra.mxu0 0.0
        %2856 = vmatprep.subr.mxu0 0.0
        %2857 = vmatpush2.msra.mxu0 0.0
        %2858 = vmatprep.subr.mxu0 0.0
        %2859 = vmatpush2.msra.mxu0 0.0
        %2860 = vmatprep.subr.mxu0 0.0
        %2861 = vmatpush2.msra.mxu0 0.0
        %2862 = vmatprep.subr.mxu0 0.0
        %2863 = vmatpush2.msra.mxu0 0.0
        %2864 = vmatprep.subr.mxu0 0.0
        %2865 = vmatpush2.msra.mxu0 0.0
        %2866 = vmatprep.subr.mxu0 0.0
        %2867 = vmatpush2.msra.mxu0 0.0
        %2868 = vmatprep.subr.mxu0 0.0
        %2869 = vmatpush2.msra.mxu0 0.0
        %2870 = vmatprep.subr.mxu0 0.0
        %2871 = vmatpush2.msra.mxu0 0.0
        %2872 = vmatprep.subr.mxu0 0.0
        %2873 = vmatpush2.msra.mxu0 0.0
        %2874 = vmatprep.subr.mxu0 0.0
        %2875 = vmatpush2.msra.mxu0 0.0
        %2876 = vmatprep.subr.mxu0 0.0
        %2877 = vmatpush2.msra.mxu0 0.0
        %2878 = vmatprep.subr.mxu0 0.0
        %2879 = vmatpush2.msra.mxu0 0.0
        %2880 = vmatprep.subr.mxu0 0.0
        %2881 = vmatpush2.msra.mxu0 0.0
        %2882 = vmatprep.subr.mxu0 0.0
        %2883 = vmatpush2.msra.mxu0 0.0
        %2884 = vmatprep.mubr.f32.mxu0 0.0
        %2885 = vmatmul.mubr.f32.gmra.mxu0 %v2818
        %v2886 = vpop.f32.mrf.mxu0
        %v2887 = vadd.f32 0.0, %v2886
        %v2888 = vpop.f32.mrf.mxu0
        %2889 = vdwg.mxu0
        %v2890 = vmul.f32 %v2887, %v2815
        %v2891 = vadd.f32 %v2812, %v2890
        %2892 = vrot.lane.b32.xlu0 %v1641, 64
        %v2893 = vpop.permute.xlu0 %2892
        %v2896 = vsel %vm949, %v2735, 0
        %2898 = vmatprep.subr.mxu0 0.0
        %2899 = vmatpush1.msra.mxu0 0.0
        %2900 = vmatprep.subr.mxu0 0.0
        %2901 = vmatpush1.msra.mxu0 0.0
        %2902 = vmatprep.subr.mxu0 0.0
        %2903 = vmatpush1.msra.mxu0 0.0
        %2904 = vmatprep.subr.mxu0 0.0
        %2905 = vmatpush1.msra.mxu0 0.0
        %2906 = vmatprep.subr.mxu0 0.0
        %2907 = vmatpush1.msra.mxu0 0.0
        %2908 = vmatprep.subr.mxu0 0.0
        %2909 = vmatpush1.msra.mxu0 0.0
        %2910 = vmatprep.subr.mxu0 0.0
        %2911 = vmatpush1.msra.mxu0 0.0
        %2912 = vmatprep.subr.mxu0 0.0
        %2913 = vmatpush1.msra.mxu0 0.0
        %2914 = vmatprep.subr.mxu0 0.0
        %2915 = vmatpush1.msra.mxu0 0.0
        %2916 = vmatprep.subr.mxu0 0.0
        %2917 = vmatpush1.msra.mxu0 0.0
        %2918 = vmatprep.subr.mxu0 0.0
        %2919 = vmatpush1.msra.mxu0 0.0
        %2920 = vmatprep.subr.mxu0 0.0
        %2921 = vmatpush1.msra.mxu0 0.0
        %2922 = vmatprep.subr.mxu0 0.0
        %2923 = vmatpush1.msra.mxu0 0.0
        %2924 = vmatprep.subr.mxu0 0.0
        %2925 = vmatpush1.msra.mxu0 0.0
        %2926 = vmatprep.subr.mxu0 0.0
        %2927 = vmatpush1.msra.mxu0 0.0
        %2928 = vmatprep.subr.mxu0 0.0
        %2929 = vmatpush1.msra.mxu0 %v954
        %2930 = vmatprep.subr.mxu0 0.0
        %2931 = vmatpush2.msra.mxu0 0.0
        %2932 = vmatprep.subr.mxu0 0.0
        %2933 = vmatpush2.msra.mxu0 0.0
        %2934 = vmatprep.subr.mxu0 0.0
        %2935 = vmatpush2.msra.mxu0 0.0
        %2936 = vmatprep.subr.mxu0 0.0
        %2937 = vmatpush2.msra.mxu0 0.0
        %2938 = vmatprep.subr.mxu0 0.0
        %2939 = vmatpush2.msra.mxu0 0.0
        %2940 = vmatprep.subr.mxu0 0.0
        %2941 = vmatpush2.msra.mxu0 0.0
        %2942 = vmatprep.subr.mxu0 0.0
        %2943 = vmatpush2.msra.mxu0 0.0
        %2944 = vmatprep.subr.mxu0 0.0
        %2945 = vmatpush2.msra.mxu0 0.0
        %2946 = vmatprep.subr.mxu0 0.0
        %2947 = vmatpush2.msra.mxu0 0.0
        %2948 = vmatprep.subr.mxu0 0.0
        %2949 = vmatpush2.msra.mxu0 0.0
        %2950 = vmatprep.subr.mxu0 0.0
        %2951 = vmatpush2.msra.mxu0 0.0
        %2952 = vmatprep.subr.mxu0 0.0
        %2953 = vmatpush2.msra.mxu0 0.0
        %2954 = vmatprep.subr.mxu0 0.0
        %2955 = vmatpush2.msra.mxu0 0.0
        %2956 = vmatprep.subr.mxu0 0.0
        %2957 = vmatpush2.msra.mxu0 0.0
        %2958 = vmatprep.subr.mxu0 0.0
        %2959 = vmatpush2.msra.mxu0 0.0
        %2960 = vmatprep.subr.mxu0 0.0
        %2961 = vmatpush2.msra.mxu0 0.0
        %2962 = vmatprep.mubr.f32.mxu0 0.0
        %2963 = vmatmul.mubr.f32.gmra.mxu0 %v2896
        %v2964 = vpop.f32.mrf.mxu0
        %v2965 = vadd.f32 0.0, %v2964
        %v2966 = vpop.f32.mrf.mxu0
        %2967 = vdwg.mxu0
        %v2968 = vmul.f32 %v2965, %v2893
        %v2969 = vadd.f32 %v2891, %v2968
        %2970 = vrot.lane.b32.xlu0 %v1641, 32
        %v2971 = vpop.permute.xlu0 %2970
        %v2974 = vsel %vm949, %v2737, 0
        %2976 = vmatprep.subr.mxu0 0.0
        %2977 = vmatpush1.msra.mxu0 0.0
        %2978 = vmatprep.subr.mxu0 0.0
        %2979 = vmatpush1.msra.mxu0 0.0
        %2980 = vmatprep.subr.mxu0 0.0
        %2981 = vmatpush1.msra.mxu0 0.0
        %2982 = vmatprep.subr.mxu0 0.0
        %2983 = vmatpush1.msra.mxu0 0.0
        %2984 = vmatprep.subr.mxu0 0.0
        %2985 = vmatpush1.msra.mxu0 0.0
        %2986 = vmatprep.subr.mxu0 0.0
        %2987 = vmatpush1.msra.mxu0 0.0
        %2988 = vmatprep.subr.mxu0 0.0
        %2989 = vmatpush1.msra.mxu0 0.0
        %2990 = vmatprep.subr.mxu0 0.0
        %2991 = vmatpush1.msra.mxu0 0.0
        %2992 = vmatprep.subr.mxu0 0.0
        %2993 = vmatpush1.msra.mxu0 0.0
        %2994 = vmatprep.subr.mxu0 0.0
        %2995 = vmatpush1.msra.mxu0 0.0
        %2996 = vmatprep.subr.mxu0 0.0
        %2997 = vmatpush1.msra.mxu0 0.0
        %2998 = vmatprep.subr.mxu0 0.0
        %2999 = vmatpush1.msra.mxu0 0.0
        %3000 = vmatprep.subr.mxu0 0.0
        %3001 = vmatpush1.msra.mxu0 0.0
        %3002 = vmatprep.subr.mxu0 0.0
        %3003 = vmatpush1.msra.mxu0 0.0
        %3004 = vmatprep.subr.mxu0 0.0
        %3005 = vmatpush1.msra.mxu0 0.0
        %3006 = vmatprep.subr.mxu0 0.0
        %3007 = vmatpush1.msra.mxu0 %v954
        %3008 = vmatprep.subr.mxu0 0.0
        %3009 = vmatpush2.msra.mxu0 0.0
        %3010 = vmatprep.subr.mxu0 0.0
        %3011 = vmatpush2.msra.mxu0 0.0
        %3012 = vmatprep.subr.mxu0 0.0
        %3013 = vmatpush2.msra.mxu0 0.0
        %3014 = vmatprep.subr.mxu0 0.0
        %3015 = vmatpush2.msra.mxu0 0.0
        %3016 = vmatprep.subr.mxu0 0.0
        %3017 = vmatpush2.msra.mxu0 0.0
        %3018 = vmatprep.subr.mxu0 0.0
        %3019 = vmatpush2.msra.mxu0 0.0
        %3020 = vmatprep.subr.mxu0 0.0
        %3021 = vmatpush2.msra.mxu0 0.0
        %3022 = vmatprep.subr.mxu0 0.0
        %3023 = vmatpush2.msra.mxu0 0.0
        %3024 = vmatprep.subr.mxu0 0.0
        %3025 = vmatpush2.msra.mxu0 0.0
        %3026 = vmatprep.subr.mxu0 0.0
        %3027 = vmatpush2.msra.mxu0 0.0
        %3028 = vmatprep.subr.mxu0 0.0
        %3029 = vmatpush2.msra.mxu0 0.0
        %3030 = vmatprep.subr.mxu0 0.0
        %3031 = vmatpush2.msra.mxu0 0.0
        %3032 = vmatprep.subr.mxu0 0.0
        %3033 = vmatpush2.msra.mxu0 0.0
        %3034 = vmatprep.subr.mxu0 0.0
        %3035 = vmatpush2.msra.mxu0 0.0
        %3036 = vmatprep.subr.mxu0 0.0
        %3037 = vmatpush2.msra.mxu0 0.0
        %3038 = vmatprep.subr.mxu0 0.0
        %3039 = vmatpush2.msra.mxu0 0.0
        %3040 = vmatprep.mubr.f32.mxu0 0.0
        %3041 = vmatmul.mubr.f32.gmra.mxu0 %v2974
        %v3042 = vpop.f32.mrf.mxu0
        %v3043 = vadd.f32 0.0, %v3042
        %v3044 = vpop.f32.mrf.mxu0
        %3045 = vdwg.mxu0
        %v3046 = vmul.f32 %v3043, %v2971
        %v3047 = vadd.f32 %v2969, %v3046
        %s3048 = scalar_lea.vmem [#allocation3], 128
        %v3049 = vld [vmem:[%s3048] sm:$0xff]
        %v3050 = vld [vmem:[%s3048 + $0x8] sm:$0xff]
        %v3051 = vld [vmem:[%s3048 + $0x10] sm:$0xff]
        %v3052 = vld [vmem:[%s3048 + $0x18] sm:$0xff]
        %v3053 = vld [vmem:[%s3048 + $0x20] sm:$0xff]
        %v3054 = vld [vmem:[%s3048 + $0x28] sm:$0xff]
        %v3055 = vld [vmem:[%s3048 + $0x30] sm:$0xff]
        %v3056 = vld [vmem:[%s3048 + $0x38] sm:$0xff]
        %v3057 = vld [vmem:[%s3048 + $0x40] sm:$0xff]
        %v3058 = vld [vmem:[%s3048 + $0x48] sm:$0xff]
        %v3059 = vld [vmem:[%s3048 + $0x50] sm:$0xff]
        %v3060 = vld [vmem:[%s3048 + $0x58] sm:$0xff]
        %v3061 = vld [vmem:[%s3048 + $0x60] sm:$0xff]
        %v3062 = vld [vmem:[%s3048 + $0x68] sm:$0xff]
        %v3063 = vld [vmem:[%s3048 + $0x70] sm:$0xff]
        %v3064 = vld [vmem:[%s3048 + $0x78] sm:$0xff]
        %3065 = vmatprep.subr.mxu0 0.0
        %3066 = vmatpush1.msra.mxu0 %v3064
        %3067 = vmatprep.subr.mxu0 0.0
        %3068 = vmatpush1.msra.mxu0 %v3063
        %3069 = vmatprep.subr.mxu0 0.0
        %3070 = vmatpush1.msra.mxu0 %v3062
        %3071 = vmatprep.subr.mxu0 0.0
        %3072 = vmatpush1.msra.mxu0 %v3061
        %3073 = vmatprep.subr.mxu0 0.0
        %3074 = vmatpush1.msra.mxu0 %v3060
        %3075 = vmatprep.subr.mxu0 0.0
        %3076 = vmatpush1.msra.mxu0 %v3059
        %3077 = vmatprep.subr.mxu0 0.0
        %3078 = vmatpush1.msra.mxu0 %v3058
        %3079 = vmatprep.subr.mxu0 0.0
        %3080 = vmatpush1.msra.mxu0 %v3057
        %3081 = vmatprep.subr.mxu0 0.0
        %3082 = vmatpush1.msra.mxu0 %v3056
        %3083 = vmatprep.subr.mxu0 0.0
        %3084 = vmatpush1.msra.mxu0 %v3055
        %3085 = vmatprep.subr.mxu0 0.0
        %3086 = vmatpush1.msra.mxu0 %v3054
        %3087 = vmatprep.subr.mxu0 0.0
        %3088 = vmatpush1.msra.mxu0 %v3053
        %3089 = vmatprep.subr.mxu0 0.0
        %3090 = vmatpush1.msra.mxu0 %v3052
        %3091 = vmatprep.subr.mxu0 0.0
        %3092 = vmatpush1.msra.mxu0 %v3051
        %3093 = vmatprep.subr.mxu0 0.0
        %3094 = vmatpush1.msra.mxu0 %v3050
        %3095 = vmatprep.subr.mxu0 0.0
        %3096 = vmatpush1.msra.mxu0 %v3049
        %3097 = vmatprep.subr.mxu0 0.0
        %3098 = vmatpush2.msra.mxu0 0.0
        %3099 = vmatprep.subr.mxu0 0.0
        %3100 = vmatpush2.msra.mxu0 0.0
        %3101 = vmatprep.subr.mxu0 0.0
        %3102 = vmatpush2.msra.mxu0 0.0
        %3103 = vmatprep.subr.mxu0 0.0
        %3104 = vmatpush2.msra.mxu0 0.0
        %3105 = vmatprep.subr.mxu0 0.0
        %3106 = vmatpush2.msra.mxu0 0.0
        %3107 = vmatprep.subr.mxu0 0.0
        %3108 = vmatpush2.msra.mxu0 0.0
        %3109 = vmatprep.subr.mxu0 0.0
        %3110 = vmatpush2.msra.mxu0 0.0
        %3111 = vmatprep.subr.mxu0 0.0
        %3112 = vmatpush2.msra.mxu0 0.0
        %3113 = vmatprep.subr.mxu0 0.0
        %3114 = vmatpush2.msra.mxu0 0.0
        %3115 = vmatprep.subr.mxu0 0.0
        %3116 = vmatpush2.msra.mxu0 0.0
        %3117 = vmatprep.subr.mxu0 0.0
        %3118 = vmatpush2.msra.mxu0 0.0
        %3119 = vmatprep.subr.mxu0 0.0
        %3120 = vmatpush2.msra.mxu0 0.0
        %3121 = vmatprep.subr.mxu0 0.0
        %3122 = vmatpush2.msra.mxu0 0.0
        %3123 = vmatprep.subr.mxu0 0.0
        %3124 = vmatpush2.msra.mxu0 0.0
        %3125 = vmatprep.subr.mxu0 0.0
        %3126 = vmatpush2.msra.mxu0 0.0
        %3127 = vmatprep.subr.mxu0 0.0
        %3128 = vmatpush2.msra.mxu0 0.0
        %3129 = vmatprep.mubr.f32.mxu0 0.0
        %3130 = vmatmul.mubr.f32.gmra.mxu0 %v3047
        %v3131 = vpop.f32.mrf.mxu0
        %v3132 = vadd.f32 0.0, %v3131
        %v3133 = vpop.f32.mrf.mxu0
        %3134 = vdwg.mxu0
        %v3135 = vadd.f32 %v2389, %v3132
        %v3136 = vmul.f32 %v1023, %v3135
        %v3137 = vsub.f32 1.0, %v1023
        %v3138 = vmul.f32 %v3137, %v376
        %v3139 = vadd.f32 %v3136, %v3138
        %3140 = vst [vmem:[#allocation2] sm:$0x3] %v3139
        %3141 = vst [vmem:[%s369] sm:$0x3] %v3139
        %p3142 = scmp.lt.s32.totalorder %s22, 4
        %s3143 = scalar_select %p3142, %s22, 4
        %s3144 = smul.addr %s3143, 2
        %s3145 = scalar_lea.vmem %s10, %s3144
        // Predicated region
        $region69: #{rim_forward.1} parent=59 // pred_check
          %p3146 = pneg %p255
        $region70: #{rim_forward.1} parent=59 // pred_check_branch
          %3148 = sbr.rel (%p3146) target = $region72
        $region71: #{rim_forward.1} parent=59 // pred_region
          _
        $region72: #{rim_forward.1} parent=59 // pred_fallthru
          _
      $region60: #{rim_forward.1} parent=5 // pred_fallthru
        _
      %p3149 = scmp.le.s32.totalorder 2, %s17
      // Predicated region
      $region73: #{rim_forward.1} parent=5 // pred_check
        %p3150 = pneg %p3149
      $region74: #{rim_forward.1} parent=5 // pred_check_branch
        %3152 = sbr.rel (%p3150) target = $region76
      $region75: #{rim_forward.1} parent=5 // pred_region
        %s3153 = ssub.s32 %s17, 2
        // Predicated region
        $region77: #{rim_forward.1} parent=75 // pred_check
          %p3154 = pneg %p261
        $region78: #{rim_forward.1} parent=75 // pred_check_branch
          %3156 = sbr.rel (%p3154) target = $region80
        $region79: #{rim_forward.1} parent=75 // pred_region
          %p3157 = scmp.lt.s32.totalorder %s23, 4
          %s3158 = scalar_select %p3157, %s23, 4
          %s3159 = smul.addr %s3158, 2
          %s3160 = scalar_lea.vmem %s10, %s3159
        $region80: #{rim_forward.1} parent=75 // pred_fallthru
          _
      $region76: #{rim_forward.1} parent=5 // pred_fallthru
        _
    $region6: #{rim_forward.1} parent=1 // loop_footer
      %s21 = sadd.s32 1, %s17
    $region7: #{rim_forward.1} parent=1 // loop_footer_branch
      %16 = sbr.rel target = $region3
    $region8: #{rim_forward.1} parent=1 // loop_exit
      _
    %3161 = vsyncpa [#allocation4], 1
    %s3162 = scalar_lea.sflag [#allocation4], 1
    %3163 = vsyncpa %s3162, 1

</llo_original>
